<compile_context>
chip_gen: v6e
topology: v6e:2x2x1
jax: 0.10.0
libtpu: 0.0.40
codegen_flags: <defaults>
</compile_context>

<pallas_src>
import jax
import jax.numpy as jnp
import numpy as np
from jax.experimental import pallas as pl
from jax.experimental.pallas import tpu as pltpu

KSIZES = (3, 5, 7, 11)       # conv_small / conv_medium / conv_large / conv_xlarge
KW = max(KSIZES)             # 11 taps in the fused (widest) window
KW_P = 16                    # conv1 im2col K padded to a multiple of 8 (extra taps have zero weight)
PAD = KW // 2                # 5
BN_EPS = 1e-5
LN_EPS = 1e-5


# --------------------------------------------------------------------------------------
# Pallas kernel
# --------------------------------------------------------------------------------------
def _msse_kernel(x_ref, w1_ref, b1_ref, w2_ref, b2_ref,
                 wpt_ref, bp_ref, lng_ref, lnb_ref, o_ref):
    x = x_ref[...].astype(jnp.float32)                         # [TN, L]
    TN, L = x.shape
    DM = o_ref.shape[-1]

    # ---- pad the scalar signal once for the widest kernel (pad = 5) ----
    zp = jnp.zeros((TN, PAD), jnp.float32)
    xpad = jnp.concatenate([zp, x, zp], axis=1)                # [TN, L + 2*PAD]

    # ---- conv1, all 4 branches fused: im2col + a single MXU matmul ----
    # xcol[n, l, t] = x[n, l + t - PAD]; taps >= KW are zero-weighted padding.
    cols = [xpad[:, t:t + L][:, :, None] for t in range(KW)]
    cols.append(jnp.zeros((TN, L, KW_P - KW), jnp.float32))
    xcol = jnp.concatenate(cols, axis=-1).reshape(TN * L, KW_P)        # [TN*L, 16]
    y = jnp.dot(xcol, w1_ref[...], preferred_element_type=jnp.float32)  # [TN*L, DM]
    y = jnp.maximum(y + b1_ref[...], 0.0)

    # ---- conv2, all 4 branches fused: per-tap block-diagonal [DM, DM] matmuls ----
    y3 = y.reshape(TN, L, DM)
    zp3 = jnp.zeros((TN, PAD, DM), jnp.float32)
    ypad = jnp.concatenate([zp3, y3, zp3], axis=1)             # [TN, L + 2*PAD, DM]
    z = jnp.zeros((TN * L, DM), jnp.float32)
    for t in range(KW):                                        # static unroll over taps
        ys = ypad[:, t:t + L, :].reshape(TN * L, DM)
        z = z + jnp.dot(ys, w2_ref[t], preferred_element_type=jnp.float32)
    z = jnp.maximum(z + b2_ref[...], 0.0)                      # [TN*L, DM]

    # ---- AdaptiveAvgPool1d(1): mean over signal length ----
    pooled = jnp.mean(z.reshape(TN, L, DM), axis=1)            # [TN, DM]

    # ---- Linear + LayerNorm (Dropout = identity at inference) ----
    h = jnp.dot(pooled, wpt_ref[...], preferred_element_type=jnp.float32) + bp_ref[...]
    mu = jnp.mean(h, axis=-1, keepdims=True)
    var = jnp.mean((h - mu) ** 2, axis=-1, keepdims=True)
    out = (h - mu) * jax.lax.rsqrt(var + LN_EPS) * lng_ref[...] + lnb_ref[...]
    o_ref[...] = out.astype(o_ref.dtype)


# --------------------------------------------------------------------------------------
# Wrapper
# --------------------------------------------------------------------------------------
def _round_up(n, m):
    return (n + m - 1) // m * m


def _auto_row_block(L, d_model, budget_bytes=12 * 1024 * 1024):
    # ~6 live f32 copies of the widest per-row slab (lane dim padded to >=128 in VMEM).
    bytes_per_row = (L + 2 * PAD) * max(d_model, 128) * 4 * 6
    rb = budget_bytes // bytes_per_row
    return int(max(8, min(512, (rb // 8) * 8)))


def multi_scale_signal_encoder(x, fused_params, *, row_block=None):
    """x: [B, S, L] -> [B, S, d_model] (eval-mode forward)."""
    B, S, L = x.shape
    DM = fused_params["W1"].shape[1]
    N = B * S
    x2 = x.reshape(N, L)

    if row_block is None:
        row_block = _auto_row_block(L, DM)
    # Don't inflate tiny inputs; keep >= 2 grid steps when N allows (v7x has 2 TensorCores).
    row_block = min(row_block, max(8, _round_up(max(N // 2, 1), 8)))

    n_pad = (-N) % row_block
    if n_pad:
        x2 = jnp.concatenate([x2, jnp.zeros((n_pad, L), x2.dtype)], axis=0)
    Np = x2.shape[0]

    flat = [fused_params[k] for k in
            ("W1", "b1", "W2", "b2", "WpT", "bp", "ln_g", "ln_b")]

    def full_spec(a):
        return pl.BlockSpec(a.shape, lambda i, _nd=a.ndim: (0,) * _nd)

    # Raise the scoped-VMEM limit only when the tile actually needs it.
    vmem_limit = 32 * 1024 * 1024 if row_block > 64 else None

    out = pl.pallas_call(
        _msse_kernel,
        out_shape=jax.ShapeDtypeStruct((Np, DM), jnp.float32),
        grid=(Np // row_block,),
        in_specs=[pl.BlockSpec((row_block, L), lambda i: (i, 0))]
                 + [full_spec(a) for a in flat],
        out_specs=pl.BlockSpec((row_block, DM), lambda i: (i, 0)),
        compiler_params=pltpu.CompilerParams(
            dimension_semantics=("parallel",),
            vmem_limit_bytes=vmem_limit),
    )(x2, *flat)
    return out[:N].reshape(B, S, DM)


# --------------------------------------------------------------------------------------
# Parameter construction: raw (torch-like) params + fusion/BN-folding glue
# --------------------------------------------------------------------------------------
def init_params(key, d_model):
    """Deterministic synthetic torch-style parameters (conv/BN/linear/LN)."""
    assert d_model % 4 == 0
    C = d_model // 4
    keys = iter(jax.random.split(key, 64))
    nrm = lambda shape, scale=1.0: scale * jax.random.normal(next(keys), shape, jnp.float32)

    branches = []
    for k in KSIZES:
        branches.append(dict(
            w1=nrm((C, 1, k), 1.0 / np.sqrt(k)), b1=nrm((C,), 0.1),
            g1=1.0 + nrm((C,), 0.1), be1=nrm((C,), 0.1), m1=nrm((C,), 0.1),
            v1=jax.random.uniform(next(keys), (C,), jnp.float32, 0.5, 1.5),
            w2=nrm((C, C, k), 1.0 / np.sqrt(C * k)), b2=nrm((C,), 0.1),
            g2=1.0 + nrm((C,), 0.1), be2=nrm((C,), 0.1), m2=nrm((C,), 0.1),
            v2=jax.random.uniform(next(keys), (C,), jnp.float32, 0.5, 1.5),
        ))
    wp = nrm((d_model, d_model), 1.0 / np.sqrt(d_model))
    bp = nrm((d_model,), 0.1)
    g = 1.0 + nrm((d_model,), 0.1)
    b = nrm((d_model,), 0.1)
    return {"branches": branches, "proj": (wp, bp, g, b)}


def fold_params(raw, d_model):
    """Fold eval-mode BatchNorm into conv weights and fuse the 4 branches into
    block-diagonal d_model-wide weights aligned on the widest (k=11) tap window."""
    C = d_model // 4
    W1 = jnp.zeros((KW_P, d_model), jnp.float32)
    b1 = jnp.zeros((d_model,), jnp.float32)
    W2 = jnp.zeros((KW, d_model, d_model), jnp.float32)
    b2 = jnp.zeros((d_model,), jnp.float32)

    for bi, (k, br) in enumerate(zip(KSIZES, raw["branches"])):
        p = k // 2
        off = PAD - p                       # tap offset inside the fused 11-tap window
        c0 = bi * C
        s1 = br["g1"] / jnp.sqrt(br["v1"] + BN_EPS)
        w1f = br["w1"][:, 0, :] * s1[:, None]                       # [C, k]
        b1f = (br["b1"] - br["m1"]) * s1 + br["be1"]
        s2 = br["g2"] / jnp.sqrt(br["v2"] + BN_EPS)
        w2f = br["w2"] * s2[:, None, None]                          # [Cout, Cin, k]
        b2f = (br["b2"] - br["m2"]) * s2 + br["be2"]

        W1 = W1.at[off:off + k, c0:c0 + C].set(jnp.transpose(w1f, (1, 0)))
        b1 = b1.at[c0:c0 + C].set(b1f)
        W2 = W2.at[off:off + k, c0:c0 + C, c0:c0 + C].set(jnp.transpose(w2f, (2, 1, 0)))
        b2 = b2.at[c0:c0 + C].set(b2f)

    wp, bp, g, b = raw["proj"]
    return dict(W1=W1, b1=b1[None, :], W2=W2, b2=b2[None, :],
                WpT=jnp.transpose(wp), bp=bp[None, :],
                ln_g=g[None, :], ln_b=b[None, :])


# --------------------------------------------------------------------------------------
# Pure-JAX reference (un-fused, XLA convs, explicit eval-mode BatchNorm)
# --------------------------------------------------------------------------------------
def _reference_forward(x, raw):
    B, S, L = x.shape
    N = B * S
    xr = x.reshape(N, 1, L).astype(jnp.float32)
    dn = ("NCH", "OIH", "NCH")

    def bn(z, g, be, m, v):
        s = (g / jnp.sqrt(v + BN_EPS))[None, :, None]
        return (z - m[None, :, None]) * s + be[None, :, None]

    pooled = []
    for k, br in zip(KSIZES, raw["branches"]):
        p = k // 2
        y = jax.lax.conv_general_dilated(xr, br["w1"], (1,), [(p, p)],
                                         dimension_numbers=dn) + br["b1"][None, :, None]
        y = jnp.maximum(bn(y, br["g1"], br["be1"], br["m1"], br["v1"]), 0.0)
        z = jax.lax.conv_general_dilated(y, br["w2"], (1,), [(p, p)],
                                         dimension_numbers=dn) + br["b2"][None, :, None]
        z = jnp.maximum(bn(z, br["g2"], br["be2"], br["m2"], br["v2"]), 0.0)
        pooled.append(jnp.mean(z, axis=-1))                     # [N, C]
    feat = jnp.concatenate(pooled, axis=-1)                     # [N, d_model]

    wp, bp, g, b = raw["proj"]
    h = feat @ wp.T + bp
    mu = h.mean(-1, keepdims=True)
    var = ((h - mu) ** 2).mean(-1, keepdims=True)
    out = (h - mu) / jnp.sqrt(var + LN_EPS) * g + b
    return out.reshape(B, S, -1)


if __name__ == "__main__":
    B, S, L, d_model = 2, 8, 16, 32
    key = jax.random.PRNGKey(0)
    kx, kp = jax.random.split(key)
    x = jax.random.normal(kx, (B, S, L), jnp.float32)
    raw = init_params(kp, d_model)
    fused = fold_params(raw, d_model)

    out = multi_scale_signal_encoder(x, fused)
    out = jax.block_until_ready(out)
    assert out.shape == (B, S, d_model), out.shape

    ref = _reference_forward(x, raw)
    np.testing.assert_allclose(np.asarray(out), np.asarray(ref), atol=1e-3, rtol=1e-3)
    print("KERNEL_OK")
</pallas_src>

<mosaic_0001>
module attributes {stable_mosaic.version = 11 : i64} {
  func.func @_msse_kernel(%arg0: i32, %arg1: memref<8x16xf32, #tpu.memory_space<vmem>>, %arg2: memref<16x32xf32, #tpu.memory_space<vmem>>, %arg3: memref<1x32xf32, #tpu.memory_space<vmem>>, %arg4: memref<11x32x32xf32, #tpu.memory_space<vmem>>, %arg5: memref<1x32xf32, #tpu.memory_space<vmem>>, %arg6: memref<32x32xf32, #tpu.memory_space<vmem>>, %arg7: memref<1x32xf32, #tpu.memory_space<vmem>>, %arg8: memref<1x32xf32, #tpu.memory_space<vmem>>, %arg9: memref<1x32xf32, #tpu.memory_space<vmem>>, %arg10: memref<8x32xf32, #tpu.memory_space<vmem>>) attributes {dimension_semantics = [#tpu.dimension_semantics<parallel>], iteration_bounds = array<i64: 2>, scalar_prefetch = 0 : i64, scratch_operands = 0 : i64, tpu.core_type = #tpu.core_type<tc>, window_params = [{transform_indices = @transform_0, window_bounds = array<i64: 8, 16>}, {pipeline_mode = #tpu.pipeline_mode<synchronous>, transform_indices = @transform_1, window_bounds = array<i64: 16, 32>}, {pipeline_mode = #tpu.pipeline_mode<synchronous>, transform_indices = @transform_2, window_bounds = array<i64: 1, 32>}, {pipeline_mode = #tpu.pipeline_mode<synchronous>, transform_indices = @transform_3, window_bounds = array<i64: 11, 32, 32>}, {pipeline_mode = #tpu.pipeline_mode<synchronous>, transform_indices = @transform_4, window_bounds = array<i64: 1, 32>}, {pipeline_mode = #tpu.pipeline_mode<synchronous>, transform_indices = @transform_5, window_bounds = array<i64: 32, 32>}, {pipeline_mode = #tpu.pipeline_mode<synchronous>, transform_indices = @transform_6, window_bounds = array<i64: 1, 32>}, {pipeline_mode = #tpu.pipeline_mode<synchronous>, transform_indices = @transform_7, window_bounds = array<i64: 1, 32>}, {pipeline_mode = #tpu.pipeline_mode<synchronous>, transform_indices = @transform_8, window_bounds = array<i64: 1, 32>}, {transform_indices = @transform_9, window_bounds = array<i64: 8, 32>}]} {
    %c0 = arith.constant 0 : index
    %c0_0 = arith.constant 0 : index
    %0 = vector.load %arg1[%c0, %c0_0] : memref<8x16xf32, #tpu.memory_space<vmem>>, vector<8x16xf32>
    %cst = arith.constant 0.000000e+00 : f32
    %1 = vector.broadcast %cst : f32 to vector<8x5xf32>
    %2 = tpu.concatenate %1, %0, %1 in 1 : vector<8x5xf32>, vector<8x16xf32>, vector<8x5xf32> -> vector<8x26xf32>
    %3 = vector.extract_strided_slice %2 {offsets = [0, 0], sizes = [8, 16], strides = [1, 1]} : vector<8x26xf32> to vector<8x16xf32>
    %4 = vector.shape_cast %3 : vector<8x16xf32> to vector<8x16x1xf32>
    %5 = vector.extract_strided_slice %2 {offsets = [0, 1], sizes = [8, 16], strides = [1, 1]} : vector<8x26xf32> to vector<8x16xf32>
    %6 = vector.shape_cast %5 : vector<8x16xf32> to vector<8x16x1xf32>
    %7 = vector.extract_strided_slice %2 {offsets = [0, 2], sizes = [8, 16], strides = [1, 1]} : vector<8x26xf32> to vector<8x16xf32>
    %8 = vector.shape_cast %7 : vector<8x16xf32> to vector<8x16x1xf32>
    %9 = vector.extract_strided_slice %2 {offsets = [0, 3], sizes = [8, 16], strides = [1, 1]} : vector<8x26xf32> to vector<8x16xf32>
    %10 = vector.shape_cast %9 : vector<8x16xf32> to vector<8x16x1xf32>
    %11 = vector.extract_strided_slice %2 {offsets = [0, 4], sizes = [8, 16], strides = [1, 1]} : vector<8x26xf32> to vector<8x16xf32>
    %12 = vector.shape_cast %11 : vector<8x16xf32> to vector<8x16x1xf32>
    %13 = vector.extract_strided_slice %2 {offsets = [0, 5], sizes = [8, 16], strides = [1, 1]} : vector<8x26xf32> to vector<8x16xf32>
    %14 = vector.shape_cast %13 : vector<8x16xf32> to vector<8x16x1xf32>
    %15 = vector.extract_strided_slice %2 {offsets = [0, 6], sizes = [8, 16], strides = [1, 1]} : vector<8x26xf32> to vector<8x16xf32>
    %16 = vector.shape_cast %15 : vector<8x16xf32> to vector<8x16x1xf32>
    %17 = vector.extract_strided_slice %2 {offsets = [0, 7], sizes = [8, 16], strides = [1, 1]} : vector<8x26xf32> to vector<8x16xf32>
    %18 = vector.shape_cast %17 : vector<8x16xf32> to vector<8x16x1xf32>
    %19 = vector.extract_strided_slice %2 {offsets = [0, 8], sizes = [8, 16], strides = [1, 1]} : vector<8x26xf32> to vector<8x16xf32>
    %20 = vector.shape_cast %19 : vector<8x16xf32> to vector<8x16x1xf32>
    %21 = vector.extract_strided_slice %2 {offsets = [0, 9], sizes = [8, 16], strides = [1, 1]} : vector<8x26xf32> to vector<8x16xf32>
    %22 = vector.shape_cast %21 : vector<8x16xf32> to vector<8x16x1xf32>
    %23 = vector.extract_strided_slice %2 {offsets = [0, 10], sizes = [8, 16], strides = [1, 1]} : vector<8x26xf32> to vector<8x16xf32>
    %24 = vector.shape_cast %23 : vector<8x16xf32> to vector<8x16x1xf32>
    %cst_1 = arith.constant 0.000000e+00 : f32
    %25 = vector.broadcast %cst_1 : f32 to vector<8x16x5xf32>
    %26 = tpu.concatenate %4, %6, %8, %10, %12, %14, %16, %18, %20, %22, %24, %25 in 2 : vector<8x16x1xf32>, vector<8x16x1xf32>, vector<8x16x1xf32>, vector<8x16x1xf32>, vector<8x16x1xf32>, vector<8x16x1xf32>, vector<8x16x1xf32>, vector<8x16x1xf32>, vector<8x16x1xf32>, vector<8x16x1xf32>, vector<8x16x1xf32>, vector<8x16x5xf32> -> vector<8x16x16xf32>
    %27 = vector.shape_cast %26 : vector<8x16x16xf32> to vector<128x16xf32>
    %c0_2 = arith.constant 0 : index
    %c0_3 = arith.constant 0 : index
    %28 = vector.load %arg2[%c0_2, %c0_3] : memref<16x32xf32, #tpu.memory_space<vmem>>, vector<16x32xf32>
    %cst_4 = arith.constant dense<0.000000e+00> : vector<128x32xf32>
    %29 = tpu.matmul %27, %28, %cst_4 {dimension_numbers = #tpu.dot_dimension_numbers<[1], [0], [0], [1], [0, 0, 1, 1], [], []>} : vector<128x16xf32>, vector<16x32xf32>, vector<128x32xf32> -> vector<128x32xf32>
    %c0_5 = arith.constant 0 : index
    %c0_6 = arith.constant 0 : index
    %30 = vector.load %arg3[%c0_5, %c0_6] : memref<1x32xf32, #tpu.memory_space<vmem>>, vector<1x32xf32>
    %31 = vector.broadcast %30 : vector<1x32xf32> to vector<128x32xf32>
    %32 = arith.addf %29, %31 : vector<128x32xf32>
    %cst_7 = arith.constant 0.000000e+00 : f32
    %33 = vector.broadcast %cst_7 : f32 to vector<128x32xf32>
    %34 = arith.maximumf %32, %33 : vector<128x32xf32>
    %35 = vector.shape_cast %34 : vector<128x32xf32> to vector<8x16x32xf32>
    %cst_8 = arith.constant 0.000000e+00 : f32
    %36 = vector.broadcast %cst_8 : f32 to vector<8x5x32xf32>
    %37 = tpu.concatenate %36, %35, %36 in 1 : vector<8x5x32xf32>, vector<8x16x32xf32>, vector<8x5x32xf32> -> vector<8x26x32xf32>
    %cst_9 = arith.constant 0.000000e+00 : f32
    %38 = vector.broadcast %cst_9 : f32 to vector<128x32xf32>
    %39 = vector.extract_strided_slice %37 {offsets = [0, 0, 0], sizes = [8, 16, 32], strides = [1, 1, 1]} : vector<8x26x32xf32> to vector<8x16x32xf32>
    %40 = vector.shape_cast %39 : vector<8x16x32xf32> to vector<128x32xf32>
    %c0_10 = arith.constant 0 : index
    %c0_11 = arith.constant 0 : index
    %c0_12 = arith.constant 0 : index
    %41 = vector.load %arg4[%c0_10, %c0_11, %c0_12] : memref<11x32x32xf32, #tpu.memory_space<vmem>>, vector<1x32x32xf32>
    %42 = vector.shape_cast %41 : vector<1x32x32xf32> to vector<32x32xf32>
    %cst_13 = arith.constant dense<0.000000e+00> : vector<128x32xf32>
    %43 = tpu.matmul %40, %42, %cst_13 {dimension_numbers = #tpu.dot_dimension_numbers<[1], [0], [0], [1], [0, 0, 1, 1], [], []>} : vector<128x32xf32>, vector<32x32xf32>, vector<128x32xf32> -> vector<128x32xf32>
    %44 = arith.addf %38, %43 : vector<128x32xf32>
    %45 = vector.extract_strided_slice %37 {offsets = [0, 1, 0], sizes = [8, 16, 32], strides = [1, 1, 1]} : vector<8x26x32xf32> to vector<8x16x32xf32>
    %46 = vector.shape_cast %45 : vector<8x16x32xf32> to vector<128x32xf32>
    %c1 = arith.constant 1 : index
    %c0_14 = arith.constant 0 : index
    %c0_15 = arith.constant 0 : index
    %47 = vector.load %arg4[%c1, %c0_14, %c0_15] : memref<11x32x32xf32, #tpu.memory_space<vmem>>, vector<1x32x32xf32>
    %48 = vector.shape_cast %47 : vector<1x32x32xf32> to vector<32x32xf32>
    %cst_16 = arith.constant dense<0.000000e+00> : vector<128x32xf32>
    %49 = tpu.matmul %46, %48, %cst_16 {dimension_numbers = #tpu.dot_dimension_numbers<[1], [0], [0], [1], [0, 0, 1, 1], [], []>} : vector<128x32xf32>, vector<32x32xf32>, vector<128x32xf32> -> vector<128x32xf32>
    %50 = arith.addf %44, %49 : vector<128x32xf32>
    %51 = vector.extract_strided_slice %37 {offsets = [0, 2, 0], sizes = [8, 16, 32], strides = [1, 1, 1]} : vector<8x26x32xf32> to vector<8x16x32xf32>
    %52 = vector.shape_cast %51 : vector<8x16x32xf32> to vector<128x32xf32>
    %c2 = arith.constant 2 : index
    %c0_17 = arith.constant 0 : index
    %c0_18 = arith.constant 0 : index
    %53 = vector.load %arg4[%c2, %c0_17, %c0_18] : memref<11x32x32xf32, #tpu.memory_space<vmem>>, vector<1x32x32xf32>
    %54 = vector.shape_cast %53 : vector<1x32x32xf32> to vector<32x32xf32>
    %cst_19 = arith.constant dense<0.000000e+00> : vector<128x32xf32>
    %55 = tpu.matmul %52, %54, %cst_19 {dimension_numbers = #tpu.dot_dimension_numbers<[1], [0], [0], [1], [0, 0, 1, 1], [], []>} : vector<128x32xf32>, vector<32x32xf32>, vector<128x32xf32> -> vector<128x32xf32>
    %56 = arith.addf %50, %55 : vector<128x32xf32>
    %57 = vector.extract_strided_slice %37 {offsets = [0, 3, 0], sizes = [8, 16, 32], strides = [1, 1, 1]} : vector<8x26x32xf32> to vector<8x16x32xf32>
    %58 = vector.shape_cast %57 : vector<8x16x32xf32> to vector<128x32xf32>
    %c3 = arith.constant 3 : index
    %c0_20 = arith.constant 0 : index
    %c0_21 = arith.constant 0 : index
    %59 = vector.load %arg4[%c3, %c0_20, %c0_21] : memref<11x32x32xf32, #tpu.memory_space<vmem>>, vector<1x32x32xf32>
    %60 = vector.shape_cast %59 : vector<1x32x32xf32> to vector<32x32xf32>
    %cst_22 = arith.constant dense<0.000000e+00> : vector<128x32xf32>
    %61 = tpu.matmul %58, %60, %cst_22 {dimension_numbers = #tpu.dot_dimension_numbers<[1], [0], [0], [1], [0, 0, 1, 1], [], []>} : vector<128x32xf32>, vector<32x32xf32>, vector<128x32xf32> -> vector<128x32xf32>
    %62 = arith.addf %56, %61 : vector<128x32xf32>
    %63 = vector.extract_strided_slice %37 {offsets = [0, 4, 0], sizes = [8, 16, 32], strides = [1, 1, 1]} : vector<8x26x32xf32> to vector<8x16x32xf32>
    %64 = vector.shape_cast %63 : vector<8x16x32xf32> to vector<128x32xf32>
    %c4 = arith.constant 4 : index
    %c0_23 = arith.constant 0 : index
    %c0_24 = arith.constant 0 : index
    %65 = vector.load %arg4[%c4, %c0_23, %c0_24] : memref<11x32x32xf32, #tpu.memory_space<vmem>>, vector<1x32x32xf32>
    %66 = vector.shape_cast %65 : vector<1x32x32xf32> to vector<32x32xf32>
    %cst_25 = arith.constant dense<0.000000e+00> : vector<128x32xf32>
    %67 = tpu.matmul %64, %66, %cst_25 {dimension_numbers = #tpu.dot_dimension_numbers<[1], [0], [0], [1], [0, 0, 1, 1], [], []>} : vector<128x32xf32>, vector<32x32xf32>, vector<128x32xf32> -> vector<128x32xf32>
    %68 = arith.addf %62, %67 : vector<128x32xf32>
    %69 = vector.extract_strided_slice %37 {offsets = [0, 5, 0], sizes = [8, 16, 32], strides = [1, 1, 1]} : vector<8x26x32xf32> to vector<8x16x32xf32>
    %70 = vector.shape_cast %69 : vector<8x16x32xf32> to vector<128x32xf32>
    %c5 = arith.constant 5 : index
    %c0_26 = arith.constant 0 : index
    %c0_27 = arith.constant 0 : index
    %71 = vector.load %arg4[%c5, %c0_26, %c0_27] : memref<11x32x32xf32, #tpu.memory_space<vmem>>, vector<1x32x32xf32>
    %72 = vector.shape_cast %71 : vector<1x32x32xf32> to vector<32x32xf32>
    %cst_28 = arith.constant dense<0.000000e+00> : vector<128x32xf32>
    %73 = tpu.matmul %70, %72, %cst_28 {dimension_numbers = #tpu.dot_dimension_numbers<[1], [0], [0], [1], [0, 0, 1, 1], [], []>} : vector<128x32xf32>, vector<32x32xf32>, vector<128x32xf32> -> vector<128x32xf32>
    %74 = arith.addf %68, %73 : vector<128x32xf32>
    %75 = vector.extract_strided_slice %37 {offsets = [0, 6, 0], sizes = [8, 16, 32], strides = [1, 1, 1]} : vector<8x26x32xf32> to vector<8x16x32xf32>
    %76 = vector.shape_cast %75 : vector<8x16x32xf32> to vector<128x32xf32>
    %c6 = arith.constant 6 : index
    %c0_29 = arith.constant 0 : index
    %c0_30 = arith.constant 0 : index
    %77 = vector.load %arg4[%c6, %c0_29, %c0_30] : memref<11x32x32xf32, #tpu.memory_space<vmem>>, vector<1x32x32xf32>
    %78 = vector.shape_cast %77 : vector<1x32x32xf32> to vector<32x32xf32>
    %cst_31 = arith.constant dense<0.000000e+00> : vector<128x32xf32>
    %79 = tpu.matmul %76, %78, %cst_31 {dimension_numbers = #tpu.dot_dimension_numbers<[1], [0], [0], [1], [0, 0, 1, 1], [], []>} : vector<128x32xf32>, vector<32x32xf32>, vector<128x32xf32> -> vector<128x32xf32>
    %80 = arith.addf %74, %79 : vector<128x32xf32>
    %81 = vector.extract_strided_slice %37 {offsets = [0, 7, 0], sizes = [8, 16, 32], strides = [1, 1, 1]} : vector<8x26x32xf32> to vector<8x16x32xf32>
    %82 = vector.shape_cast %81 : vector<8x16x32xf32> to vector<128x32xf32>
    %c7 = arith.constant 7 : index
    %c0_32 = arith.constant 0 : index
    %c0_33 = arith.constant 0 : index
    %83 = vector.load %arg4[%c7, %c0_32, %c0_33] : memref<11x32x32xf32, #tpu.memory_space<vmem>>, vector<1x32x32xf32>
    %84 = vector.shape_cast %83 : vector<1x32x32xf32> to vector<32x32xf32>
    %cst_34 = arith.constant dense<0.000000e+00> : vector<128x32xf32>
    %85 = tpu.matmul %82, %84, %cst_34 {dimension_numbers = #tpu.dot_dimension_numbers<[1], [0], [0], [1], [0, 0, 1, 1], [], []>} : vector<128x32xf32>, vector<32x32xf32>, vector<128x32xf32> -> vector<128x32xf32>
    %86 = arith.addf %80, %85 : vector<128x32xf32>
    %87 = vector.extract_strided_slice %37 {offsets = [0, 8, 0], sizes = [8, 16, 32], strides = [1, 1, 1]} : vector<8x26x32xf32> to vector<8x16x32xf32>
    %88 = vector.shape_cast %87 : vector<8x16x32xf32> to vector<128x32xf32>
    %c8 = arith.constant 8 : index
    %c0_35 = arith.constant 0 : index
    %c0_36 = arith.constant 0 : index
    %89 = vector.load %arg4[%c8, %c0_35, %c0_36] : memref<11x32x32xf32, #tpu.memory_space<vmem>>, vector<1x32x32xf32>
    %90 = vector.shape_cast %89 : vector<1x32x32xf32> to vector<32x32xf32>
    %cst_37 = arith.constant dense<0.000000e+00> : vector<128x32xf32>
    %91 = tpu.matmul %88, %90, %cst_37 {dimension_numbers = #tpu.dot_dimension_numbers<[1], [0], [0], [1], [0, 0, 1, 1], [], []>} : vector<128x32xf32>, vector<32x32xf32>, vector<128x32xf32> -> vector<128x32xf32>
    %92 = arith.addf %86, %91 : vector<128x32xf32>
    %93 = vector.extract_strided_slice %37 {offsets = [0, 9, 0], sizes = [8, 16, 32], strides = [1, 1, 1]} : vector<8x26x32xf32> to vector<8x16x32xf32>
    %94 = vector.shape_cast %93 : vector<8x16x32xf32> to vector<128x32xf32>
    %c9 = arith.constant 9 : index
    %c0_38 = arith.constant 0 : index
    %c0_39 = arith.constant 0 : index
    %95 = vector.load %arg4[%c9, %c0_38, %c0_39] : memref<11x32x32xf32, #tpu.memory_space<vmem>>, vector<1x32x32xf32>
    %96 = vector.shape_cast %95 : vector<1x32x32xf32> to vector<32x32xf32>
    %cst_40 = arith.constant dense<0.000000e+00> : vector<128x32xf32>
    %97 = tpu.matmul %94, %96, %cst_40 {dimension_numbers = #tpu.dot_dimension_numbers<[1], [0], [0], [1], [0, 0, 1, 1], [], []>} : vector<128x32xf32>, vector<32x32xf32>, vector<128x32xf32> -> vector<128x32xf32>
    %98 = arith.addf %92, %97 : vector<128x32xf32>
    %99 = vector.extract_strided_slice %37 {offsets = [0, 10, 0], sizes = [8, 16, 32], strides = [1, 1, 1]} : vector<8x26x32xf32> to vector<8x16x32xf32>
    %100 = vector.shape_cast %99 : vector<8x16x32xf32> to vector<128x32xf32>
    %c10 = arith.constant 10 : index
    %c0_41 = arith.constant 0 : index
    %c0_42 = arith.constant 0 : index
    %101 = vector.load %arg4[%c10, %c0_41, %c0_42] : memref<11x32x32xf32, #tpu.memory_space<vmem>>, vector<1x32x32xf32>
    %102 = vector.shape_cast %101 : vector<1x32x32xf32> to vector<32x32xf32>
    %cst_43 = arith.constant dense<0.000000e+00> : vector<128x32xf32>
    %103 = tpu.matmul %100, %102, %cst_43 {dimension_numbers = #tpu.dot_dimension_numbers<[1], [0], [0], [1], [0, 0, 1, 1], [], []>} : vector<128x32xf32>, vector<32x32xf32>, vector<128x32xf32> -> vector<128x32xf32>
    %104 = arith.addf %98, %103 : vector<128x32xf32>
    %c0_44 = arith.constant 0 : index
    %c0_45 = arith.constant 0 : index
    %105 = vector.load %arg5[%c0_44, %c0_45] : memref<1x32xf32, #tpu.memory_space<vmem>>, vector<1x32xf32>
    %106 = vector.broadcast %105 : vector<1x32xf32> to vector<128x32xf32>
    %107 = arith.addf %104, %106 : vector<128x32xf32>
    %cst_46 = arith.constant 0.000000e+00 : f32
    %108 = vector.broadcast %cst_46 : f32 to vector<128x32xf32>
    %109 = arith.maximumf %107, %108 : vector<128x32xf32>
    %110 = vector.shape_cast %109 : vector<128x32xf32> to vector<8x16x32xf32>
    %cst_47 = arith.constant dense<0.000000e+00> : vector<8x32xf32>
    %111 = vector.multi_reduction <add>, %110, %cst_47 [1] : vector<8x16x32xf32> to vector<8x32xf32>
    %cst_48 = arith.constant 1.600000e+01 : f32
    %112 = vector.broadcast %cst_48 : f32 to vector<8x32xf32>
    %113 = arith.divf %111, %112 : vector<8x32xf32>
    %c0_49 = arith.constant 0 : index
    %c0_50 = arith.constant 0 : index
    %114 = vector.load %arg6[%c0_49, %c0_50] : memref<32x32xf32, #tpu.memory_space<vmem>>, vector<32x32xf32>
    %cst_51 = arith.constant dense<0.000000e+00> : vector<8x32xf32>
    %115 = tpu.matmul %113, %114, %cst_51 {dimension_numbers = #tpu.dot_dimension_numbers<[1], [0], [0], [1], [0, 0, 1, 1], [], []>} : vector<8x32xf32>, vector<32x32xf32>, vector<8x32xf32> -> vector<8x32xf32>
    %c0_52 = arith.constant 0 : index
    %c0_53 = arith.constant 0 : index
    %116 = vector.load %arg7[%c0_52, %c0_53] : memref<1x32xf32, #tpu.memory_space<vmem>>, vector<1x32xf32>
    %117 = vector.broadcast %116 : vector<1x32xf32> to vector<8x32xf32>
    %118 = arith.addf %115, %117 : vector<8x32xf32>
    %cst_54 = arith.constant dense<0.000000e+00> : vector<8xf32>
    %119 = vector.multi_reduction <add>, %118, %cst_54 [1] : vector<8x32xf32> to vector<8xf32>
    %120 = vector.shape_cast %119 : vector<8xf32> to vector<8x1xf32>
    %cst_55 = arith.constant 3.200000e+01 : f32
    %121 = vector.broadcast %cst_55 : f32 to vector<8x1xf32>
    %122 = arith.divf %120, %121 : vector<8x1xf32>
    %123 = vector.broadcast %122 : vector<8x1xf32> to vector<8x32xf32>
    %124 = arith.subf %118, %123 : vector<8x32xf32>
    %125 = arith.mulf %124, %124 : vector<8x32xf32>
    %cst_56 = arith.constant dense<0.000000e+00> : vector<8xf32>
    %126 = vector.multi_reduction <add>, %125, %cst_56 [1] : vector<8x32xf32> to vector<8xf32>
    %127 = vector.shape_cast %126 : vector<8xf32> to vector<8x1xf32>
    %cst_57 = arith.constant 3.200000e+01 : f32
    %128 = vector.broadcast %cst_57 : f32 to vector<8x1xf32>
    %129 = arith.divf %127, %128 : vector<8x1xf32>
    %130 = vector.broadcast %122 : vector<8x1xf32> to vector<8x32xf32>
    %131 = arith.subf %118, %130 : vector<8x32xf32>
    %cst_58 = arith.constant 9.99999974E-6 : f32
    %132 = vector.broadcast %cst_58 : f32 to vector<8x1xf32>
    %133 = arith.addf %129, %132 : vector<8x1xf32>
    %134 = math.rsqrt %133 : vector<8x1xf32>
    %135 = vector.broadcast %134 : vector<8x1xf32> to vector<8x32xf32>
    %136 = arith.mulf %131, %135 : vector<8x32xf32>
    %c0_59 = arith.constant 0 : index
    %c0_60 = arith.constant 0 : index
    %137 = vector.load %arg8[%c0_59, %c0_60] : memref<1x32xf32, #tpu.memory_space<vmem>>, vector<1x32xf32>
    %138 = vector.broadcast %137 : vector<1x32xf32> to vector<8x32xf32>
    %139 = arith.mulf %136, %138 : vector<8x32xf32>
    %c0_61 = arith.constant 0 : index
    %c0_62 = arith.constant 0 : index
    %140 = vector.load %arg9[%c0_61, %c0_62] : memref<1x32xf32, #tpu.memory_space<vmem>>, vector<1x32xf32>
    %141 = vector.broadcast %140 : vector<1x32xf32> to vector<8x32xf32>
    %142 = arith.addf %139, %141 : vector<8x32xf32>
    %c0_63 = arith.constant 0 : index
    %c0_64 = arith.constant 0 : index
    %143 = vector.load %arg10[%c0_63, %c0_64] : memref<8x32xf32, #tpu.memory_space<vmem>>, vector<8x32xf32>
    tpu.vector_store %arg10[%c0_63, %c0_64], %142 {strides = array<i32>} : memref<8x32xf32, #tpu.memory_space<vmem>>, vector<8x32xf32>,
    return
  }
  func.func @transform_0(%arg0: i32) -> (i32, i32) {
    %c0_i32 = arith.constant 0 : i32
    %c0_i32_0 = arith.constant 0 : i32
    return %arg0, %c0_i32 : i32, i32
  }
  func.func @transform_1(%arg0: i32) -> (i32, i32) {
    %c0_i32 = arith.constant 0 : i32
    %c0_i32_0 = arith.constant 0 : i32
    %c0_i32_1 = arith.constant 0 : i32
    return %c0_i32, %c0_i32_0 : i32, i32
  }
  func.func @transform_2(%arg0: i32) -> (i32, i32) {
    %c0_i32 = arith.constant 0 : i32
    %c0_i32_0 = arith.constant 0 : i32
    %c0_i32_1 = arith.constant 0 : i32
    return %c0_i32, %c0_i32_0 : i32, i32
  }
  func.func @transform_3(%arg0: i32) -> (i32, i32, i32) {
    %c0_i32 = arith.constant 0 : i32
    %c0_i32_0 = arith.constant 0 : i32
    %c0_i32_1 = arith.constant 0 : i32
    %c0_i32_2 = arith.constant 0 : i32
    return %c0_i32, %c0_i32_0, %c0_i32_1 : i32, i32, i32
  }
  func.func @transform_4(%arg0: i32) -> (i32, i32) {
    %c0_i32 = arith.constant 0 : i32
    %c0_i32_0 = arith.constant 0 : i32
    %c0_i32_1 = arith.constant 0 : i32
    return %c0_i32, %c0_i32_0 : i32, i32
  }
  func.func @transform_5(%arg0: i32) -> (i32, i32) {
    %c0_i32 = arith.constant 0 : i32
    %c0_i32_0 = arith.constant 0 : i32
    %c0_i32_1 = arith.constant 0 : i32
    return %c0_i32, %c0_i32_0 : i32, i32
  }
  func.func @transform_6(%arg0: i32) -> (i32, i32) {
    %c0_i32 = arith.constant 0 : i32
    %c0_i32_0 = arith.constant 0 : i32
    %c0_i32_1 = arith.constant 0 : i32
    return %c0_i32, %c0_i32_0 : i32, i32
  }
  func.func @transform_7(%arg0: i32) -> (i32, i32) {
    %c0_i32 = arith.constant 0 : i32
    %c0_i32_0 = arith.constant 0 : i32
    %c0_i32_1 = arith.constant 0 : i32
    return %c0_i32, %c0_i32_0 : i32, i32
  }
  func.func @transform_8(%arg0: i32) -> (i32, i32) {
    %c0_i32 = arith.constant 0 : i32
    %c0_i32_0 = arith.constant 0 : i32
    %c0_i32_1 = arith.constant 0 : i32
    return %c0_i32, %c0_i32_0 : i32, i32
  }
  func.func @transform_9(%arg0: i32) -> (i32, i32) {
    %c0_i32 = arith.constant 0 : i32
    %c0_i32_0 = arith.constant 0 : i32
    return %arg0, %c0_i32 : i32, i32
  }
}

</mosaic_0001>

<llo_original>
// kernel: tpu_custom_call.1
$region0: #{tpu_custom_call.1}
  #allocation0 [shape = 'u32[]', space=smem, size = 0x4, offset = 0x4, fixed_abs, tag = 'smem constant byte address 0x4 - core index']
  #allocation1 [shape = 'u32[144,128]{1,0:T(1,128)}', space=vmem, size = 0x12000, scoped, tag = 'internal scratch']
  %s0 = inlined_call_operand.hbm [shape: f32[16,16], index: 0, kind: input, shape index: {}]
  %s1 = inlined_call_operand.hbm [shape: f32[16,32], index: 1, kind: input, shape index: {}]
  %s2 = inlined_call_operand.vmem [shape: f32[1,32], index: 2, kind: input, shape index: {}]
  %s3 = inlined_call_operand.hbm [shape: f32[11,32,32], index: 3, kind: input, shape index: {}]
  %s4 = inlined_call_operand.vmem [shape: f32[1,32], index: 4, kind: input, shape index: {}]
  %s5 = inlined_call_operand.hbm [shape: f32[32,32], index: 5, kind: input, shape index: {}]
  %s6 = inlined_call_operand.vmem [shape: f32[1,32], index: 6, kind: input, shape index: {}]
  %s7 = inlined_call_operand.vmem [shape: f32[1,32], index: 7, kind: input, shape index: {}]
  %s8 = inlined_call_operand.vmem [shape: f32[1,32], index: 8, kind: input, shape index: {}]
  %s9 = inlined_call_operand.hbm [shape: f32[16,32], index: 9, kind: output, shape index: {}]
  %s10 = sld [smem:[#allocation0]]
  $region85: #{tpu_custom_call.1} parent=0
    _
  %s12 = ssub.s32 1, %s10
  %s13 = scalar_select 0, %s12, %s10
  $region1: #{tpu_custom_call.1} parent=0
    #allocation2 [shape = 'u8[8192]{0}', space=vmem, size = 0x2000, scoped, tag = 'input window, operand 0']
    #allocation3 [shape = 's32[2]{0}', space=sflag, size = 0x8, scoped, tag = 'scoped memory for tpu_custom_call.1']
    #allocation4 [shape = 's32[2]{0}', space=sflag, size = 0x8, scoped, tag = 'scoped memory for tpu_custom_call.1']
    #allocation5 [shape = 'u8[8192]{0}', space=vmem, size = 0x2000, scoped, tag = 'input window, operand 1, single buffered']
    #allocation6 [shape = 's32[1]{0}', space=sflag, size = 0x4, scoped, tag = 'scoped memory for tpu_custom_call.1']
    #allocation7 [shape = 'u8[180224]{0}', space=vmem, size = 0x2c000, scoped, tag = 'input window, operand 3, single buffered']
    #allocation8 [shape = 'u8[16384]{0}', space=vmem, size = 0x4000, scoped, tag = 'input window, operand 5, single buffered']
    #allocation9 [shape = 's32[1]{0}', space=sflag, size = 0x4, scoped, tag = 'scoped memory for tpu_custom_call.1']
    #allocation10 [shape = 'u8[8192]{0}', space=vmem, size = 0x2000, scoped, tag = 'output window, operand 0']
    %14 = vsyncpa [#allocation3], 0
    %s15 = scalar_lea.sflag [#allocation3], 1
    %16 = vsyncpa %s15, 0
    %17 = vsyncpa [#allocation6], 0
    %18 = vsyncpa [#allocation9], 0
    %19 = vsyncpa [#allocation4], 0
    %s20 = scalar_lea.sflag [#allocation4], 1
    %21 = vsyncpa %s20, 0
    loop: start=0, step=1, limit=4
    $region2: #{tpu_custom_call.1} parent=1 // loop_pre_header
      _
    $region3: #{tpu_custom_call.1} parent=1 // loop_header
      %s23 = sphi 0, %s27
      %p24 = scmp.ge.s32.totalorder %s23, 4
      %s33 = sphi 0, %s35
      %s36 = sphi 0, %s33
      %s37 = sphi 0, %s36
      %s53 = sphi 0, %s37
      %s57 = sphi 0, %s57
      %s59 = sphi 0, %s57
      %s60 = sphi 0, %s59
      %s74 = sphi 0, %s60
      %s78 = sphi 0, %s78
      %s80 = sphi 0, %s78
      %s81 = sphi 0, %s80
      %s95 = sphi 0, %s81
      %s99 = sphi 0, %s99
      %s101 = sphi 0, %s99
      %s102 = sphi 0, %s101
      %s116 = sphi 0, %s102
      %s120 = sphi 0, %s120
      %s122 = sphi 0, %s120
      %s123 = sphi 0, %s122
      %s137 = sphi 0, %s123
      %s141 = sphi 0, %s141
      %s143 = sphi 0, %s141
      %s144 = sphi 0, %s143
      %s158 = sphi 0, %s144
      %s162 = sphi 0, %s162
      %s164 = sphi 0, %s162
      %s165 = sphi 0, %s164
      %s179 = sphi 0, %s165
      %s183 = sphi 0, %s183
      %s185 = sphi 0, %s183
      %s186 = sphi 0, %s185
      %s200 = sphi 0, %s186
      %s204 = sphi 0, %s204
      %s206 = sphi 0, %s204
      %s207 = sphi 0, %s206
      %s221 = sphi 0, %s207
      %s227 = sphi 0, %s229
      %s230 = sphi 0, %s227
      %s231 = sphi 0, %s230
      %s247 = sphi 0, %s231
    $region4: #{tpu_custom_call.1} parent=1 // loop_header_branch
      %26 = sbr.rel (%p24) target = $region8
    $region5: #{tpu_custom_call.1} parent=1 // loop_body
      %s28 = ssub.s32 %s23, 1
      %s29 = ssub.s32 %s23, 2
      %s30 = sadd.s32 %s23, 1
      %s31 = ssub.s32 %s23, %s30
      %p32 = scmp.eq.s32.totalorder %s31, 0
      %s34 = sadd.s32 %s33, 1
      %s35 = scalar_select %p32, %s33, %s34
      %p38 = pneg %p32
      %p39 = scmp.eq.s32.totalorder %s23, 1
      %p40 = por %p38, %p39
      %p41 = scmp.ne.s32.totalorder %s33, %s36
      %p42 = scmp.eq.s32.totalorder %s23, 0
      %p43 = por %p41, %p42
      %p44 = scmp.ne.s32.totalorder %s33, %s36
      %p45 = scmp.eq.s32.totalorder %s28, 1
      %p46 = por %p44, %p45
      %p47 = scmp.ne.s32.totalorder %s36, %s37
      %p48 = scmp.eq.s32.totalorder %s28, 0
      %p49 = por %p47, %p48
      %p50 = scmp.ne.s32.totalorder %s36, %s37
      %p51 = scmp.eq.s32.totalorder %s29, 1
      %p52 = por %p50, %p51
      %p54 = scmp.ne.s32.totalorder %s37, %s53
      %p55 = scmp.eq.s32.totalorder %s29, 0
      %p56 = por %p54, %p55
      %s58 = sadd.s32 %s57, 1
      %p61 = scmp.eq.s32.totalorder %s23, 1
      %p62 = scmp.ne.s32.totalorder %s57, %s59
      %p63 = scmp.eq.s32.totalorder %s23, 0
      %p64 = por %p62, %p63
      %p65 = scmp.ne.s32.totalorder %s57, %s59
      %p66 = scmp.eq.s32.totalorder %s28, 1
      %p67 = por %p65, %p66
      %p68 = scmp.ne.s32.totalorder %s59, %s60
      %p69 = scmp.eq.s32.totalorder %s28, 0
      %p70 = por %p68, %p69
      %p71 = scmp.ne.s32.totalorder %s59, %s60
      %p72 = scmp.eq.s32.totalorder %s29, 1
      %p73 = por %p71, %p72
      %p75 = scmp.ne.s32.totalorder %s60, %s74
      %p76 = scmp.eq.s32.totalorder %s29, 0
      %p77 = por %p75, %p76
      %s79 = sadd.s32 %s78, 1
      %p82 = scmp.eq.s32.totalorder %s23, 1
      %p83 = scmp.ne.s32.totalorder %s78, %s80
      %p84 = scmp.eq.s32.totalorder %s23, 0
      %p85 = por %p83, %p84
      %p86 = scmp.ne.s32.totalorder %s78, %s80
      %p87 = scmp.eq.s32.totalorder %s28, 1
      %p88 = por %p86, %p87
      %p89 = scmp.ne.s32.totalorder %s80, %s81
      %p90 = scmp.eq.s32.totalorder %s28, 0
      %p91 = por %p89, %p90
      %p92 = scmp.ne.s32.totalorder %s80, %s81
      %p93 = scmp.eq.s32.totalorder %s29, 1
      %p94 = por %p92, %p93
      %p96 = scmp.ne.s32.totalorder %s81, %s95
      %p97 = scmp.eq.s32.totalorder %s29, 0
      %p98 = por %p96, %p97
      %s100 = sadd.s32 %s99, 1
      %p103 = scmp.eq.s32.totalorder %s23, 1
      %p104 = scmp.ne.s32.totalorder %s99, %s101
      %p105 = scmp.eq.s32.totalorder %s23, 0
      %p106 = por %p104, %p105
      %p107 = scmp.ne.s32.totalorder %s99, %s101
      %p108 = scmp.eq.s32.totalorder %s28, 1
      %p109 = por %p107, %p108
      %p110 = scmp.ne.s32.totalorder %s101, %s102
      %p111 = scmp.eq.s32.totalorder %s28, 0
      %p112 = por %p110, %p111
      %p113 = scmp.ne.s32.totalorder %s101, %s102
      %p114 = scmp.eq.s32.totalorder %s29, 1
      %p115 = por %p113, %p114
      %p117 = scmp.ne.s32.totalorder %s102, %s116
      %p118 = scmp.eq.s32.totalorder %s29, 0
      %p119 = por %p117, %p118
      %s121 = sadd.s32 %s120, 1
      %p124 = scmp.eq.s32.totalorder %s23, 1
      %p125 = scmp.ne.s32.totalorder %s120, %s122
      %p126 = scmp.eq.s32.totalorder %s23, 0
      %p127 = por %p125, %p126
      %p128 = scmp.ne.s32.totalorder %s120, %s122
      %p129 = scmp.eq.s32.totalorder %s28, 1
      %p130 = por %p128, %p129
      %p131 = scmp.ne.s32.totalorder %s122, %s123
      %p132 = scmp.eq.s32.totalorder %s28, 0
      %p133 = por %p131, %p132
      %p134 = scmp.ne.s32.totalorder %s122, %s123
      %p135 = scmp.eq.s32.totalorder %s29, 1
      %p136 = por %p134, %p135
      %p138 = scmp.ne.s32.totalorder %s123, %s137
      %p139 = scmp.eq.s32.totalorder %s29, 0
      %p140 = por %p138, %p139
      %s142 = sadd.s32 %s141, 1
      %p145 = scmp.eq.s32.totalorder %s23, 1
      %p146 = scmp.ne.s32.totalorder %s141, %s143
      %p147 = scmp.eq.s32.totalorder %s23, 0
      %p148 = por %p146, %p147
      %p149 = scmp.ne.s32.totalorder %s141, %s143
      %p150 = scmp.eq.s32.totalorder %s28, 1
      %p151 = por %p149, %p150
      %p152 = scmp.ne.s32.totalorder %s143, %s144
      %p153 = scmp.eq.s32.totalorder %s28, 0
      %p154 = por %p152, %p153
      %p155 = scmp.ne.s32.totalorder %s143, %s144
      %p156 = scmp.eq.s32.totalorder %s29, 1
      %p157 = por %p155, %p156
      %p159 = scmp.ne.s32.totalorder %s144, %s158
      %p160 = scmp.eq.s32.totalorder %s29, 0
      %p161 = por %p159, %p160
      %s163 = sadd.s32 %s162, 1
      %p166 = scmp.eq.s32.totalorder %s23, 1
      %p167 = scmp.ne.s32.totalorder %s162, %s164
      %p168 = scmp.eq.s32.totalorder %s23, 0
      %p169 = por %p167, %p168
      %p170 = scmp.ne.s32.totalorder %s162, %s164
      %p171 = scmp.eq.s32.totalorder %s28, 1
      %p172 = por %p170, %p171
      %p173 = scmp.ne.s32.totalorder %s164, %s165
      %p174 = scmp.eq.s32.totalorder %s28, 0
      %p175 = por %p173, %p174
      %p176 = scmp.ne.s32.totalorder %s164, %s165
      %p177 = scmp.eq.s32.totalorder %s29, 1
      %p178 = por %p176, %p177
      %p180 = scmp.ne.s32.totalorder %s165, %s179
      %p181 = scmp.eq.s32.totalorder %s29, 0
      %p182 = por %p180, %p181
      %s184 = sadd.s32 %s183, 1
      %p187 = scmp.eq.s32.totalorder %s23, 1
      %p188 = scmp.ne.s32.totalorder %s183, %s185
      %p189 = scmp.eq.s32.totalorder %s23, 0
      %p190 = por %p188, %p189
      %p191 = scmp.ne.s32.totalorder %s183, %s185
      %p192 = scmp.eq.s32.totalorder %s28, 1
      %p193 = por %p191, %p192
      %p194 = scmp.ne.s32.totalorder %s185, %s186
      %p195 = scmp.eq.s32.totalorder %s28, 0
      %p196 = por %p194, %p195
      %p197 = scmp.ne.s32.totalorder %s185, %s186
      %p198 = scmp.eq.s32.totalorder %s29, 1
      %p199 = por %p197, %p198
      %p201 = scmp.ne.s32.totalorder %s186, %s200
      %p202 = scmp.eq.s32.totalorder %s29, 0
      %p203 = por %p201, %p202
      %s205 = sadd.s32 %s204, 1
      %p208 = scmp.eq.s32.totalorder %s23, 1
      %p209 = scmp.ne.s32.totalorder %s204, %s206
      %p210 = scmp.eq.s32.totalorder %s23, 0
      %p211 = por %p209, %p210
      %p212 = scmp.ne.s32.totalorder %s204, %s206
      %p213 = scmp.eq.s32.totalorder %s28, 1
      %p214 = por %p212, %p213
      %p215 = scmp.ne.s32.totalorder %s206, %s207
      %p216 = scmp.eq.s32.totalorder %s28, 0
      %p217 = por %p215, %p216
      %p218 = scmp.ne.s32.totalorder %s206, %s207
      %p219 = scmp.eq.s32.totalorder %s29, 1
      %p220 = por %p218, %p219
      %p222 = scmp.ne.s32.totalorder %s207, %s221
      %p223 = scmp.eq.s32.totalorder %s29, 0
      %p224 = por %p222, %p223
      %s225 = ssub.s32 %s23, %s30
      %p226 = scmp.eq.s32.totalorder %s225, 0
      %s228 = sadd.s32 %s227, 1
      %s229 = scalar_select %p226, %s227, %s228
      %p232 = pneg %p226
      %p233 = scmp.eq.s32.totalorder %s23, 1
      %p234 = por %p232, %p233
      %p235 = scmp.ne.s32.totalorder %s227, %s230
      %p236 = scmp.eq.s32.totalorder %s23, 0
      %p237 = por %p235, %p236
      %p238 = scmp.ne.s32.totalorder %s227, %s230
      %p239 = scmp.eq.s32.totalorder %s28, 1
      %p240 = por %p238, %p239
      %p241 = scmp.ne.s32.totalorder %s230, %s231
      %p242 = scmp.eq.s32.totalorder %s28, 0
      %p243 = por %p241, %p242
      %p244 = scmp.ne.s32.totalorder %s230, %s231
      %p245 = scmp.eq.s32.totalorder %s29, 1
      %p246 = por %p244, %p245
      %p248 = scmp.ne.s32.totalorder %s231, %s247
      %p249 = scmp.eq.s32.totalorder %s29, 0
      %p250 = por %p248, %p249
      %p251 = scmp.le.s32.totalorder 1, %s23
      %p252 = scmp.lt.s32.totalorder %s23, 3
      %p253 = pnand %p251, %p252
      %p254 = pneg %p253
      // Predicated region
      $region9: #{tpu_custom_call.1} parent=5 // pred_check
        _
      $region10: #{tpu_custom_call.1} parent=5 // pred_check_branch
        %256 = sbr.rel (%p253) target = $region12
      $region11: #{tpu_custom_call.1} parent=5 // pred_region
        %s257 = ssub.s32 %s23, 1
        // Predicated region
        $region13: #{tpu_custom_call.1} parent=11 // pred_check
          %p258 = pneg %p70
        $region14: #{tpu_custom_call.1} parent=11 // pred_check_branch
          %260 = sbr.rel (%p258) target = $region16
        $region15: #{tpu_custom_call.1} parent=11 // pred_region
          %s262 = ssub.s32 256, 256
          %263 = vsyncadd [#allocation6], %s262
          %s264 = sshll.u32 [#allocation5], 4
          %s265 = int_to_ptr.vmem [resolvable:$true] %s264
          %270 = dma.hbm_to_vmem [thread:$0]  %s1, 256, %s265, [#allocation6], 128, 128, 8
        $region16: #{tpu_custom_call.1} parent=11 // pred_fallthru
          _
        // Predicated region
        $region17: #{tpu_custom_call.1} parent=11 // pred_check
          %p271 = pneg %p91
        $region18: #{tpu_custom_call.1} parent=11 // pred_check_branch
          %273 = sbr.rel (%p271) target = $region20
        $region19: #{tpu_custom_call.1} parent=11 // pred_region
          _
        $region20: #{tpu_custom_call.1} parent=11 // pred_fallthru
          _
        // Predicated region
        $region21: #{tpu_custom_call.1} parent=11 // pred_check
          %p274 = pneg %p112
        $region22: #{tpu_custom_call.1} parent=11 // pred_check_branch
          %276 = sbr.rel (%p274) target = $region24
        $region23: #{tpu_custom_call.1} parent=11 // pred_region
          %s278 = ssub.s32 5632, 5632
          %279 = vsyncadd [#allocation6], %s278
          %s280 = sshll.u32 [#allocation7], 4
          %s281 = int_to_ptr.vmem [resolvable:$true] %s280
          %286 = dma.hbm_to_vmem [thread:$0]  %s3, 5632, %s281, [#allocation6], 128, 128, 8
        $region24: #{tpu_custom_call.1} parent=11 // pred_fallthru
          _
        // Predicated region
        $region25: #{tpu_custom_call.1} parent=11 // pred_check
          %p287 = pneg %p133
        $region26: #{tpu_custom_call.1} parent=11 // pred_check_branch
          %289 = sbr.rel (%p287) target = $region28
        $region27: #{tpu_custom_call.1} parent=11 // pred_region
          _
        $region28: #{tpu_custom_call.1} parent=11 // pred_fallthru
          _
        // Predicated region
        $region29: #{tpu_custom_call.1} parent=11 // pred_check
          %p290 = pneg %p154
        $region30: #{tpu_custom_call.1} parent=11 // pred_check_branch
          %292 = sbr.rel (%p290) target = $region32
        $region31: #{tpu_custom_call.1} parent=11 // pred_region
          %s294 = ssub.s32 512, 512
          %295 = vsyncadd [#allocation9], %s294
          %s296 = sshll.u32 [#allocation8], 4
          %s297 = int_to_ptr.vmem [resolvable:$true] %s296
          %302 = dma.hbm_to_vmem [thread:$0]  %s5, 512, %s297, [#allocation9], 128, 128, 8
        $region32: #{tpu_custom_call.1} parent=11 // pred_fallthru
          _
        // Predicated region
        $region33: #{tpu_custom_call.1} parent=11 // pred_check
          %p303 = pneg %p175
        $region34: #{tpu_custom_call.1} parent=11 // pred_check_branch
          %305 = sbr.rel (%p303) target = $region36
        $region35: #{tpu_custom_call.1} parent=11 // pred_region
          _
        $region36: #{tpu_custom_call.1} parent=11 // pred_fallthru
          _
        // Predicated region
        $region37: #{tpu_custom_call.1} parent=11 // pred_check
          %p306 = pneg %p196
        $region38: #{tpu_custom_call.1} parent=11 // pred_check_branch
          %308 = sbr.rel (%p306) target = $region40
        $region39: #{tpu_custom_call.1} parent=11 // pred_region
          _
        $region40: #{tpu_custom_call.1} parent=11 // pred_fallthru
          _
        // Predicated region
        $region41: #{tpu_custom_call.1} parent=11 // pred_check
          %p309 = pneg %p217
        $region42: #{tpu_custom_call.1} parent=11 // pred_check_branch
          %311 = sbr.rel (%p309) target = $region44
        $region43: #{tpu_custom_call.1} parent=11 // pred_region
          _
        $region44: #{tpu_custom_call.1} parent=11 // pred_fallthru
          _
      $region12: #{tpu_custom_call.1} parent=5 // pred_fallthru
        _
      %p312 = scmp.lt.s32.totalorder %s23, 2
      // Predicated region
      $region45: #{tpu_custom_call.1} parent=5 // pred_check
        %p313 = pneg %p312
      $region46: #{tpu_custom_call.1} parent=5 // pred_check_branch
        %315 = sbr.rel (%p313) target = $region48
      $region47: #{tpu_custom_call.1} parent=5 // pred_region
        // Predicated region
        $region49: #{tpu_custom_call.1} parent=47 // pred_check
          %p316 = pneg %p43
        $region50: #{tpu_custom_call.1} parent=47 // pred_check_branch
          %318 = sbr.rel (%p316) target = $region52
        $region51: #{tpu_custom_call.1} parent=47 // pred_region
          %s319 = sand.u32 %s33, 1
          %s320 = scalar_lea.sflag [#allocation3], %s319
          %s321 = sand.u32 %s33, 1
          %s322 = smul.addr %s321, 8
          %s323 = scalar_lea.vmem [#allocation2], %s322
          %s325 = ssub.s32 128, 128
          %326 = vsyncadd %s320, %s325
          %s327 = smul.addr %s23, 128
          %s328 = scalar_lea.hbm %s0, %s327
          %s330 = sshll.u32 %s323, 4
          %s331 = int_to_ptr.vmem [resolvable:$true] %s330
          %333 = dma.hbm_to_vmem [thread:$0]  %s328, 128, %s331, %s320
        $region52: #{tpu_custom_call.1} parent=47 // pred_fallthru
          _
      $region48: #{tpu_custom_call.1} parent=5 // pred_fallthru
        _
      %p334 = scmp.le.s32.totalorder 1, %s23
      %p335 = scmp.lt.s32.totalorder %s23, 3
      %p336 = pnand %p334, %p335
      %p337 = pneg %p336
      // Predicated region
      $region53: #{tpu_custom_call.1} parent=5 // pred_check
        _
      $region54: #{tpu_custom_call.1} parent=5 // pred_check_branch
        %339 = sbr.rel (%p336) target = $region56
      $region55: #{tpu_custom_call.1} parent=5 // pred_region
        %s340 = ssub.s32 %s23, 1
        %s341 = sand.u32 %s36, 1
        %s342 = scalar_lea.sflag [#allocation3], %s341
        %s343 = sand.u32 %s36, 1
        %s344 = smul.addr %s343, 8
        %s345 = scalar_lea.vmem [#allocation2], %s344
        // Predicated region
        $region57: #{tpu_custom_call.1} parent=55 // pred_check
          %p346 = pneg %p49
        $region58: #{tpu_custom_call.1} parent=55 // pred_check_branch
          %348 = sbr.rel (%p346) target = $region60
        $region59: #{tpu_custom_call.1} parent=55 // pred_region
          %349 = dma.done %s342, 128
        $region60: #{tpu_custom_call.1} parent=55 // pred_fallthru
          _
        // Predicated region
        $region61: #{tpu_custom_call.1} parent=55 // pred_check
          %p350 = pneg %p70
        $region62: #{tpu_custom_call.1} parent=55 // pred_check_branch
          %352 = sbr.rel (%p350) target = $region64
        $region63: #{tpu_custom_call.1} parent=55 // pred_region
          %353 = dma.done [#allocation6], 256
        $region64: #{tpu_custom_call.1} parent=55 // pred_fallthru
          _
        // Predicated region
        $region65: #{tpu_custom_call.1} parent=55 // pred_check
          %p354 = pneg %p112
        $region66: #{tpu_custom_call.1} parent=55 // pred_check_branch
          %356 = sbr.rel (%p354) target = $region68
        $region67: #{tpu_custom_call.1} parent=55 // pred_region
          %357 = dma.done [#allocation6], 5632
        $region68: #{tpu_custom_call.1} parent=55 // pred_fallthru
          _
        // Predicated region
        $region69: #{tpu_custom_call.1} parent=55 // pred_check
          %p358 = pneg %p154
        $region70: #{tpu_custom_call.1} parent=55 // pred_check_branch
          %360 = sbr.rel (%p358) target = $region72
        $region71: #{tpu_custom_call.1} parent=55 // pred_region
          %361 = dma.done [#allocation9], 512
        $region72: #{tpu_custom_call.1} parent=55 // pred_fallthru
          _
        %s362 = sand.u32 %s36, 1
        %s363 = scalar_lea.sflag [#allocation3], %s362
        %s364 = sand.u32 %s36, 1
        %s365 = smul.addr %s364, 8
        %s366 = scalar_lea.vmem [#allocation2], %s365
        %p367 = pneg %p49
        %p368 = pneg %p46
        %p369 = pneg %p70
        %p370 = pneg %p67
        %p371 = pneg %p91
        %p372 = pneg %p88
        %p373 = pneg %p112
        %p374 = pneg %p109
        %p375 = pneg %p133
        %p376 = pneg %p130
        %p377 = pneg %p154
        %p378 = pneg %p151
        %p379 = pneg %p175
        %p380 = pneg %p172
        %p381 = pneg %p196
        %p382 = pneg %p193
        %p383 = pneg %p217
        %p384 = pneg %p214
        %p385 = pneg %p243
        %p386 = pneg %p240
        %s387 = sand.u32 %s230, 1
        %s388 = scalar_lea.sflag [#allocation4], %s387
        %s389 = sand.u32 %s230, 1
        %s390 = smul.addr %s389, 8
        %s391 = scalar_lea.vmem [#allocation10], %s390
        %v392 = vld [vmem:[%s345] sm:$0xff]
        %394 = vrot.lane.b32.xlu0 %v392, 5
        %v395 = vpop.permute.xlu0 %394
        %vm397 = vcmask 39936
        %v398 = vsel %vm397, 0.0, %v395
        %vm399 = vcmask 171008
        %v400 = vsel %vm399, %v398, 0.0
        %v401 = vlaneseq
        %v402 = vshrl.u32 %v401, 7
        %v403 = vsub.s32 0, %v402
        %v404 = vrot.slane %v400, %v403
        %406 = vbcast.lane.b32.xlu0 %v404, 256
        %v407 = vpop.permute.xlu0 %406
        %s409 = sor.u32 256, 8
        %410 = vbcast.lane.b32.xlu0 %v404, %s409
        %v411 = vpop.permute.xlu0 %410
        %v412 = vlaneseq
        %v413 = vshrl.u32 %v412, 7
        %v414 = vsub.s32 1, %v413
        %v415 = vrot.slane %v400, %v414
        %417 = vbcast.lane.b32.xlu0 %v415, 256
        %v418 = vpop.permute.xlu0 %417
        %s420 = sor.u32 256, 8
        %421 = vbcast.lane.b32.xlu0 %v415, %s420
        %v422 = vpop.permute.xlu0 %421
        %v423 = vlaneseq
        %v424 = vshrl.u32 %v423, 7
        %v425 = vsub.s32 2, %v424
        %v426 = vrot.slane %v400, %v425
        %428 = vbcast.lane.b32.xlu0 %v426, 256
        %v429 = vpop.permute.xlu0 %428
        %s431 = sor.u32 256, 8
        %432 = vbcast.lane.b32.xlu0 %v426, %s431
        %v433 = vpop.permute.xlu0 %432
        %v434 = vlaneseq
        %v435 = vshrl.u32 %v434, 7
        %v436 = vsub.s32 3, %v435
        %v437 = vrot.slane %v400, %v436
        %439 = vbcast.lane.b32.xlu0 %v437, 256
        %v440 = vpop.permute.xlu0 %439
        %s442 = sor.u32 256, 8
        %443 = vbcast.lane.b32.xlu0 %v437, %s442
        %v444 = vpop.permute.xlu0 %443
        %v445 = vlaneseq
        %v446 = vshrl.u32 %v445, 7
        %v447 = vsub.s32 4, %v446
        %v448 = vrot.slane %v400, %v447
        %450 = vbcast.lane.b32.xlu0 %v448, 256
        %v451 = vpop.permute.xlu0 %450
        %s453 = sor.u32 256, 8
        %454 = vbcast.lane.b32.xlu0 %v448, %s453
        %v455 = vpop.permute.xlu0 %454
        %v456 = vlaneseq
        %v457 = vshrl.u32 %v456, 7
        %v458 = vsub.s32 5, %v457
        %v459 = vrot.slane %v400, %v458
        %461 = vbcast.lane.b32.xlu0 %v459, 256
        %v462 = vpop.permute.xlu0 %461
        %s464 = sor.u32 256, 8
        %465 = vbcast.lane.b32.xlu0 %v459, %s464
        %v466 = vpop.permute.xlu0 %465
        %v467 = vlaneseq
        %v468 = vshrl.u32 %v467, 7
        %v469 = vsub.s32 6, %v468
        %v470 = vrot.slane %v400, %v469
        %472 = vbcast.lane.b32.xlu0 %v470, 256
        %v473 = vpop.permute.xlu0 %472
        %s475 = sor.u32 256, 8
        %476 = vbcast.lane.b32.xlu0 %v470, %s475
        %v477 = vpop.permute.xlu0 %476
        %v478 = vlaneseq
        %v479 = vshrl.u32 %v478, 7
        %v480 = vsub.s32 7, %v479
        %v481 = vrot.slane %v400, %v480
        %483 = vbcast.lane.b32.xlu0 %v481, 256
        %v484 = vpop.permute.xlu0 %483
        %s486 = sor.u32 256, 8
        %487 = vbcast.lane.b32.xlu0 %v481, %s486
        %v488 = vpop.permute.xlu0 %487
        %s490 = sor.u32 256, 1
        %491 = vbcast.lane.b32.xlu0 %v404, %s490
        %v492 = vpop.permute.xlu0 %491
        %s494 = sor.u32 256, 9
        %495 = vbcast.lane.b32.xlu0 %v404, %s494
        %v496 = vpop.permute.xlu0 %495
        %s498 = sor.u32 256, 1
        %499 = vbcast.lane.b32.xlu0 %v415, %s498
        %v500 = vpop.permute.xlu0 %499
        %s502 = sor.u32 256, 9
        %503 = vbcast.lane.b32.xlu0 %v415, %s502
        %v504 = vpop.permute.xlu0 %503
        %s506 = sor.u32 256, 1
        %507 = vbcast.lane.b32.xlu0 %v426, %s506
        %v508 = vpop.permute.xlu0 %507
        %s510 = sor.u32 256, 9
        %511 = vbcast.lane.b32.xlu0 %v426, %s510
        %v512 = vpop.permute.xlu0 %511
        %s514 = sor.u32 256, 1
        %515 = vbcast.lane.b32.xlu0 %v437, %s514
        %v516 = vpop.permute.xlu0 %515
        %s518 = sor.u32 256, 9
        %519 = vbcast.lane.b32.xlu0 %v437, %s518
        %v520 = vpop.permute.xlu0 %519
        %s522 = sor.u32 256, 1
        %523 = vbcast.lane.b32.xlu0 %v448, %s522
        %v524 = vpop.permute.xlu0 %523
        %s526 = sor.u32 256, 9
        %527 = vbcast.lane.b32.xlu0 %v448, %s526
        %v528 = vpop.permute.xlu0 %527
        %s530 = sor.u32 256, 1
        %531 = vbcast.lane.b32.xlu0 %v459, %s530
        %v532 = vpop.permute.xlu0 %531
        %s534 = sor.u32 256, 9
        %535 = vbcast.lane.b32.xlu0 %v459, %s534
        %v536 = vpop.permute.xlu0 %535
        %s538 = sor.u32 256, 1
        %539 = vbcast.lane.b32.xlu0 %v470, %s538
        %v540 = vpop.permute.xlu0 %539
        %s542 = sor.u32 256, 9
        %543 = vbcast.lane.b32.xlu0 %v470, %s542
        %v544 = vpop.permute.xlu0 %543
        %s546 = sor.u32 256, 1
        %547 = vbcast.lane.b32.xlu0 %v481, %s546
        %v548 = vpop.permute.xlu0 %547
        %s550 = sor.u32 256, 9
        %551 = vbcast.lane.b32.xlu0 %v481, %s550
        %v552 = vpop.permute.xlu0 %551
        %s554 = sor.u32 256, 2
        %555 = vbcast.lane.b32.xlu0 %v404, %s554
        %v556 = vpop.permute.xlu0 %555
        %s558 = sor.u32 256, 10
        %559 = vbcast.lane.b32.xlu0 %v404, %s558
        %v560 = vpop.permute.xlu0 %559
        %s562 = sor.u32 256, 2
        %563 = vbcast.lane.b32.xlu0 %v415, %s562
        %v564 = vpop.permute.xlu0 %563
        %s566 = sor.u32 256, 10
        %567 = vbcast.lane.b32.xlu0 %v415, %s566
        %v568 = vpop.permute.xlu0 %567
        %s570 = sor.u32 256, 2
        %571 = vbcast.lane.b32.xlu0 %v426, %s570
        %v572 = vpop.permute.xlu0 %571
        %s574 = sor.u32 256, 10
        %575 = vbcast.lane.b32.xlu0 %v426, %s574
        %v576 = vpop.permute.xlu0 %575
        %s578 = sor.u32 256, 2
        %579 = vbcast.lane.b32.xlu0 %v437, %s578
        %v580 = vpop.permute.xlu0 %579
        %s582 = sor.u32 256, 10
        %583 = vbcast.lane.b32.xlu0 %v437, %s582
        %v584 = vpop.permute.xlu0 %583
        %s586 = sor.u32 256, 2
        %587 = vbcast.lane.b32.xlu0 %v448, %s586
        %v588 = vpop.permute.xlu0 %587
        %s590 = sor.u32 256, 10
        %591 = vbcast.lane.b32.xlu0 %v448, %s590
        %v592 = vpop.permute.xlu0 %591
        %s594 = sor.u32 256, 2
        %595 = vbcast.lane.b32.xlu0 %v459, %s594
        %v596 = vpop.permute.xlu0 %595
        %s598 = sor.u32 256, 10
        %599 = vbcast.lane.b32.xlu0 %v459, %s598
        %v600 = vpop.permute.xlu0 %599
        %s602 = sor.u32 256, 2
        %603 = vbcast.lane.b32.xlu0 %v470, %s602
        %v604 = vpop.permute.xlu0 %603
        %s606 = sor.u32 256, 10
        %607 = vbcast.lane.b32.xlu0 %v470, %s606
        %v608 = vpop.permute.xlu0 %607
        %s610 = sor.u32 256, 2
        %611 = vbcast.lane.b32.xlu0 %v481, %s610
        %v612 = vpop.permute.xlu0 %611
        %s614 = sor.u32 256, 10
        %615 = vbcast.lane.b32.xlu0 %v481, %s614
        %v616 = vpop.permute.xlu0 %615
        %s618 = sor.u32 256, 3
        %619 = vbcast.lane.b32.xlu0 %v404, %s618
        %v620 = vpop.permute.xlu0 %619
        %s622 = sor.u32 256, 11
        %623 = vbcast.lane.b32.xlu0 %v404, %s622
        %v624 = vpop.permute.xlu0 %623
        %s626 = sor.u32 256, 3
        %627 = vbcast.lane.b32.xlu0 %v415, %s626
        %v628 = vpop.permute.xlu0 %627
        %s630 = sor.u32 256, 11
        %631 = vbcast.lane.b32.xlu0 %v415, %s630
        %v632 = vpop.permute.xlu0 %631
        %s634 = sor.u32 256, 3
        %635 = vbcast.lane.b32.xlu0 %v426, %s634
        %v636 = vpop.permute.xlu0 %635
        %s638 = sor.u32 256, 11
        %639 = vbcast.lane.b32.xlu0 %v426, %s638
        %v640 = vpop.permute.xlu0 %639
        %s642 = sor.u32 256, 3
        %643 = vbcast.lane.b32.xlu0 %v437, %s642
        %v644 = vpop.permute.xlu0 %643
        %s646 = sor.u32 256, 11
        %647 = vbcast.lane.b32.xlu0 %v437, %s646
        %v648 = vpop.permute.xlu0 %647
        %s650 = sor.u32 256, 3
        %651 = vbcast.lane.b32.xlu0 %v448, %s650
        %v652 = vpop.permute.xlu0 %651
        %s654 = sor.u32 256, 11
        %655 = vbcast.lane.b32.xlu0 %v448, %s654
        %v656 = vpop.permute.xlu0 %655
        %s658 = sor.u32 256, 3
        %659 = vbcast.lane.b32.xlu0 %v459, %s658
        %v660 = vpop.permute.xlu0 %659
        %s662 = sor.u32 256, 11
        %663 = vbcast.lane.b32.xlu0 %v459, %s662
        %v664 = vpop.permute.xlu0 %663
        %s666 = sor.u32 256, 3
        %667 = vbcast.lane.b32.xlu0 %v470, %s666
        %v668 = vpop.permute.xlu0 %667
        %s670 = sor.u32 256, 11
        %671 = vbcast.lane.b32.xlu0 %v470, %s670
        %v672 = vpop.permute.xlu0 %671
        %s674 = sor.u32 256, 3
        %675 = vbcast.lane.b32.xlu0 %v481, %s674
        %v676 = vpop.permute.xlu0 %675
        %s678 = sor.u32 256, 11
        %679 = vbcast.lane.b32.xlu0 %v481, %s678
        %v680 = vpop.permute.xlu0 %679
        %s682 = sor.u32 256, 4
        %683 = vbcast.lane.b32.xlu0 %v404, %s682
        %v684 = vpop.permute.xlu0 %683
        %s686 = sor.u32 256, 12
        %687 = vbcast.lane.b32.xlu0 %v404, %s686
        %v688 = vpop.permute.xlu0 %687
        %s690 = sor.u32 256, 4
        %691 = vbcast.lane.b32.xlu0 %v415, %s690
        %v692 = vpop.permute.xlu0 %691
        %s694 = sor.u32 256, 12
        %695 = vbcast.lane.b32.xlu0 %v415, %s694
        %v696 = vpop.permute.xlu0 %695
        %s698 = sor.u32 256, 4
        %699 = vbcast.lane.b32.xlu0 %v426, %s698
        %v700 = vpop.permute.xlu0 %699
        %s702 = sor.u32 256, 12
        %703 = vbcast.lane.b32.xlu0 %v426, %s702
        %v704 = vpop.permute.xlu0 %703
        %s706 = sor.u32 256, 4
        %707 = vbcast.lane.b32.xlu0 %v437, %s706
        %v708 = vpop.permute.xlu0 %707
        %s710 = sor.u32 256, 12
        %711 = vbcast.lane.b32.xlu0 %v437, %s710
        %v712 = vpop.permute.xlu0 %711
        %s714 = sor.u32 256, 4
        %715 = vbcast.lane.b32.xlu0 %v448, %s714
        %v716 = vpop.permute.xlu0 %715
        %s718 = sor.u32 256, 12
        %719 = vbcast.lane.b32.xlu0 %v448, %s718
        %v720 = vpop.permute.xlu0 %719
        %s722 = sor.u32 256, 4
        %723 = vbcast.lane.b32.xlu0 %v459, %s722
        %v724 = vpop.permute.xlu0 %723
        %s726 = sor.u32 256, 12
        %727 = vbcast.lane.b32.xlu0 %v459, %s726
        %v728 = vpop.permute.xlu0 %727
        %s730 = sor.u32 256, 4
        %731 = vbcast.lane.b32.xlu0 %v470, %s730
        %v732 = vpop.permute.xlu0 %731
        %s734 = sor.u32 256, 12
        %735 = vbcast.lane.b32.xlu0 %v470, %s734
        %v736 = vpop.permute.xlu0 %735
        %s738 = sor.u32 256, 4
        %739 = vbcast.lane.b32.xlu0 %v481, %s738
        %v740 = vpop.permute.xlu0 %739
        %s742 = sor.u32 256, 12
        %743 = vbcast.lane.b32.xlu0 %v481, %s742
        %v744 = vpop.permute.xlu0 %743
        %s746 = sor.u32 256, 5
        %747 = vbcast.lane.b32.xlu0 %v404, %s746
        %v748 = vpop.permute.xlu0 %747
        %s750 = sor.u32 256, 13
        %751 = vbcast.lane.b32.xlu0 %v404, %s750
        %v752 = vpop.permute.xlu0 %751
        %s754 = sor.u32 256, 5
        %755 = vbcast.lane.b32.xlu0 %v415, %s754
        %v756 = vpop.permute.xlu0 %755
        %s758 = sor.u32 256, 13
        %759 = vbcast.lane.b32.xlu0 %v415, %s758
        %v760 = vpop.permute.xlu0 %759
        %s762 = sor.u32 256, 5
        %763 = vbcast.lane.b32.xlu0 %v426, %s762
        %v764 = vpop.permute.xlu0 %763
        %s766 = sor.u32 256, 13
        %767 = vbcast.lane.b32.xlu0 %v426, %s766
        %v768 = vpop.permute.xlu0 %767
        %s770 = sor.u32 256, 5
        %771 = vbcast.lane.b32.xlu0 %v437, %s770
        %v772 = vpop.permute.xlu0 %771
        %s774 = sor.u32 256, 13
        %775 = vbcast.lane.b32.xlu0 %v437, %s774
        %v776 = vpop.permute.xlu0 %775
        %s778 = sor.u32 256, 5
        %779 = vbcast.lane.b32.xlu0 %v448, %s778
        %v780 = vpop.permute.xlu0 %779
        %s782 = sor.u32 256, 13
        %783 = vbcast.lane.b32.xlu0 %v448, %s782
        %v784 = vpop.permute.xlu0 %783
        %s786 = sor.u32 256, 5
        %787 = vbcast.lane.b32.xlu0 %v459, %s786
        %v788 = vpop.permute.xlu0 %787
        %s790 = sor.u32 256, 13
        %791 = vbcast.lane.b32.xlu0 %v459, %s790
        %v792 = vpop.permute.xlu0 %791
        %s794 = sor.u32 256, 5
        %795 = vbcast.lane.b32.xlu0 %v470, %s794
        %v796 = vpop.permute.xlu0 %795
        %s798 = sor.u32 256, 13
        %799 = vbcast.lane.b32.xlu0 %v470, %s798
        %v800 = vpop.permute.xlu0 %799
        %s802 = sor.u32 256, 5
        %803 = vbcast.lane.b32.xlu0 %v481, %s802
        %v804 = vpop.permute.xlu0 %803
        %s806 = sor.u32 256, 13
        %807 = vbcast.lane.b32.xlu0 %v481, %s806
        %v808 = vpop.permute.xlu0 %807
        %s810 = sor.u32 256, 6
        %811 = vbcast.lane.b32.xlu0 %v404, %s810
        %v812 = vpop.permute.xlu0 %811
        %s814 = sor.u32 256, 14
        %815 = vbcast.lane.b32.xlu0 %v404, %s814
        %v816 = vpop.permute.xlu0 %815
        %s818 = sor.u32 256, 6
        %819 = vbcast.lane.b32.xlu0 %v415, %s818
        %v820 = vpop.permute.xlu0 %819
        %s822 = sor.u32 256, 14
        %823 = vbcast.lane.b32.xlu0 %v415, %s822
        %v824 = vpop.permute.xlu0 %823
        %s826 = sor.u32 256, 6
        %827 = vbcast.lane.b32.xlu0 %v426, %s826
        %v828 = vpop.permute.xlu0 %827
        %s830 = sor.u32 256, 14
        %831 = vbcast.lane.b32.xlu0 %v426, %s830
        %v832 = vpop.permute.xlu0 %831
        %s834 = sor.u32 256, 6
        %835 = vbcast.lane.b32.xlu0 %v437, %s834
        %v836 = vpop.permute.xlu0 %835
        %s838 = sor.u32 256, 14
        %839 = vbcast.lane.b32.xlu0 %v437, %s838
        %v840 = vpop.permute.xlu0 %839
        %s842 = sor.u32 256, 6
        %843 = vbcast.lane.b32.xlu0 %v448, %s842
        %v844 = vpop.permute.xlu0 %843
        %s846 = sor.u32 256, 14
        %847 = vbcast.lane.b32.xlu0 %v448, %s846
        %v848 = vpop.permute.xlu0 %847
        %s850 = sor.u32 256, 6
        %851 = vbcast.lane.b32.xlu0 %v459, %s850
        %v852 = vpop.permute.xlu0 %851
        %s854 = sor.u32 256, 14
        %855 = vbcast.lane.b32.xlu0 %v459, %s854
        %v856 = vpop.permute.xlu0 %855
        %s858 = sor.u32 256, 6
        %859 = vbcast.lane.b32.xlu0 %v470, %s858
        %v860 = vpop.permute.xlu0 %859
        %s862 = sor.u32 256, 14
        %863 = vbcast.lane.b32.xlu0 %v470, %s862
        %v864 = vpop.permute.xlu0 %863
        %s866 = sor.u32 256, 6
        %867 = vbcast.lane.b32.xlu0 %v481, %s866
        %v868 = vpop.permute.xlu0 %867
        %s870 = sor.u32 256, 14
        %871 = vbcast.lane.b32.xlu0 %v481, %s870
        %v872 = vpop.permute.xlu0 %871
        %s874 = sor.u32 256, 7
        %875 = vbcast.lane.b32.xlu0 %v404, %s874
        %v876 = vpop.permute.xlu0 %875
        %s878 = sor.u32 256, 15
        %879 = vbcast.lane.b32.xlu0 %v404, %s878
        %v880 = vpop.permute.xlu0 %879
        %s882 = sor.u32 256, 7
        %883 = vbcast.lane.b32.xlu0 %v415, %s882
        %v884 = vpop.permute.xlu0 %883
        %s886 = sor.u32 256, 15
        %887 = vbcast.lane.b32.xlu0 %v415, %s886
        %v888 = vpop.permute.xlu0 %887
        %s890 = sor.u32 256, 7
        %891 = vbcast.lane.b32.xlu0 %v426, %s890
        %v892 = vpop.permute.xlu0 %891
        %s894 = sor.u32 256, 15
        %895 = vbcast.lane.b32.xlu0 %v426, %s894
        %v896 = vpop.permute.xlu0 %895
        %s898 = sor.u32 256, 7
        %899 = vbcast.lane.b32.xlu0 %v437, %s898
        %v900 = vpop.permute.xlu0 %899
        %s902 = sor.u32 256, 15
        %903 = vbcast.lane.b32.xlu0 %v437, %s902
        %v904 = vpop.permute.xlu0 %903
        %s906 = sor.u32 256, 7
        %907 = vbcast.lane.b32.xlu0 %v448, %s906
        %v908 = vpop.permute.xlu0 %907
        %s910 = sor.u32 256, 15
        %911 = vbcast.lane.b32.xlu0 %v448, %s910
        %v912 = vpop.permute.xlu0 %911
        %s914 = sor.u32 256, 7
        %915 = vbcast.lane.b32.xlu0 %v459, %s914
        %v916 = vpop.permute.xlu0 %915
        %s918 = sor.u32 256, 15
        %919 = vbcast.lane.b32.xlu0 %v459, %s918
        %v920 = vpop.permute.xlu0 %919
        %s922 = sor.u32 256, 7
        %923 = vbcast.lane.b32.xlu0 %v470, %s922
        %v924 = vpop.permute.xlu0 %923
        %s926 = sor.u32 256, 15
        %927 = vbcast.lane.b32.xlu0 %v470, %s926
        %v928 = vpop.permute.xlu0 %927
        %s930 = sor.u32 256, 7
        %931 = vbcast.lane.b32.xlu0 %v481, %s930
        %v932 = vpop.permute.xlu0 %931
        %s934 = sor.u32 256, 15
        %935 = vbcast.lane.b32.xlu0 %v481, %s934
        %v936 = vpop.permute.xlu0 %935
        %s938 = sor.u32 256, 16
        %939 = vbcast.lane.b32.xlu0 %v404, %s938
        %v940 = vpop.permute.xlu0 %939
        %s942 = sor.u32 256, 16
        %943 = vbcast.lane.b32.xlu0 %v415, %s942
        %v944 = vpop.permute.xlu0 %943
        %s946 = sor.u32 256, 16
        %947 = vbcast.lane.b32.xlu0 %v426, %s946
        %v948 = vpop.permute.xlu0 %947
        %s950 = sor.u32 256, 16
        %951 = vbcast.lane.b32.xlu0 %v437, %s950
        %v952 = vpop.permute.xlu0 %951
        %s954 = sor.u32 256, 16
        %955 = vbcast.lane.b32.xlu0 %v448, %s954
        %v956 = vpop.permute.xlu0 %955
        %s958 = sor.u32 256, 16
        %959 = vbcast.lane.b32.xlu0 %v459, %s958
        %v960 = vpop.permute.xlu0 %959
        %s962 = sor.u32 256, 16
        %963 = vbcast.lane.b32.xlu0 %v470, %s962
        %v964 = vpop.permute.xlu0 %963
        %s966 = sor.u32 256, 16
        %967 = vbcast.lane.b32.xlu0 %v481, %s966
        %v968 = vpop.permute.xlu0 %967
        %s970 = sor.u32 256, 17
        %971 = vbcast.lane.b32.xlu0 %v404, %s970
        %v972 = vpop.permute.xlu0 %971
        %s974 = sor.u32 256, 17
        %975 = vbcast.lane.b32.xlu0 %v415, %s974
        %v976 = vpop.permute.xlu0 %975
        %s978 = sor.u32 256, 17
        %979 = vbcast.lane.b32.xlu0 %v426, %s978
        %v980 = vpop.permute.xlu0 %979
        %s982 = sor.u32 256, 17
        %983 = vbcast.lane.b32.xlu0 %v437, %s982
        %v984 = vpop.permute.xlu0 %983
        %s986 = sor.u32 256, 17
        %987 = vbcast.lane.b32.xlu0 %v448, %s986
        %v988 = vpop.permute.xlu0 %987
        %s990 = sor.u32 256, 17
        %991 = vbcast.lane.b32.xlu0 %v459, %s990
        %v992 = vpop.permute.xlu0 %991
        %s994 = sor.u32 256, 17
        %995 = vbcast.lane.b32.xlu0 %v470, %s994
        %v996 = vpop.permute.xlu0 %995
        %s998 = sor.u32 256, 17
        %999 = vbcast.lane.b32.xlu0 %v481, %s998
        %v1000 = vpop.permute.xlu0 %999
        %s1002 = sor.u32 256, 18
        %1003 = vbcast.lane.b32.xlu0 %v404, %s1002
        %v1004 = vpop.permute.xlu0 %1003
        %s1006 = sor.u32 256, 18
        %1007 = vbcast.lane.b32.xlu0 %v415, %s1006
        %v1008 = vpop.permute.xlu0 %1007
        %s1010 = sor.u32 256, 18
        %1011 = vbcast.lane.b32.xlu0 %v426, %s1010
        %v1012 = vpop.permute.xlu0 %1011
        %s1014 = sor.u32 256, 18
        %1015 = vbcast.lane.b32.xlu0 %v437, %s1014
        %v1016 = vpop.permute.xlu0 %1015
        %s1018 = sor.u32 256, 18
        %1019 = vbcast.lane.b32.xlu0 %v448, %s1018
        %v1020 = vpop.permute.xlu0 %1019
        %s1022 = sor.u32 256, 18
        %1023 = vbcast.lane.b32.xlu0 %v459, %s1022
        %v1024 = vpop.permute.xlu0 %1023
        %s1026 = sor.u32 256, 18
        %1027 = vbcast.lane.b32.xlu0 %v470, %s1026
        %v1028 = vpop.permute.xlu0 %1027
        %s1030 = sor.u32 256, 18
        %1031 = vbcast.lane.b32.xlu0 %v481, %s1030
        %v1032 = vpop.permute.xlu0 %1031
        %vm1033 = vcmask 7168
        %v1034 = vsel %vm1033, %v407, %v492
        %v1035 = vsel %vm1033, %v411, %v496
        %v1036 = vsel %vm1033, %v418, %v500
        %v1037 = vsel %vm1033, %v422, %v504
        %v1038 = vsel %vm1033, %v429, %v508
        %v1039 = vsel %vm1033, %v433, %v512
        %v1040 = vsel %vm1033, %v440, %v516
        %v1041 = vsel %vm1033, %v444, %v520
        %v1042 = vsel %vm1033, %v451, %v524
        %v1043 = vsel %vm1033, %v455, %v528
        %v1044 = vsel %vm1033, %v462, %v532
        %v1045 = vsel %vm1033, %v466, %v536
        %v1046 = vsel %vm1033, %v473, %v540
        %v1047 = vsel %vm1033, %v477, %v544
        %v1048 = vsel %vm1033, %v484, %v548
        %v1049 = vsel %vm1033, %v488, %v552
        %vm1050 = vcmask 15360
        %v1051 = vsel %vm1050, %v1034, %v556
        %v1052 = vsel %vm1050, %v1035, %v560
        %v1053 = vsel %vm1050, %v1036, %v564
        %v1054 = vsel %vm1050, %v1037, %v568
        %v1055 = vsel %vm1050, %v1038, %v572
        %v1056 = vsel %vm1050, %v1039, %v576
        %v1057 = vsel %vm1050, %v1040, %v580
        %v1058 = vsel %vm1050, %v1041, %v584
        %v1059 = vsel %vm1050, %v1042, %v588
        %v1060 = vsel %vm1050, %v1043, %v592
        %v1061 = vsel %vm1050, %v1044, %v596
        %v1062 = vsel %vm1050, %v1045, %v600
        %v1063 = vsel %vm1050, %v1046, %v604
        %v1064 = vsel %vm1050, %v1047, %v608
        %v1065 = vsel %vm1050, %v1048, %v612
        %v1066 = vsel %vm1050, %v1049, %v616
        %vm1067 = vcmask 23552
        %v1068 = vsel %vm1067, %v1051, %v620
        %v1069 = vsel %vm1067, %v1052, %v624
        %v1070 = vsel %vm1067, %v1053, %v628
        %v1071 = vsel %vm1067, %v1054, %v632
        %v1072 = vsel %vm1067, %v1055, %v636
        %v1073 = vsel %vm1067, %v1056, %v640
        %v1074 = vsel %vm1067, %v1057, %v644
        %v1075 = vsel %vm1067, %v1058, %v648
        %v1076 = vsel %vm1067, %v1059, %v652
        %v1077 = vsel %vm1067, %v1060, %v656
        %v1078 = vsel %vm1067, %v1061, %v660
        %v1079 = vsel %vm1067, %v1062, %v664
        %v1080 = vsel %vm1067, %v1063, %v668
        %v1081 = vsel %vm1067, %v1064, %v672
        %v1082 = vsel %vm1067, %v1065, %v676
        %v1083 = vsel %vm1067, %v1066, %v680
        %vm1084 = vcmask 31744
        %v1085 = vsel %vm1084, %v1068, %v684
        %v1086 = vsel %vm1084, %v1069, %v688
        %v1087 = vsel %vm1084, %v1070, %v692
        %v1088 = vsel %vm1084, %v1071, %v696
        %v1089 = vsel %vm1084, %v1072, %v700
        %v1090 = vsel %vm1084, %v1073, %v704
        %v1091 = vsel %vm1084, %v1074, %v708
        %v1092 = vsel %vm1084, %v1075, %v712
        %v1093 = vsel %vm1084, %v1076, %v716
        %v1094 = vsel %vm1084, %v1077, %v720
        %v1095 = vsel %vm1084, %v1078, %v724
        %v1096 = vsel %vm1084, %v1079, %v728
        %v1097 = vsel %vm1084, %v1080, %v732
        %v1098 = vsel %vm1084, %v1081, %v736
        %v1099 = vsel %vm1084, %v1082, %v740
        %v1100 = vsel %vm1084, %v1083, %v744
        %v1101 = vsel %vm397, %v1085, %v748
        %v1102 = vsel %vm397, %v1086, %v752
        %v1103 = vsel %vm397, %v1087, %v756
        %v1104 = vsel %vm397, %v1088, %v760
        %v1105 = vsel %vm397, %v1089, %v764
        %v1106 = vsel %vm397, %v1090, %v768
        %v1107 = vsel %vm397, %v1091, %v772
        %v1108 = vsel %vm397, %v1092, %v776
        %v1109 = vsel %vm397, %v1093, %v780
        %v1110 = vsel %vm397, %v1094, %v784
        %v1111 = vsel %vm397, %v1095, %v788
        %v1112 = vsel %vm397, %v1096, %v792
        %v1113 = vsel %vm397, %v1097, %v796
        %v1114 = vsel %vm397, %v1098, %v800
        %v1115 = vsel %vm397, %v1099, %v804
        %v1116 = vsel %vm397, %v1100, %v808
        %vm1117 = vcmask 48128
        %v1118 = vsel %vm1117, %v1101, %v812
        %v1119 = vsel %vm1117, %v1102, %v816
        %v1120 = vsel %vm1117, %v1103, %v820
        %v1121 = vsel %vm1117, %v1104, %v824
        %v1122 = vsel %vm1117, %v1105, %v828
        %v1123 = vsel %vm1117, %v1106, %v832
        %v1124 = vsel %vm1117, %v1107, %v836
        %v1125 = vsel %vm1117, %v1108, %v840
        %v1126 = vsel %vm1117, %v1109, %v844
        %v1127 = vsel %vm1117, %v1110, %v848
        %v1128 = vsel %vm1117, %v1111, %v852
        %v1129 = vsel %vm1117, %v1112, %v856
        %v1130 = vsel %vm1117, %v1113, %v860
        %v1131 = vsel %vm1117, %v1114, %v864
        %v1132 = vsel %vm1117, %v1115, %v868
        %v1133 = vsel %vm1117, %v1116, %v872
        %vm1134 = vcmask 56320
        %v1135 = vsel %vm1134, %v1118, %v876
        %v1136 = vsel %vm1134, %v1119, %v880
        %v1137 = vsel %vm1134, %v1120, %v884
        %v1138 = vsel %vm1134, %v1121, %v888
        %v1139 = vsel %vm1134, %v1122, %v892
        %v1140 = vsel %vm1134, %v1123, %v896
        %v1141 = vsel %vm1134, %v1124, %v900
        %v1142 = vsel %vm1134, %v1125, %v904
        %v1143 = vsel %vm1134, %v1126, %v908
        %v1144 = vsel %vm1134, %v1127, %v912
        %v1145 = vsel %vm1134, %v1128, %v916
        %v1146 = vsel %vm1134, %v1129, %v920
        %v1147 = vsel %vm1134, %v1130, %v924
        %v1148 = vsel %vm1134, %v1131, %v928
        %v1149 = vsel %vm1134, %v1132, %v932
        %v1150 = vsel %vm1134, %v1133, %v936
        %vm1151 = vcmask 64512
        %v1152 = vsel %vm1151, %v1135, %v411
        %v1153 = vsel %vm1151, %v1136, %v940
        %v1154 = vsel %vm1151, %v1137, %v422
        %v1155 = vsel %vm1151, %v1138, %v944
        %v1156 = vsel %vm1151, %v1139, %v433
        %v1157 = vsel %vm1151, %v1140, %v948
        %v1158 = vsel %vm1151, %v1141, %v444
        %v1159 = vsel %vm1151, %v1142, %v952
        %v1160 = vsel %vm1151, %v1143, %v455
        %v1161 = vsel %vm1151, %v1144, %v956
        %v1162 = vsel %vm1151, %v1145, %v466
        %v1163 = vsel %vm1151, %v1146, %v960
        %v1164 = vsel %vm1151, %v1147, %v477
        %v1165 = vsel %vm1151, %v1148, %v964
        %v1166 = vsel %vm1151, %v1149, %v488
        %v1167 = vsel %vm1151, %v1150, %v968
        %vm1168 = vcmask 72704
        %v1169 = vsel %vm1168, %v1152, %v496
        %v1170 = vsel %vm1168, %v1153, %v972
        %v1171 = vsel %vm1168, %v1154, %v504
        %v1172 = vsel %vm1168, %v1155, %v976
        %v1173 = vsel %vm1168, %v1156, %v512
        %v1174 = vsel %vm1168, %v1157, %v980
        %v1175 = vsel %vm1168, %v1158, %v520
        %v1176 = vsel %vm1168, %v1159, %v984
        %v1177 = vsel %vm1168, %v1160, %v528
        %v1178 = vsel %vm1168, %v1161, %v988
        %v1179 = vsel %vm1168, %v1162, %v536
        %v1180 = vsel %vm1168, %v1163, %v992
        %v1181 = vsel %vm1168, %v1164, %v544
        %v1182 = vsel %vm1168, %v1165, %v996
        %v1183 = vsel %vm1168, %v1166, %v552
        %v1184 = vsel %vm1168, %v1167, %v1000
        %vm1185 = vcmask 80896
        %v1186 = vsel %vm1185, %v1169, %v560
        %v1187 = vsel %vm1185, %v1170, %v1004
        %v1188 = vsel %vm1185, %v1171, %v568
        %v1189 = vsel %vm1185, %v1172, %v1008
        %v1190 = vsel %vm1185, %v1173, %v576
        %v1191 = vsel %vm1185, %v1174, %v1012
        %v1192 = vsel %vm1185, %v1175, %v584
        %v1193 = vsel %vm1185, %v1176, %v1016
        %v1194 = vsel %vm1185, %v1177, %v592
        %v1195 = vsel %vm1185, %v1178, %v1020
        %v1196 = vsel %vm1185, %v1179, %v600
        %v1197 = vsel %vm1185, %v1180, %v1024
        %v1198 = vsel %vm1185, %v1181, %v608
        %v1199 = vsel %vm1185, %v1182, %v1028
        %v1200 = vsel %vm1185, %v1183, %v616
        %v1201 = vsel %vm1185, %v1184, %v1032
        %vm1202 = vcmask 89088
        %v1203 = vsel %vm1202, %v1186, 0.0
        %v1204 = vsel %vm1202, %v1187, 0.0
        %v1205 = vsel %vm1202, %v1188, 0.0
        %v1206 = vsel %vm1202, %v1189, 0.0
        %v1207 = vsel %vm1202, %v1190, 0.0
        %v1208 = vsel %vm1202, %v1191, 0.0
        %v1209 = vsel %vm1202, %v1192, 0.0
        %v1210 = vsel %vm1202, %v1193, 0.0
        %v1211 = vsel %vm1202, %v1194, 0.0
        %v1212 = vsel %vm1202, %v1195, 0.0
        %v1213 = vsel %vm1202, %v1196, 0.0
        %v1214 = vsel %vm1202, %v1197, 0.0
        %v1215 = vsel %vm1202, %v1198, 0.0
        %v1216 = vsel %vm1202, %v1199, 0.0
        %v1217 = vsel %vm1202, %v1200, 0.0
        %v1218 = vsel %vm1202, %v1201, 0.0
        %v1219 = vld [vmem:[#allocation5] sm:$0xff]
        %v1220 = vld [vmem:[#allocation5 + $0x8] sm:$0xff]
        %v1221 = vld [vmem:[%s2] sm:$0x1]
        %v1223 = vlaneseq
        %v1224 = vshrl.u32 %v1223, 7
        %v1225 = vsub.s32 0, %v1224
        %v1226 = vrot.slane %v1221, %v1225
        %vm1228 = vcmask 130048
        %v1230 = vsel %vm1228, %v1203, 0
        %v1233 = vsel %vm1228, %v1204, 0
        %v1236 = vsel %vm1228, %v1205, 0
        %v1239 = vsel %vm1228, %v1206, 0
        %v1242 = vsel %vm1228, %v1207, 0
        %v1245 = vsel %vm1228, %v1208, 0
        %v1248 = vsel %vm1228, %v1209, 0
        %v1251 = vsel %vm1228, %v1210, 0
        %v1254 = vsel %vm1228, %v1211, 0
        %v1257 = vsel %vm1228, %v1212, 0
        %v1260 = vsel %vm1228, %v1213, 0
        %v1263 = vsel %vm1228, %v1214, 0
        %v1266 = vsel %vm1228, %v1215, 0
        %v1269 = vsel %vm1228, %v1216, 0
        %v1272 = vsel %vm1228, %v1217, 0
        %v1275 = vsel %vm1228, %v1218, 0
        %1277 = vmatprep.subr.mxu0 0.0
        %1278 = vmatpush1.msra.mxu0 0.0
        %1279 = vmatprep.subr.mxu0 0.0
        %1280 = vmatpush1.msra.mxu0 0.0
        %1281 = vmatprep.subr.mxu0 0.0
        %1282 = vmatpush1.msra.mxu0 0.0
        %1283 = vmatprep.subr.mxu0 0.0
        %1284 = vmatpush1.msra.mxu0 0.0
        %1285 = vmatprep.subr.mxu0 0.0
        %1286 = vmatpush1.msra.mxu0 0.0
        %1287 = vmatprep.subr.mxu0 0.0
        %1288 = vmatpush1.msra.mxu0 0.0
        %1289 = vmatprep.subr.mxu0 0.0
        %1290 = vmatpush1.msra.mxu0 0.0
        %1291 = vmatprep.subr.mxu0 0.0
        %1292 = vmatpush1.msra.mxu0 0.0
        %1293 = vmatprep.subr.mxu0 0.0
        %1294 = vmatpush1.msra.mxu0 0.0
        %1295 = vmatprep.subr.mxu0 0.0
        %1296 = vmatpush1.msra.mxu0 0.0
        %1297 = vmatprep.subr.mxu0 0.0
        %1298 = vmatpush1.msra.mxu0 0.0
        %1299 = vmatprep.subr.mxu0 0.0
        %1300 = vmatpush1.msra.mxu0 0.0
        %1301 = vmatprep.subr.mxu0 0.0
        %1302 = vmatpush1.msra.mxu0 0.0
        %1303 = vmatprep.subr.mxu0 0.0
        %1304 = vmatpush1.msra.mxu0 0.0
        %1305 = vmatprep.subr.mxu0 0.0
        %1306 = vmatpush1.msra.mxu0 %v1220
        %1307 = vmatprep.subr.mxu0 0.0
        %1308 = vmatpush1.msra.mxu0 %v1219
        %1309 = vmatprep.subr.mxu0 0.0
        %1310 = vmatpush2.msra.mxu0 0.0
        %1311 = vmatprep.subr.mxu0 0.0
        %1312 = vmatpush2.msra.mxu0 0.0
        %1313 = vmatprep.subr.mxu0 0.0
        %1314 = vmatpush2.msra.mxu0 0.0
        %1315 = vmatprep.subr.mxu0 0.0
        %1316 = vmatpush2.msra.mxu0 0.0
        %1317 = vmatprep.subr.mxu0 0.0
        %1318 = vmatpush2.msra.mxu0 0.0
        %1319 = vmatprep.subr.mxu0 0.0
        %1320 = vmatpush2.msra.mxu0 0.0
        %1321 = vmatprep.subr.mxu0 0.0
        %1322 = vmatpush2.msra.mxu0 0.0
        %1323 = vmatprep.subr.mxu0 0.0
        %1324 = vmatpush2.msra.mxu0 0.0
        %1325 = vmatprep.subr.mxu0 0.0
        %1326 = vmatpush2.msra.mxu0 0.0
        %1327 = vmatprep.subr.mxu0 0.0
        %1328 = vmatpush2.msra.mxu0 0.0
        %1329 = vmatprep.subr.mxu0 0.0
        %1330 = vmatpush2.msra.mxu0 0.0
        %1331 = vmatprep.subr.mxu0 0.0
        %1332 = vmatpush2.msra.mxu0 0.0
        %1333 = vmatprep.subr.mxu0 0.0
        %1334 = vmatpush2.msra.mxu0 0.0
        %1335 = vmatprep.subr.mxu0 0.0
        %1336 = vmatpush2.msra.mxu0 0.0
        %1337 = vmatprep.subr.mxu0 0.0
        %1338 = vmatpush2.msra.mxu0 0.0
        %1339 = vmatprep.subr.mxu0 0.0
        %1340 = vmatpush2.msra.mxu0 0.0
        %1341 = vmatprep.mubr.f32.mxu0 0.0
        %1342 = vmatmul.mubr.f32.gmra.mxu0 %v1230
        %v1343 = vpop.f32.mrf.mxu0
        %v1344 = vadd.f32 %v1226, %v1343
        %v1345 = vpop.f32.mrf.mxu0
        %1346 = vmatprep.mubr.f32.mxu0 0.0
        %1347 = vmatmul.mubr.f32.gmra.mxu0 %v1233
        %v1348 = vpop.f32.mrf.mxu0
        %v1349 = vadd.f32 %v1226, %v1348
        %v1350 = vpop.f32.mrf.mxu0
        %1351 = vmatprep.mubr.f32.mxu0 0.0
        %1352 = vmatmul.mubr.f32.gmra.mxu0 %v1236
        %v1353 = vpop.f32.mrf.mxu0
        %v1354 = vadd.f32 %v1226, %v1353
        %v1355 = vpop.f32.mrf.mxu0
        %1356 = vmatprep.mubr.f32.mxu0 0.0
        %1357 = vmatmul.mubr.f32.gmra.mxu0 %v1239
        %v1358 = vpop.f32.mrf.mxu0
        %v1359 = vadd.f32 %v1226, %v1358
        %v1360 = vpop.f32.mrf.mxu0
        %1361 = vmatprep.mubr.f32.mxu0 0.0
        %1362 = vmatmul.mubr.f32.gmra.mxu0 %v1242
        %v1363 = vpop.f32.mrf.mxu0
        %v1364 = vadd.f32 %v1226, %v1363
        %v1365 = vpop.f32.mrf.mxu0
        %1366 = vmatprep.mubr.f32.mxu0 0.0
        %1367 = vmatmul.mubr.f32.gmra.mxu0 %v1245
        %v1368 = vpop.f32.mrf.mxu0
        %v1369 = vadd.f32 %v1226, %v1368
        %v1370 = vpop.f32.mrf.mxu0
        %1371 = vmatprep.mubr.f32.mxu0 0.0
        %1372 = vmatmul.mubr.f32.gmra.mxu0 %v1248
        %v1373 = vpop.f32.mrf.mxu0
        %v1374 = vadd.f32 %v1226, %v1373
        %v1375 = vpop.f32.mrf.mxu0
        %1376 = vmatprep.mubr.f32.mxu0 0.0
        %1377 = vmatmul.mubr.f32.gmra.mxu0 %v1251
        %v1378 = vpop.f32.mrf.mxu0
        %v1379 = vadd.f32 %v1226, %v1378
        %v1380 = vpop.f32.mrf.mxu0
        %1381 = vmatprep.mubr.f32.mxu0 0.0
        %1382 = vmatmul.mubr.f32.gmra.mxu0 %v1254
        %v1383 = vpop.f32.mrf.mxu0
        %v1384 = vadd.f32 %v1226, %v1383
        %v1385 = vpop.f32.mrf.mxu0
        %1386 = vmatprep.mubr.f32.mxu0 0.0
        %1387 = vmatmul.mubr.f32.gmra.mxu0 %v1257
        %v1388 = vpop.f32.mrf.mxu0
        %v1389 = vadd.f32 %v1226, %v1388
        %v1390 = vpop.f32.mrf.mxu0
        %1391 = vmatprep.mubr.f32.mxu0 0.0
        %1392 = vmatmul.mubr.f32.gmra.mxu0 %v1260
        %v1393 = vpop.f32.mrf.mxu0
        %v1394 = vadd.f32 %v1226, %v1393
        %v1395 = vpop.f32.mrf.mxu0
        %1396 = vmatprep.mubr.f32.mxu0 0.0
        %1397 = vmatmul.mubr.f32.gmra.mxu0 %v1263
        %v1398 = vpop.f32.mrf.mxu0
        %v1399 = vadd.f32 %v1226, %v1398
        %v1400 = vpop.f32.mrf.mxu0
        %1401 = vmatprep.mubr.f32.mxu0 0.0
        %1402 = vmatmul.mubr.f32.gmra.mxu0 %v1266
        %v1403 = vpop.f32.mrf.mxu0
        %v1404 = vadd.f32 %v1226, %v1403
        %v1405 = vpop.f32.mrf.mxu0
        %1406 = vmatprep.mubr.f32.mxu0 0.0
        %1407 = vmatmul.mubr.f32.gmra.mxu0 %v1269
        %v1408 = vpop.f32.mrf.mxu0
        %v1409 = vadd.f32 %v1226, %v1408
        %v1410 = vpop.f32.mrf.mxu0
        %1411 = vmatprep.mubr.f32.mxu0 0.0
        %1412 = vmatmul.mubr.f32.gmra.mxu0 %v1272
        %v1413 = vpop.f32.mrf.mxu0
        %v1414 = vadd.f32 %v1226, %v1413
        %v1415 = vpop.f32.mrf.mxu0
        %1416 = vmatprep.mubr.f32.mxu0 0.0
        %1417 = vmatmul.mubr.f32.gmra.mxu0 %v1275
        %v1418 = vpop.f32.mrf.mxu0
        %v1419 = vadd.f32 %v1226, %v1418
        %v1420 = vpop.f32.mrf.mxu0
        %1421 = vdwg.mxu0
        %v1422 = vmax.f32 %v1344, 0.0
        %v1423 = vmax.f32 %v1349, 0.0
        %v1424 = vmax.f32 %v1354, 0.0
        %v1425 = vmax.f32 %v1359, 0.0
        %v1426 = vmax.f32 %v1364, 0.0
        %v1427 = vmax.f32 %v1369, 0.0
        %v1428 = vmax.f32 %v1374, 0.0
        %v1429 = vmax.f32 %v1379, 0.0
        %v1430 = vmax.f32 %v1384, 0.0
        %v1431 = vmax.f32 %v1389, 0.0
        %v1432 = vmax.f32 %v1394, 0.0
        %v1433 = vmax.f32 %v1399, 0.0
        %v1434 = vmax.f32 %v1404, 0.0
        %v1435 = vmax.f32 %v1409, 0.0
        %v1436 = vmax.f32 %v1414, 0.0
        %v1437 = vmax.f32 %v1419, 0.0
        %vm1454 = vcmask 1044480
        %v1455 = vrot.slane %v1422, 3
        %v1456 = vrot.slane %v1423, 3
        %v1457 = vsel %vm1454, %v1455, %v1456
        %v1458 = vrot.slane %v1424, 3
        %v1459 = vrot.slane %v1425, 3
        %v1460 = vsel %vm1454, %v1458, %v1459
        %v1461 = vrot.slane %v1426, 3
        %v1462 = vrot.slane %v1427, 3
        %v1463 = vsel %vm1454, %v1461, %v1462
        %v1464 = vrot.slane %v1428, 3
        %v1465 = vrot.slane %v1429, 3
        %v1466 = vsel %vm1454, %v1464, %v1465
        %v1467 = vrot.slane %v1430, 3
        %v1468 = vrot.slane %v1431, 3
        %v1469 = vsel %vm1454, %v1467, %v1468
        %v1470 = vrot.slane %v1432, 3
        %v1471 = vrot.slane %v1433, 3
        %v1472 = vsel %vm1454, %v1470, %v1471
        %v1473 = vrot.slane %v1434, 3
        %v1474 = vrot.slane %v1435, 3
        %v1475 = vsel %vm1454, %v1473, %v1474
        %v1476 = vrot.slane %v1436, 3
        %v1477 = vrot.slane %v1437, 3
        %v1478 = vsel %vm1454, %v1476, %v1477
        %v1495 = vsel %vm1454, 0.0, %v1455
        %v1496 = vsel %vm1454, 0.0, %v1458
        %v1497 = vsel %vm1454, 0.0, %v1461
        %v1498 = vsel %vm1454, 0.0, %v1464
        %v1499 = vsel %vm1454, 0.0, %v1467
        %v1500 = vsel %vm1454, 0.0, %v1470
        %v1501 = vsel %vm1454, 0.0, %v1473
        %v1502 = vsel %vm1454, 0.0, %v1476
        %v1503 = vsel %vm1454, %v1456, 0.0
        %v1504 = vsel %vm1454, %v1459, 0.0
        %v1505 = vsel %vm1454, %v1462, 0.0
        %v1506 = vsel %vm1454, %v1465, 0.0
        %v1507 = vsel %vm1454, %v1468, 0.0
        %v1508 = vsel %vm1454, %v1471, 0.0
        %v1509 = vsel %vm1454, %v1474, 0.0
        %v1510 = vsel %vm1454, %v1477, 0.0
        %v1511 = vld [vmem:[#allocation7] sm:$0xff]
        %v1512 = vld [vmem:[#allocation7 + $0x8] sm:$0xff]
        %v1513 = vld [vmem:[#allocation7 + $0x10] sm:$0xff]
        %v1514 = vld [vmem:[#allocation7 + $0x18] sm:$0xff]
        %vm1531 = vcmask 1046528
        %v1532 = vrot.slane %v1495, 1
        %v1533 = vrot.slane %v1457, 1
        %v1534 = vsel %vm1531, %v1532, %v1533
        %v1535 = vrot.slane %v1503, 1
        %v1536 = vsel %vm1531, %v1533, %v1535
        %v1537 = vrot.slane %v1496, 1
        %v1538 = vrot.slane %v1460, 1
        %v1539 = vsel %vm1531, %v1537, %v1538
        %v1540 = vrot.slane %v1504, 1
        %v1541 = vsel %vm1531, %v1538, %v1540
        %v1542 = vrot.slane %v1497, 1
        %v1543 = vrot.slane %v1463, 1
        %v1544 = vsel %vm1531, %v1542, %v1543
        %v1545 = vrot.slane %v1505, 1
        %v1546 = vsel %vm1531, %v1543, %v1545
        %v1547 = vrot.slane %v1498, 1
        %v1548 = vrot.slane %v1466, 1
        %v1549 = vsel %vm1531, %v1547, %v1548
        %v1550 = vrot.slane %v1506, 1
        %v1551 = vsel %vm1531, %v1548, %v1550
        %v1552 = vrot.slane %v1499, 1
        %v1553 = vrot.slane %v1469, 1
        %v1554 = vsel %vm1531, %v1552, %v1553
        %v1555 = vrot.slane %v1507, 1
        %v1556 = vsel %vm1531, %v1553, %v1555
        %v1557 = vrot.slane %v1500, 1
        %v1558 = vrot.slane %v1472, 1
        %v1559 = vsel %vm1531, %v1557, %v1558
        %v1560 = vrot.slane %v1508, 1
        %v1561 = vsel %vm1531, %v1558, %v1560
        %v1562 = vrot.slane %v1501, 1
        %v1563 = vrot.slane %v1475, 1
        %v1564 = vsel %vm1531, %v1562, %v1563
        %v1565 = vrot.slane %v1509, 1
        %v1566 = vsel %vm1531, %v1563, %v1565
        %v1567 = vrot.slane %v1502, 1
        %v1568 = vrot.slane %v1478, 1
        %v1569 = vsel %vm1531, %v1567, %v1568
        %v1570 = vrot.slane %v1510, 1
        %v1571 = vsel %vm1531, %v1568, %v1570
        %s1572 = scalar_lea.vmem [#allocation7], 32
        %v1573 = vld [vmem:[%s1572] sm:$0xff]
        %v1574 = vld [vmem:[%s1572 + $0x8] sm:$0xff]
        %v1575 = vld [vmem:[%s1572 + $0x10] sm:$0xff]
        %v1576 = vld [vmem:[%s1572 + $0x18] sm:$0xff]
        %vm1577 = vcmask 261120
        %v1578 = vsel %vm1577, %v1534, 0
        %v1580 = vsel %vm1577, %v1536, 0
        %v1582 = vsel %vm1577, %v1539, 0
        %v1584 = vsel %vm1577, %v1541, 0
        %v1586 = vsel %vm1577, %v1544, 0
        %v1588 = vsel %vm1577, %v1546, 0
        %v1590 = vsel %vm1577, %v1549, 0
        %v1592 = vsel %vm1577, %v1551, 0
        %v1594 = vsel %vm1577, %v1554, 0
        %v1596 = vsel %vm1577, %v1556, 0
        %v1598 = vsel %vm1577, %v1559, 0
        %v1600 = vsel %vm1577, %v1561, 0
        %v1602 = vsel %vm1577, %v1564, 0
        %v1604 = vsel %vm1577, %v1566, 0
        %v1606 = vsel %vm1577, %v1569, 0
        %v1608 = vsel %vm1577, %v1571, 0
        %1610 = vmatprep.subr.mxu0 0.0
        %1611 = vmatpush1.msra.mxu0 0.0
        %1612 = vmatprep.subr.mxu0 0.0
        %1613 = vmatpush1.msra.mxu0 0.0
        %1614 = vmatprep.subr.mxu0 0.0
        %1615 = vmatpush1.msra.mxu0 0.0
        %1616 = vmatprep.subr.mxu0 0.0
        %1617 = vmatpush1.msra.mxu0 0.0
        %1618 = vmatprep.subr.mxu0 0.0
        %1619 = vmatpush1.msra.mxu0 0.0
        %1620 = vmatprep.subr.mxu0 0.0
        %1621 = vmatpush1.msra.mxu0 0.0
        %1622 = vmatprep.subr.mxu0 0.0
        %1623 = vmatpush1.msra.mxu0 0.0
        %1624 = vmatprep.subr.mxu0 0.0
        %1625 = vmatpush1.msra.mxu0 0.0
        %1626 = vmatprep.subr.mxu0 0.0
        %1627 = vmatpush1.msra.mxu0 0.0
        %1628 = vmatprep.subr.mxu0 0.0
        %1629 = vmatpush1.msra.mxu0 0.0
        %1630 = vmatprep.subr.mxu0 0.0
        %1631 = vmatpush1.msra.mxu0 0.0
        %1632 = vmatprep.subr.mxu0 0.0
        %1633 = vmatpush1.msra.mxu0 0.0
        %1634 = vmatprep.subr.mxu0 0.0
        %1635 = vmatpush1.msra.mxu0 %v1576
        %1636 = vmatprep.subr.mxu0 0.0
        %1637 = vmatpush1.msra.mxu0 %v1575
        %1638 = vmatprep.subr.mxu0 0.0
        %1639 = vmatpush1.msra.mxu0 %v1574
        %1640 = vmatprep.subr.mxu0 0.0
        %1641 = vmatpush1.msra.mxu0 %v1573
        %1642 = vmatprep.subr.mxu0 0.0
        %1643 = vmatpush2.msra.mxu0 0.0
        %1644 = vmatprep.subr.mxu0 0.0
        %1645 = vmatpush2.msra.mxu0 0.0
        %1646 = vmatprep.subr.mxu0 0.0
        %1647 = vmatpush2.msra.mxu0 0.0
        %1648 = vmatprep.subr.mxu0 0.0
        %1649 = vmatpush2.msra.mxu0 0.0
        %1650 = vmatprep.subr.mxu0 0.0
        %1651 = vmatpush2.msra.mxu0 0.0
        %1652 = vmatprep.subr.mxu0 0.0
        %1653 = vmatpush2.msra.mxu0 0.0
        %1654 = vmatprep.subr.mxu0 0.0
        %1655 = vmatpush2.msra.mxu0 0.0
        %1656 = vmatprep.subr.mxu0 0.0
        %1657 = vmatpush2.msra.mxu0 0.0
        %1658 = vmatprep.subr.mxu0 0.0
        %1659 = vmatpush2.msra.mxu0 0.0
        %1660 = vmatprep.subr.mxu0 0.0
        %1661 = vmatpush2.msra.mxu0 0.0
        %1662 = vmatprep.subr.mxu0 0.0
        %1663 = vmatpush2.msra.mxu0 0.0
        %1664 = vmatprep.subr.mxu0 0.0
        %1665 = vmatpush2.msra.mxu0 0.0
        %1666 = vmatprep.subr.mxu0 0.0
        %1667 = vmatpush2.msra.mxu0 0.0
        %1668 = vmatprep.subr.mxu0 0.0
        %1669 = vmatpush2.msra.mxu0 0.0
        %1670 = vmatprep.subr.mxu0 0.0
        %1671 = vmatpush2.msra.mxu0 0.0
        %1672 = vmatprep.subr.mxu0 0.0
        %1673 = vmatpush2.msra.mxu0 0.0
        %1674 = vmatprep.mubr.f32.mxu0 0.0
        %1675 = vmatmul.mubr.f32.gmra.mxu0 %v1578
        %v1676 = vpop.f32.mrf.mxu0
        %v1677 = vadd.f32 0.0, %v1676
        %v1678 = vpop.f32.mrf.mxu0
        %1679 = vmatprep.mubr.f32.mxu0 0.0
        %1680 = vmatmul.mubr.f32.gmra.mxu0 %v1580
        %v1681 = vpop.f32.mrf.mxu0
        %v1682 = vadd.f32 0.0, %v1681
        %v1683 = vpop.f32.mrf.mxu0
        %1684 = vmatprep.mubr.f32.mxu0 0.0
        %1685 = vmatmul.mubr.f32.gmra.mxu0 %v1582
        %v1686 = vpop.f32.mrf.mxu0
        %v1687 = vadd.f32 0.0, %v1686
        %v1688 = vpop.f32.mrf.mxu0
        %1689 = vmatprep.mubr.f32.mxu0 0.0
        %1690 = vmatmul.mubr.f32.gmra.mxu0 %v1584
        %v1691 = vpop.f32.mrf.mxu0
        %v1692 = vadd.f32 0.0, %v1691
        %v1693 = vpop.f32.mrf.mxu0
        %1694 = vmatprep.mubr.f32.mxu0 0.0
        %1695 = vmatmul.mubr.f32.gmra.mxu0 %v1586
        %v1696 = vpop.f32.mrf.mxu0
        %v1697 = vadd.f32 0.0, %v1696
        %v1698 = vpop.f32.mrf.mxu0
        %1699 = vmatprep.mubr.f32.mxu0 0.0
        %1700 = vmatmul.mubr.f32.gmra.mxu0 %v1588
        %v1701 = vpop.f32.mrf.mxu0
        %v1702 = vadd.f32 0.0, %v1701
        %v1703 = vpop.f32.mrf.mxu0
        %1704 = vmatprep.mubr.f32.mxu0 0.0
        %1705 = vmatmul.mubr.f32.gmra.mxu0 %v1590
        %v1706 = vpop.f32.mrf.mxu0
        %v1707 = vadd.f32 0.0, %v1706
        %v1708 = vpop.f32.mrf.mxu0
        %1709 = vmatprep.mubr.f32.mxu0 0.0
        %1710 = vmatmul.mubr.f32.gmra.mxu0 %v1592
        %v1711 = vpop.f32.mrf.mxu0
        %v1712 = vadd.f32 0.0, %v1711
        %v1713 = vpop.f32.mrf.mxu0
        %1714 = vmatprep.mubr.f32.mxu0 0.0
        %1715 = vmatmul.mubr.f32.gmra.mxu0 %v1594
        %v1716 = vpop.f32.mrf.mxu0
        %v1717 = vadd.f32 0.0, %v1716
        %v1718 = vpop.f32.mrf.mxu0
        %1719 = vmatprep.mubr.f32.mxu0 0.0
        %1720 = vmatmul.mubr.f32.gmra.mxu0 %v1596
        %v1721 = vpop.f32.mrf.mxu0
        %v1722 = vadd.f32 0.0, %v1721
        %v1723 = vpop.f32.mrf.mxu0
        %1724 = vmatprep.mubr.f32.mxu0 0.0
        %1725 = vmatmul.mubr.f32.gmra.mxu0 %v1598
        %v1726 = vpop.f32.mrf.mxu0
        %v1727 = vadd.f32 0.0, %v1726
        %v1728 = vpop.f32.mrf.mxu0
        %1729 = vmatprep.mubr.f32.mxu0 0.0
        %1730 = vmatmul.mubr.f32.gmra.mxu0 %v1600
        %v1731 = vpop.f32.mrf.mxu0
        %v1732 = vadd.f32 0.0, %v1731
        %v1733 = vpop.f32.mrf.mxu0
        %1734 = vmatprep.mubr.f32.mxu0 0.0
        %1735 = vmatmul.mubr.f32.gmra.mxu0 %v1602
        %v1736 = vpop.f32.mrf.mxu0
        %v1737 = vadd.f32 0.0, %v1736
        %v1738 = vpop.f32.mrf.mxu0
        %1739 = vmatprep.mubr.f32.mxu0 0.0
        %1740 = vmatmul.mubr.f32.gmra.mxu0 %v1604
        %v1741 = vpop.f32.mrf.mxu0
        %v1742 = vadd.f32 0.0, %v1741
        %v1743 = vpop.f32.mrf.mxu0
        %1744 = vmatprep.mubr.f32.mxu0 0.0
        %1745 = vmatmul.mubr.f32.gmra.mxu0 %v1606
        %v1746 = vpop.f32.mrf.mxu0
        %v1747 = vadd.f32 0.0, %v1746
        %v1748 = vpop.f32.mrf.mxu0
        %1749 = vmatprep.mubr.f32.mxu0 0.0
        %1750 = vmatmul.mubr.f32.gmra.mxu0 %v1608
        %v1751 = vpop.f32.mrf.mxu0
        %v1752 = vadd.f32 0.0, %v1751
        %v1753 = vpop.f32.mrf.mxu0
        %1754 = vdwg.mxu0
        %v1755 = vsel %vm1577, %v1495, 0
        %v1757 = vsel %vm1577, %v1457, 0
        %v1759 = vsel %vm1577, %v1496, 0
        %v1761 = vsel %vm1577, %v1460, 0
        %v1763 = vsel %vm1577, %v1497, 0
        %v1765 = vsel %vm1577, %v1463, 0
        %v1767 = vsel %vm1577, %v1498, 0
        %v1769 = vsel %vm1577, %v1466, 0
        %v1771 = vsel %vm1577, %v1499, 0
        %v1773 = vsel %vm1577, %v1469, 0
        %v1775 = vsel %vm1577, %v1500, 0
        %v1777 = vsel %vm1577, %v1472, 0
        %v1779 = vsel %vm1577, %v1501, 0
        %v1781 = vsel %vm1577, %v1475, 0
        %v1783 = vsel %vm1577, %v1502, 0
        %v1785 = vsel %vm1577, %v1478, 0
        %1787 = vmatprep.subr.mxu0 0.0
        %1788 = vmatpush1.msra.mxu0 0.0
        %1789 = vmatprep.subr.mxu0 0.0
        %1790 = vmatpush1.msra.mxu0 0.0
        %1791 = vmatprep.subr.mxu0 0.0
        %1792 = vmatpush1.msra.mxu0 0.0
        %1793 = vmatprep.subr.mxu0 0.0
        %1794 = vmatpush1.msra.mxu0 0.0
        %1795 = vmatprep.subr.mxu0 0.0
        %1796 = vmatpush1.msra.mxu0 0.0
        %1797 = vmatprep.subr.mxu0 0.0
        %1798 = vmatpush1.msra.mxu0 0.0
        %1799 = vmatprep.subr.mxu0 0.0
        %1800 = vmatpush1.msra.mxu0 0.0
        %1801 = vmatprep.subr.mxu0 0.0
        %1802 = vmatpush1.msra.mxu0 0.0
        %1803 = vmatprep.subr.mxu0 0.0
        %1804 = vmatpush1.msra.mxu0 0.0
        %1805 = vmatprep.subr.mxu0 0.0
        %1806 = vmatpush1.msra.mxu0 0.0
        %1807 = vmatprep.subr.mxu0 0.0
        %1808 = vmatpush1.msra.mxu0 0.0
        %1809 = vmatprep.subr.mxu0 0.0
        %1810 = vmatpush1.msra.mxu0 0.0
        %1811 = vmatprep.subr.mxu0 0.0
        %1812 = vmatpush1.msra.mxu0 %v1514
        %1813 = vmatprep.subr.mxu0 0.0
        %1814 = vmatpush1.msra.mxu0 %v1513
        %1815 = vmatprep.subr.mxu0 0.0
        %1816 = vmatpush1.msra.mxu0 %v1512
        %1817 = vmatprep.subr.mxu0 0.0
        %1818 = vmatpush1.msra.mxu0 %v1511
        %1819 = vmatprep.subr.mxu0 0.0
        %1820 = vmatpush2.msra.mxu0 0.0
        %1821 = vmatprep.subr.mxu0 0.0
        %1822 = vmatpush2.msra.mxu0 0.0
        %1823 = vmatprep.subr.mxu0 0.0
        %1824 = vmatpush2.msra.mxu0 0.0
        %1825 = vmatprep.subr.mxu0 0.0
        %1826 = vmatpush2.msra.mxu0 0.0
        %1827 = vmatprep.subr.mxu0 0.0
        %1828 = vmatpush2.msra.mxu0 0.0
        %1829 = vmatprep.subr.mxu0 0.0
        %1830 = vmatpush2.msra.mxu0 0.0
        %1831 = vmatprep.subr.mxu0 0.0
        %1832 = vmatpush2.msra.mxu0 0.0
        %1833 = vmatprep.subr.mxu0 0.0
        %1834 = vmatpush2.msra.mxu0 0.0
        %1835 = vmatprep.subr.mxu0 0.0
        %1836 = vmatpush2.msra.mxu0 0.0
        %1837 = vmatprep.subr.mxu0 0.0
        %1838 = vmatpush2.msra.mxu0 0.0
        %1839 = vmatprep.subr.mxu0 0.0
        %1840 = vmatpush2.msra.mxu0 0.0
        %1841 = vmatprep.subr.mxu0 0.0
        %1842 = vmatpush2.msra.mxu0 0.0
        %1843 = vmatprep.subr.mxu0 0.0
        %1844 = vmatpush2.msra.mxu0 0.0
        %1845 = vmatprep.subr.mxu0 0.0
        %1846 = vmatpush2.msra.mxu0 0.0
        %1847 = vmatprep.subr.mxu0 0.0
        %1848 = vmatpush2.msra.mxu0 0.0
        %1849 = vmatprep.subr.mxu0 0.0
        %1850 = vmatpush2.msra.mxu0 0.0
        %1851 = vmatprep.mubr.f32.mxu0 0.0
        %1852 = vmatmul.mubr.f32.gmra.mxu0 %v1755
        %v1853 = vpop.f32.mrf.mxu0
        %v1854 = vadd.f32 %v1677, %v1853
        %v1855 = vpop.f32.mrf.mxu0
        %1856 = vmatprep.mubr.f32.mxu0 0.0
        %1857 = vmatmul.mubr.f32.gmra.mxu0 %v1757
        %v1858 = vpop.f32.mrf.mxu0
        %v1859 = vadd.f32 %v1682, %v1858
        %v1860 = vpop.f32.mrf.mxu0
        %1861 = vmatprep.mubr.f32.mxu0 0.0
        %1862 = vmatmul.mubr.f32.gmra.mxu0 %v1759
        %v1863 = vpop.f32.mrf.mxu0
        %v1864 = vadd.f32 %v1687, %v1863
        %v1865 = vpop.f32.mrf.mxu0
        %1866 = vmatprep.mubr.f32.mxu0 0.0
        %1867 = vmatmul.mubr.f32.gmra.mxu0 %v1761
        %v1868 = vpop.f32.mrf.mxu0
        %v1869 = vadd.f32 %v1692, %v1868
        %v1870 = vpop.f32.mrf.mxu0
        %1871 = vmatprep.mubr.f32.mxu0 0.0
        %1872 = vmatmul.mubr.f32.gmra.mxu0 %v1763
        %v1873 = vpop.f32.mrf.mxu0
        %v1874 = vadd.f32 %v1697, %v1873
        %v1875 = vpop.f32.mrf.mxu0
        %1876 = vmatprep.mubr.f32.mxu0 0.0
        %1877 = vmatmul.mubr.f32.gmra.mxu0 %v1765
        %v1878 = vpop.f32.mrf.mxu0
        %v1879 = vadd.f32 %v1702, %v1878
        %v1880 = vpop.f32.mrf.mxu0
        %1881 = vmatprep.mubr.f32.mxu0 0.0
        %1882 = vmatmul.mubr.f32.gmra.mxu0 %v1767
        %v1883 = vpop.f32.mrf.mxu0
        %v1884 = vadd.f32 %v1707, %v1883
        %v1885 = vpop.f32.mrf.mxu0
        %1886 = vmatprep.mubr.f32.mxu0 0.0
        %1887 = vmatmul.mubr.f32.gmra.mxu0 %v1769
        %v1888 = vpop.f32.mrf.mxu0
        %v1889 = vadd.f32 %v1712, %v1888
        %v1890 = vpop.f32.mrf.mxu0
        %1891 = vmatprep.mubr.f32.mxu0 0.0
        %1892 = vmatmul.mubr.f32.gmra.mxu0 %v1771
        %v1893 = vpop.f32.mrf.mxu0
        %v1894 = vadd.f32 %v1717, %v1893
        %v1895 = vpop.f32.mrf.mxu0
        %1896 = vmatprep.mubr.f32.mxu0 0.0
        %1897 = vmatmul.mubr.f32.gmra.mxu0 %v1773
        %v1898 = vpop.f32.mrf.mxu0
        %v1899 = vadd.f32 %v1722, %v1898
        %v1900 = vpop.f32.mrf.mxu0
        %1901 = vmatprep.mubr.f32.mxu0 0.0
        %1902 = vmatmul.mubr.f32.gmra.mxu0 %v1775
        %v1903 = vpop.f32.mrf.mxu0
        %v1904 = vadd.f32 %v1727, %v1903
        %v1905 = vpop.f32.mrf.mxu0
        %1906 = vmatprep.mubr.f32.mxu0 0.0
        %1907 = vmatmul.mubr.f32.gmra.mxu0 %v1777
        %v1908 = vpop.f32.mrf.mxu0
        %v1909 = vadd.f32 %v1732, %v1908
        %v1910 = vpop.f32.mrf.mxu0
        %1911 = vmatprep.mubr.f32.mxu0 0.0
        %1912 = vmatmul.mubr.f32.gmra.mxu0 %v1779
        %v1913 = vpop.f32.mrf.mxu0
        %v1914 = vadd.f32 %v1737, %v1913
        %v1915 = vpop.f32.mrf.mxu0
        %1916 = vmatprep.mubr.f32.mxu0 0.0
        %1917 = vmatmul.mubr.f32.gmra.mxu0 %v1781
        %v1918 = vpop.f32.mrf.mxu0
        %v1919 = vadd.f32 %v1742, %v1918
        %v1920 = vpop.f32.mrf.mxu0
        %1921 = vmatprep.mubr.f32.mxu0 0.0
        %1922 = vmatmul.mubr.f32.gmra.mxu0 %v1783
        %v1923 = vpop.f32.mrf.mxu0
        %v1924 = vadd.f32 %v1747, %v1923
        %v1925 = vpop.f32.mrf.mxu0
        %1926 = vmatprep.mubr.f32.mxu0 0.0
        %1927 = vmatmul.mubr.f32.gmra.mxu0 %v1785
        %v1928 = vpop.f32.mrf.mxu0
        %v1929 = vadd.f32 %v1752, %v1928
        %v1930 = vpop.f32.mrf.mxu0
        %1931 = vdwg.mxu0
        %vm1932 = vcmask 1045504
        %v1933 = vrot.slane %v1495, 2
        %v1934 = vrot.slane %v1457, 2
        %v1935 = vsel %vm1932, %v1933, %v1934
        %v1936 = vrot.slane %v1503, 2
        %v1937 = vsel %vm1932, %v1934, %v1936
        %v1938 = vrot.slane %v1496, 2
        %v1939 = vrot.slane %v1460, 2
        %v1940 = vsel %vm1932, %v1938, %v1939
        %v1941 = vrot.slane %v1504, 2
        %v1942 = vsel %vm1932, %v1939, %v1941
        %v1943 = vrot.slane %v1497, 2
        %v1944 = vrot.slane %v1463, 2
        %v1945 = vsel %vm1932, %v1943, %v1944
        %v1946 = vrot.slane %v1505, 2
        %v1947 = vsel %vm1932, %v1944, %v1946
        %v1948 = vrot.slane %v1498, 2
        %v1949 = vrot.slane %v1466, 2
        %v1950 = vsel %vm1932, %v1948, %v1949
        %v1951 = vrot.slane %v1506, 2
        %v1952 = vsel %vm1932, %v1949, %v1951
        %v1953 = vrot.slane %v1499, 2
        %v1954 = vrot.slane %v1469, 2
        %v1955 = vsel %vm1932, %v1953, %v1954
        %v1956 = vrot.slane %v1507, 2
        %v1957 = vsel %vm1932, %v1954, %v1956
        %v1958 = vrot.slane %v1500, 2
        %v1959 = vrot.slane %v1472, 2
        %v1960 = vsel %vm1932, %v1958, %v1959
        %v1961 = vrot.slane %v1508, 2
        %v1962 = vsel %vm1932, %v1959, %v1961
        %v1963 = vrot.slane %v1501, 2
        %v1964 = vrot.slane %v1475, 2
        %v1965 = vsel %vm1932, %v1963, %v1964
        %v1966 = vrot.slane %v1509, 2
        %v1967 = vsel %vm1932, %v1964, %v1966
        %v1968 = vrot.slane %v1502, 2
        %v1969 = vrot.slane %v1478, 2
        %v1970 = vsel %vm1932, %v1968, %v1969
        %v1971 = vrot.slane %v1510, 2
        %v1972 = vsel %vm1932, %v1969, %v1971
        %s1973 = scalar_lea.vmem [#allocation7], 64
        %v1974 = vld [vmem:[%s1973] sm:$0xff]
        %v1975 = vld [vmem:[%s1973 + $0x8] sm:$0xff]
        %v1976 = vld [vmem:[%s1973 + $0x10] sm:$0xff]
        %v1977 = vld [vmem:[%s1973 + $0x18] sm:$0xff]
        %v1978 = vsel %vm1577, %v1935, 0
        %v1980 = vsel %vm1577, %v1937, 0
        %v1982 = vsel %vm1577, %v1940, 0
        %v1984 = vsel %vm1577, %v1942, 0
        %v1986 = vsel %vm1577, %v1945, 0
        %v1988 = vsel %vm1577, %v1947, 0
        %v1990 = vsel %vm1577, %v1950, 0
        %v1992 = vsel %vm1577, %v1952, 0
        %v1994 = vsel %vm1577, %v1955, 0
        %v1996 = vsel %vm1577, %v1957, 0
        %v1998 = vsel %vm1577, %v1960, 0
        %v2000 = vsel %vm1577, %v1962, 0
        %v2002 = vsel %vm1577, %v1965, 0
        %v2004 = vsel %vm1577, %v1967, 0
        %v2006 = vsel %vm1577, %v1970, 0
        %v2008 = vsel %vm1577, %v1972, 0
        %2010 = vmatprep.subr.mxu0 0.0
        %2011 = vmatpush1.msra.mxu0 0.0
        %2012 = vmatprep.subr.mxu0 0.0
        %2013 = vmatpush1.msra.mxu0 0.0
        %2014 = vmatprep.subr.mxu0 0.0
        %2015 = vmatpush1.msra.mxu0 0.0
        %2016 = vmatprep.subr.mxu0 0.0
        %2017 = vmatpush1.msra.mxu0 0.0
        %2018 = vmatprep.subr.mxu0 0.0
        %2019 = vmatpush1.msra.mxu0 0.0
        %2020 = vmatprep.subr.mxu0 0.0
        %2021 = vmatpush1.msra.mxu0 0.0
        %2022 = vmatprep.subr.mxu0 0.0
        %2023 = vmatpush1.msra.mxu0 0.0
        %2024 = vmatprep.subr.mxu0 0.0
        %2025 = vmatpush1.msra.mxu0 0.0
        %2026 = vmatprep.subr.mxu0 0.0
        %2027 = vmatpush1.msra.mxu0 0.0
        %2028 = vmatprep.subr.mxu0 0.0
        %2029 = vmatpush1.msra.mxu0 0.0
        %2030 = vmatprep.subr.mxu0 0.0
        %2031 = vmatpush1.msra.mxu0 0.0
        %2032 = vmatprep.subr.mxu0 0.0
        %2033 = vmatpush1.msra.mxu0 0.0
        %2034 = vmatprep.subr.mxu0 0.0
        %2035 = vmatpush1.msra.mxu0 %v1977
        %2036 = vmatprep.subr.mxu0 0.0
        %2037 = vmatpush1.msra.mxu0 %v1976
        %2038 = vmatprep.subr.mxu0 0.0
        %2039 = vmatpush1.msra.mxu0 %v1975
        %2040 = vmatprep.subr.mxu0 0.0
        %2041 = vmatpush1.msra.mxu0 %v1974
        %2042 = vmatprep.subr.mxu0 0.0
        %2043 = vmatpush2.msra.mxu0 0.0
        %2044 = vmatprep.subr.mxu0 0.0
        %2045 = vmatpush2.msra.mxu0 0.0
        %2046 = vmatprep.subr.mxu0 0.0
        %2047 = vmatpush2.msra.mxu0 0.0
        %2048 = vmatprep.subr.mxu0 0.0
        %2049 = vmatpush2.msra.mxu0 0.0
        %2050 = vmatprep.subr.mxu0 0.0
        %2051 = vmatpush2.msra.mxu0 0.0
        %2052 = vmatprep.subr.mxu0 0.0
        %2053 = vmatpush2.msra.mxu0 0.0
        %2054 = vmatprep.subr.mxu0 0.0
        %2055 = vmatpush2.msra.mxu0 0.0
        %2056 = vmatprep.subr.mxu0 0.0
        %2057 = vmatpush2.msra.mxu0 0.0
        %2058 = vmatprep.subr.mxu0 0.0
        %2059 = vmatpush2.msra.mxu0 0.0
        %2060 = vmatprep.subr.mxu0 0.0
        %2061 = vmatpush2.msra.mxu0 0.0
        %2062 = vmatprep.subr.mxu0 0.0
        %2063 = vmatpush2.msra.mxu0 0.0
        %2064 = vmatprep.subr.mxu0 0.0
        %2065 = vmatpush2.msra.mxu0 0.0
        %2066 = vmatprep.subr.mxu0 0.0
        %2067 = vmatpush2.msra.mxu0 0.0
        %2068 = vmatprep.subr.mxu0 0.0
        %2069 = vmatpush2.msra.mxu0 0.0
        %2070 = vmatprep.subr.mxu0 0.0
        %2071 = vmatpush2.msra.mxu0 0.0
        %2072 = vmatprep.subr.mxu0 0.0
        %2073 = vmatpush2.msra.mxu0 0.0
        %2074 = vmatprep.mubr.f32.mxu0 0.0
        %2075 = vmatmul.mubr.f32.gmra.mxu0 %v1978
        %v2076 = vpop.f32.mrf.mxu0
        %v2077 = vadd.f32 0.0, %v2076
        %v2078 = vpop.f32.mrf.mxu0
        %2079 = vmatprep.mubr.f32.mxu0 0.0
        %2080 = vmatmul.mubr.f32.gmra.mxu0 %v1980
        %v2081 = vpop.f32.mrf.mxu0
        %v2082 = vadd.f32 0.0, %v2081
        %v2083 = vpop.f32.mrf.mxu0
        %2084 = vmatprep.mubr.f32.mxu0 0.0
        %2085 = vmatmul.mubr.f32.gmra.mxu0 %v1982
        %v2086 = vpop.f32.mrf.mxu0
        %v2087 = vadd.f32 0.0, %v2086
        %v2088 = vpop.f32.mrf.mxu0
        %2089 = vmatprep.mubr.f32.mxu0 0.0
        %2090 = vmatmul.mubr.f32.gmra.mxu0 %v1984
        %v2091 = vpop.f32.mrf.mxu0
        %v2092 = vadd.f32 0.0, %v2091
        %v2093 = vpop.f32.mrf.mxu0
        %2094 = vmatprep.mubr.f32.mxu0 0.0
        %2095 = vmatmul.mubr.f32.gmra.mxu0 %v1986
        %v2096 = vpop.f32.mrf.mxu0
        %v2097 = vadd.f32 0.0, %v2096
        %v2098 = vpop.f32.mrf.mxu0
        %2099 = vmatprep.mubr.f32.mxu0 0.0
        %2100 = vmatmul.mubr.f32.gmra.mxu0 %v1988
        %v2101 = vpop.f32.mrf.mxu0
        %v2102 = vadd.f32 0.0, %v2101
        %v2103 = vpop.f32.mrf.mxu0
        %2104 = vmatprep.mubr.f32.mxu0 0.0
        %2105 = vmatmul.mubr.f32.gmra.mxu0 %v1990
        %v2106 = vpop.f32.mrf.mxu0
        %v2107 = vadd.f32 0.0, %v2106
        %v2108 = vpop.f32.mrf.mxu0
        %2109 = vmatprep.mubr.f32.mxu0 0.0
        %2110 = vmatmul.mubr.f32.gmra.mxu0 %v1992
        %v2111 = vpop.f32.mrf.mxu0
        %v2112 = vadd.f32 0.0, %v2111
        %v2113 = vpop.f32.mrf.mxu0
        %2114 = vmatprep.mubr.f32.mxu0 0.0
        %2115 = vmatmul.mubr.f32.gmra.mxu0 %v1994
        %v2116 = vpop.f32.mrf.mxu0
        %v2117 = vadd.f32 0.0, %v2116
        %v2118 = vpop.f32.mrf.mxu0
        %2119 = vmatprep.mubr.f32.mxu0 0.0
        %2120 = vmatmul.mubr.f32.gmra.mxu0 %v1996
        %v2121 = vpop.f32.mrf.mxu0
        %v2122 = vadd.f32 0.0, %v2121
        %v2123 = vpop.f32.mrf.mxu0
        %2124 = vmatprep.mubr.f32.mxu0 0.0
        %2125 = vmatmul.mubr.f32.gmra.mxu0 %v1998
        %v2126 = vpop.f32.mrf.mxu0
        %v2127 = vadd.f32 0.0, %v2126
        %v2128 = vpop.f32.mrf.mxu0
        %2129 = vmatprep.mubr.f32.mxu0 0.0
        %2130 = vmatmul.mubr.f32.gmra.mxu0 %v2000
        %v2131 = vpop.f32.mrf.mxu0
        %v2132 = vadd.f32 0.0, %v2131
        %v2133 = vpop.f32.mrf.mxu0
        %2134 = vmatprep.mubr.f32.mxu0 0.0
        %2135 = vmatmul.mubr.f32.gmra.mxu0 %v2002
        %v2136 = vpop.f32.mrf.mxu0
        %v2137 = vadd.f32 0.0, %v2136
        %v2138 = vpop.f32.mrf.mxu0
        %2139 = vmatprep.mubr.f32.mxu0 0.0
        %2140 = vmatmul.mubr.f32.gmra.mxu0 %v2004
        %v2141 = vpop.f32.mrf.mxu0
        %v2142 = vadd.f32 0.0, %v2141
        %v2143 = vpop.f32.mrf.mxu0
        %2144 = vmatprep.mubr.f32.mxu0 0.0
        %2145 = vmatmul.mubr.f32.gmra.mxu0 %v2006
        %v2146 = vpop.f32.mrf.mxu0
        %v2147 = vadd.f32 0.0, %v2146
        %v2148 = vpop.f32.mrf.mxu0
        %2149 = vmatprep.mubr.f32.mxu0 0.0
        %2150 = vmatmul.mubr.f32.gmra.mxu0 %v2008
        %v2151 = vpop.f32.mrf.mxu0
        %v2152 = vadd.f32 0.0, %v2151
        %v2153 = vpop.f32.mrf.mxu0
        %2154 = vdwg.mxu0
        %v2155 = vadd.f32 %v1854, %v2077
        %v2156 = vadd.f32 %v1859, %v2082
        %v2157 = vadd.f32 %v1864, %v2087
        %v2158 = vadd.f32 %v1869, %v2092
        %v2159 = vadd.f32 %v1874, %v2097
        %v2160 = vadd.f32 %v1879, %v2102
        %v2161 = vadd.f32 %v1884, %v2107
        %v2162 = vadd.f32 %v1889, %v2112
        %v2163 = vadd.f32 %v1894, %v2117
        %v2164 = vadd.f32 %v1899, %v2122
        %v2165 = vadd.f32 %v1904, %v2127
        %v2166 = vadd.f32 %v1909, %v2132
        %v2167 = vadd.f32 %v1914, %v2137
        %v2168 = vadd.f32 %v1919, %v2142
        %v2169 = vadd.f32 %v1924, %v2147
        %v2170 = vadd.f32 %v1929, %v2152
        %v2171 = vrot.slane %v1495, 3
        %v2172 = vrot.slane %v1457, 3
        %v2173 = vsel %vm1454, %v2171, %v2172
        %v2174 = vrot.slane %v1503, 3
        %v2175 = vsel %vm1454, %v2172, %v2174
        %v2176 = vrot.slane %v1496, 3
        %v2177 = vrot.slane %v1460, 3
        %v2178 = vsel %vm1454, %v2176, %v2177
        %v2179 = vrot.slane %v1504, 3
        %v2180 = vsel %vm1454, %v2177, %v2179
        %v2181 = vrot.slane %v1497, 3
        %v2182 = vrot.slane %v1463, 3
        %v2183 = vsel %vm1454, %v2181, %v2182
        %v2184 = vrot.slane %v1505, 3
        %v2185 = vsel %vm1454, %v2182, %v2184
        %v2186 = vrot.slane %v1498, 3
        %v2187 = vrot.slane %v1466, 3
        %v2188 = vsel %vm1454, %v2186, %v2187
        %v2189 = vrot.slane %v1506, 3
        %v2190 = vsel %vm1454, %v2187, %v2189
        %v2191 = vrot.slane %v1499, 3
        %v2192 = vrot.slane %v1469, 3
        %v2193 = vsel %vm1454, %v2191, %v2192
        %v2194 = vrot.slane %v1507, 3
        %v2195 = vsel %vm1454, %v2192, %v2194
        %v2196 = vrot.slane %v1500, 3
        %v2197 = vrot.slane %v1472, 3
        %v2198 = vsel %vm1454, %v2196, %v2197
        %v2199 = vrot.slane %v1508, 3
        %v2200 = vsel %vm1454, %v2197, %v2199
        %v2201 = vrot.slane %v1501, 3
        %v2202 = vrot.slane %v1475, 3
        %v2203 = vsel %vm1454, %v2201, %v2202
        %v2204 = vrot.slane %v1509, 3
        %v2205 = vsel %vm1454, %v2202, %v2204
        %v2206 = vrot.slane %v1502, 3
        %v2207 = vrot.slane %v1478, 3
        %v2208 = vsel %vm1454, %v2206, %v2207
        %v2209 = vrot.slane %v1510, 3
        %v2210 = vsel %vm1454, %v2207, %v2209
        %s2211 = scalar_lea.vmem [#allocation7], 96
        %v2212 = vld [vmem:[%s2211] sm:$0xff]
        %v2213 = vld [vmem:[%s2211 + $0x8] sm:$0xff]
        %v2214 = vld [vmem:[%s2211 + $0x10] sm:$0xff]
        %v2215 = vld [vmem:[%s2211 + $0x18] sm:$0xff]
        %v2216 = vsel %vm1577, %v2173, 0
        %v2218 = vsel %vm1577, %v2175, 0
        %v2220 = vsel %vm1577, %v2178, 0
        %v2222 = vsel %vm1577, %v2180, 0
        %v2224 = vsel %vm1577, %v2183, 0
        %v2226 = vsel %vm1577, %v2185, 0
        %v2228 = vsel %vm1577, %v2188, 0
        %v2230 = vsel %vm1577, %v2190, 0
        %v2232 = vsel %vm1577, %v2193, 0
        %v2234 = vsel %vm1577, %v2195, 0
        %v2236 = vsel %vm1577, %v2198, 0
        %v2238 = vsel %vm1577, %v2200, 0
        %v2240 = vsel %vm1577, %v2203, 0
        %v2242 = vsel %vm1577, %v2205, 0
        %v2244 = vsel %vm1577, %v2208, 0
        %v2246 = vsel %vm1577, %v2210, 0
        %2248 = vmatprep.subr.mxu0 0.0
        %2249 = vmatpush1.msra.mxu0 0.0
        %2250 = vmatprep.subr.mxu0 0.0
        %2251 = vmatpush1.msra.mxu0 0.0
        %2252 = vmatprep.subr.mxu0 0.0
        %2253 = vmatpush1.msra.mxu0 0.0
        %2254 = vmatprep.subr.mxu0 0.0
        %2255 = vmatpush1.msra.mxu0 0.0
        %2256 = vmatprep.subr.mxu0 0.0
        %2257 = vmatpush1.msra.mxu0 0.0
        %2258 = vmatprep.subr.mxu0 0.0
        %2259 = vmatpush1.msra.mxu0 0.0
        %2260 = vmatprep.subr.mxu0 0.0
        %2261 = vmatpush1.msra.mxu0 0.0
        %2262 = vmatprep.subr.mxu0 0.0
        %2263 = vmatpush1.msra.mxu0 0.0
        %2264 = vmatprep.subr.mxu0 0.0
        %2265 = vmatpush1.msra.mxu0 0.0
        %2266 = vmatprep.subr.mxu0 0.0
        %2267 = vmatpush1.msra.mxu0 0.0
        %2268 = vmatprep.subr.mxu0 0.0
        %2269 = vmatpush1.msra.mxu0 0.0
        %2270 = vmatprep.subr.mxu0 0.0
        %2271 = vmatpush1.msra.mxu0 0.0
        %2272 = vmatprep.subr.mxu0 0.0
        %2273 = vmatpush1.msra.mxu0 %v2215
        %2274 = vmatprep.subr.mxu0 0.0
        %2275 = vmatpush1.msra.mxu0 %v2214
        %2276 = vmatprep.subr.mxu0 0.0
        %2277 = vmatpush1.msra.mxu0 %v2213
        %2278 = vmatprep.subr.mxu0 0.0
        %2279 = vmatpush1.msra.mxu0 %v2212
        %2280 = vmatprep.subr.mxu0 0.0
        %2281 = vmatpush2.msra.mxu0 0.0
        %2282 = vmatprep.subr.mxu0 0.0
        %2283 = vmatpush2.msra.mxu0 0.0
        %2284 = vmatprep.subr.mxu0 0.0
        %2285 = vmatpush2.msra.mxu0 0.0
        %2286 = vmatprep.subr.mxu0 0.0
        %2287 = vmatpush2.msra.mxu0 0.0
        %2288 = vmatprep.subr.mxu0 0.0
        %2289 = vmatpush2.msra.mxu0 0.0
        %2290 = vmatprep.subr.mxu0 0.0
        %2291 = vmatpush2.msra.mxu0 0.0
        %2292 = vmatprep.subr.mxu0 0.0
        %2293 = vmatpush2.msra.mxu0 0.0
        %2294 = vmatprep.subr.mxu0 0.0
        %2295 = vmatpush2.msra.mxu0 0.0
        %2296 = vmatprep.subr.mxu0 0.0
        %2297 = vmatpush2.msra.mxu0 0.0
        %2298 = vmatprep.subr.mxu0 0.0
        %2299 = vmatpush2.msra.mxu0 0.0
        %2300 = vmatprep.subr.mxu0 0.0
        %2301 = vmatpush2.msra.mxu0 0.0
        %2302 = vmatprep.subr.mxu0 0.0
        %2303 = vmatpush2.msra.mxu0 0.0
        %2304 = vmatprep.subr.mxu0 0.0
        %2305 = vmatpush2.msra.mxu0 0.0
        %2306 = vmatprep.subr.mxu0 0.0
        %2307 = vmatpush2.msra.mxu0 0.0
        %2308 = vmatprep.subr.mxu0 0.0
        %2309 = vmatpush2.msra.mxu0 0.0
        %2310 = vmatprep.subr.mxu0 0.0
        %2311 = vmatpush2.msra.mxu0 0.0
        %2312 = vmatprep.mubr.f32.mxu0 0.0
        %2313 = vmatmul.mubr.f32.gmra.mxu0 %v2216
        %v2314 = vpop.f32.mrf.mxu0
        %v2315 = vadd.f32 0.0, %v2314
        %v2316 = vpop.f32.mrf.mxu0
        %2317 = vmatprep.mubr.f32.mxu0 0.0
        %2318 = vmatmul.mubr.f32.gmra.mxu0 %v2218
        %v2319 = vpop.f32.mrf.mxu0
        %v2320 = vadd.f32 0.0, %v2319
        %v2321 = vpop.f32.mrf.mxu0
        %2322 = vmatprep.mubr.f32.mxu0 0.0
        %2323 = vmatmul.mubr.f32.gmra.mxu0 %v2220
        %v2324 = vpop.f32.mrf.mxu0
        %v2325 = vadd.f32 0.0, %v2324
        %v2326 = vpop.f32.mrf.mxu0
        %2327 = vmatprep.mubr.f32.mxu0 0.0
        %2328 = vmatmul.mubr.f32.gmra.mxu0 %v2222
        %v2329 = vpop.f32.mrf.mxu0
        %v2330 = vadd.f32 0.0, %v2329
        %v2331 = vpop.f32.mrf.mxu0
        %2332 = vmatprep.mubr.f32.mxu0 0.0
        %2333 = vmatmul.mubr.f32.gmra.mxu0 %v2224
        %v2334 = vpop.f32.mrf.mxu0
        %v2335 = vadd.f32 0.0, %v2334
        %v2336 = vpop.f32.mrf.mxu0
        %2337 = vmatprep.mubr.f32.mxu0 0.0
        %2338 = vmatmul.mubr.f32.gmra.mxu0 %v2226
        %v2339 = vpop.f32.mrf.mxu0
        %v2340 = vadd.f32 0.0, %v2339
        %v2341 = vpop.f32.mrf.mxu0
        %2342 = vmatprep.mubr.f32.mxu0 0.0
        %2343 = vmatmul.mubr.f32.gmra.mxu0 %v2228
        %v2344 = vpop.f32.mrf.mxu0
        %v2345 = vadd.f32 0.0, %v2344
        %v2346 = vpop.f32.mrf.mxu0
        %2347 = vmatprep.mubr.f32.mxu0 0.0
        %2348 = vmatmul.mubr.f32.gmra.mxu0 %v2230
        %v2349 = vpop.f32.mrf.mxu0
        %v2350 = vadd.f32 0.0, %v2349
        %v2351 = vpop.f32.mrf.mxu0
        %2352 = vmatprep.mubr.f32.mxu0 0.0
        %2353 = vmatmul.mubr.f32.gmra.mxu0 %v2232
        %v2354 = vpop.f32.mrf.mxu0
        %v2355 = vadd.f32 0.0, %v2354
        %v2356 = vpop.f32.mrf.mxu0
        %2357 = vmatprep.mubr.f32.mxu0 0.0
        %2358 = vmatmul.mubr.f32.gmra.mxu0 %v2234
        %v2359 = vpop.f32.mrf.mxu0
        %v2360 = vadd.f32 0.0, %v2359
        %v2361 = vpop.f32.mrf.mxu0
        %2362 = vmatprep.mubr.f32.mxu0 0.0
        %2363 = vmatmul.mubr.f32.gmra.mxu0 %v2236
        %v2364 = vpop.f32.mrf.mxu0
        %v2365 = vadd.f32 0.0, %v2364
        %v2366 = vpop.f32.mrf.mxu0
        %2367 = vmatprep.mubr.f32.mxu0 0.0
        %2368 = vmatmul.mubr.f32.gmra.mxu0 %v2238
        %v2369 = vpop.f32.mrf.mxu0
        %v2370 = vadd.f32 0.0, %v2369
        %v2371 = vpop.f32.mrf.mxu0
        %2372 = vmatprep.mubr.f32.mxu0 0.0
        %2373 = vmatmul.mubr.f32.gmra.mxu0 %v2240
        %v2374 = vpop.f32.mrf.mxu0
        %v2375 = vadd.f32 0.0, %v2374
        %v2376 = vpop.f32.mrf.mxu0
        %2377 = vmatprep.mubr.f32.mxu0 0.0
        %2378 = vmatmul.mubr.f32.gmra.mxu0 %v2242
        %v2379 = vpop.f32.mrf.mxu0
        %v2380 = vadd.f32 0.0, %v2379
        %v2381 = vpop.f32.mrf.mxu0
        %2382 = vmatprep.mubr.f32.mxu0 0.0
        %2383 = vmatmul.mubr.f32.gmra.mxu0 %v2244
        %v2384 = vpop.f32.mrf.mxu0
        %v2385 = vadd.f32 0.0, %v2384
        %v2386 = vpop.f32.mrf.mxu0
        %2387 = vmatprep.mubr.f32.mxu0 0.0
        %2388 = vmatmul.mubr.f32.gmra.mxu0 %v2246
        %v2389 = vpop.f32.mrf.mxu0
        %v2390 = vadd.f32 0.0, %v2389
        %v2391 = vpop.f32.mrf.mxu0
        %2392 = vdwg.mxu0
        %v2393 = vadd.f32 %v2155, %v2315
        %v2394 = vadd.f32 %v2156, %v2320
        %v2395 = vadd.f32 %v2157, %v2325
        %v2396 = vadd.f32 %v2158, %v2330
        %v2397 = vadd.f32 %v2159, %v2335
        %v2398 = vadd.f32 %v2160, %v2340
        %v2399 = vadd.f32 %v2161, %v2345
        %v2400 = vadd.f32 %v2162, %v2350
        %v2401 = vadd.f32 %v2163, %v2355
        %v2402 = vadd.f32 %v2164, %v2360
        %v2403 = vadd.f32 %v2165, %v2365
        %v2404 = vadd.f32 %v2166, %v2370
        %v2405 = vadd.f32 %v2167, %v2375
        %v2406 = vadd.f32 %v2168, %v2380
        %v2407 = vadd.f32 %v2169, %v2385
        %v2408 = vadd.f32 %v2170, %v2390
        %vm2409 = vcmask 1043456
        %v2410 = vrot.slane %v1495, 4
        %v2411 = vrot.slane %v1457, 4
        %v2412 = vsel %vm2409, %v2410, %v2411
        %v2413 = vrot.slane %v1503, 4
        %v2414 = vsel %vm2409, %v2411, %v2413
        %v2415 = vrot.slane %v1496, 4
        %v2416 = vrot.slane %v1460, 4
        %v2417 = vsel %vm2409, %v2415, %v2416
        %v2418 = vrot.slane %v1504, 4
        %v2419 = vsel %vm2409, %v2416, %v2418
        %v2420 = vrot.slane %v1497, 4
        %v2421 = vrot.slane %v1463, 4
        %v2422 = vsel %vm2409, %v2420, %v2421
        %v2423 = vrot.slane %v1505, 4
        %v2424 = vsel %vm2409, %v2421, %v2423
        %v2425 = vrot.slane %v1498, 4
        %v2426 = vrot.slane %v1466, 4
        %v2427 = vsel %vm2409, %v2425, %v2426
        %v2428 = vrot.slane %v1506, 4
        %v2429 = vsel %vm2409, %v2426, %v2428
        %v2430 = vrot.slane %v1499, 4
        %v2431 = vrot.slane %v1469, 4
        %v2432 = vsel %vm2409, %v2430, %v2431
        %v2433 = vrot.slane %v1507, 4
        %v2434 = vsel %vm2409, %v2431, %v2433
        %v2435 = vrot.slane %v1500, 4
        %v2436 = vrot.slane %v1472, 4
        %v2437 = vsel %vm2409, %v2435, %v2436
        %v2438 = vrot.slane %v1508, 4
        %v2439 = vsel %vm2409, %v2436, %v2438
        %v2440 = vrot.slane %v1501, 4
        %v2441 = vrot.slane %v1475, 4
        %v2442 = vsel %vm2409, %v2440, %v2441
        %v2443 = vrot.slane %v1509, 4
        %v2444 = vsel %vm2409, %v2441, %v2443
        %v2445 = vrot.slane %v1502, 4
        %v2446 = vrot.slane %v1478, 4
        %v2447 = vsel %vm2409, %v2445, %v2446
        %v2448 = vrot.slane %v1510, 4
        %v2449 = vsel %vm2409, %v2446, %v2448
        %s2450 = scalar_lea.vmem [#allocation7], 128
        %v2451 = vld [vmem:[%s2450] sm:$0xff]
        %v2452 = vld [vmem:[%s2450 + $0x8] sm:$0xff]
        %v2453 = vld [vmem:[%s2450 + $0x10] sm:$0xff]
        %v2454 = vld [vmem:[%s2450 + $0x18] sm:$0xff]
        %v2455 = vsel %vm1577, %v2412, 0
        %v2457 = vsel %vm1577, %v2414, 0
        %v2459 = vsel %vm1577, %v2417, 0
        %v2461 = vsel %vm1577, %v2419, 0
        %v2463 = vsel %vm1577, %v2422, 0
        %v2465 = vsel %vm1577, %v2424, 0
        %v2467 = vsel %vm1577, %v2427, 0
        %v2469 = vsel %vm1577, %v2429, 0
        %v2471 = vsel %vm1577, %v2432, 0
        %v2473 = vsel %vm1577, %v2434, 0
        %v2475 = vsel %vm1577, %v2437, 0
        %v2477 = vsel %vm1577, %v2439, 0
        %v2479 = vsel %vm1577, %v2442, 0
        %v2481 = vsel %vm1577, %v2444, 0
        %v2483 = vsel %vm1577, %v2447, 0
        %v2485 = vsel %vm1577, %v2449, 0
        %2487 = vmatprep.subr.mxu0 0.0
        %2488 = vmatpush1.msra.mxu0 0.0
        %2489 = vmatprep.subr.mxu0 0.0
        %2490 = vmatpush1.msra.mxu0 0.0
        %2491 = vmatprep.subr.mxu0 0.0
        %2492 = vmatpush1.msra.mxu0 0.0
        %2493 = vmatprep.subr.mxu0 0.0
        %2494 = vmatpush1.msra.mxu0 0.0
        %2495 = vmatprep.subr.mxu0 0.0
        %2496 = vmatpush1.msra.mxu0 0.0
        %2497 = vmatprep.subr.mxu0 0.0
        %2498 = vmatpush1.msra.mxu0 0.0
        %2499 = vmatprep.subr.mxu0 0.0
        %2500 = vmatpush1.msra.mxu0 0.0
        %2501 = vmatprep.subr.mxu0 0.0
        %2502 = vmatpush1.msra.mxu0 0.0
        %2503 = vmatprep.subr.mxu0 0.0
        %2504 = vmatpush1.msra.mxu0 0.0
        %2505 = vmatprep.subr.mxu0 0.0
        %2506 = vmatpush1.msra.mxu0 0.0
        %2507 = vmatprep.subr.mxu0 0.0
        %2508 = vmatpush1.msra.mxu0 0.0
        %2509 = vmatprep.subr.mxu0 0.0
        %2510 = vmatpush1.msra.mxu0 0.0
        %2511 = vmatprep.subr.mxu0 0.0
        %2512 = vmatpush1.msra.mxu0 %v2454
        %2513 = vmatprep.subr.mxu0 0.0
        %2514 = vmatpush1.msra.mxu0 %v2453
        %2515 = vmatprep.subr.mxu0 0.0
        %2516 = vmatpush1.msra.mxu0 %v2452
        %2517 = vmatprep.subr.mxu0 0.0
        %2518 = vmatpush1.msra.mxu0 %v2451
        %2519 = vmatprep.subr.mxu0 0.0
        %2520 = vmatpush2.msra.mxu0 0.0
        %2521 = vmatprep.subr.mxu0 0.0
        %2522 = vmatpush2.msra.mxu0 0.0
        %2523 = vmatprep.subr.mxu0 0.0
        %2524 = vmatpush2.msra.mxu0 0.0
        %2525 = vmatprep.subr.mxu0 0.0
        %2526 = vmatpush2.msra.mxu0 0.0
        %2527 = vmatprep.subr.mxu0 0.0
        %2528 = vmatpush2.msra.mxu0 0.0
        %2529 = vmatprep.subr.mxu0 0.0
        %2530 = vmatpush2.msra.mxu0 0.0
        %2531 = vmatprep.subr.mxu0 0.0
        %2532 = vmatpush2.msra.mxu0 0.0
        %2533 = vmatprep.subr.mxu0 0.0
        %2534 = vmatpush2.msra.mxu0 0.0
        %2535 = vmatprep.subr.mxu0 0.0
        %2536 = vmatpush2.msra.mxu0 0.0
        %2537 = vmatprep.subr.mxu0 0.0
        %2538 = vmatpush2.msra.mxu0 0.0
        %2539 = vmatprep.subr.mxu0 0.0
        %2540 = vmatpush2.msra.mxu0 0.0
        %2541 = vmatprep.subr.mxu0 0.0
        %2542 = vmatpush2.msra.mxu0 0.0
        %2543 = vmatprep.subr.mxu0 0.0
        %2544 = vmatpush2.msra.mxu0 0.0
        %2545 = vmatprep.subr.mxu0 0.0
        %2546 = vmatpush2.msra.mxu0 0.0
        %2547 = vmatprep.subr.mxu0 0.0
        %2548 = vmatpush2.msra.mxu0 0.0
        %2549 = vmatprep.subr.mxu0 0.0
        %2550 = vmatpush2.msra.mxu0 0.0
        %2551 = vmatprep.mubr.f32.mxu0 0.0
        %2552 = vmatmul.mubr.f32.gmra.mxu0 %v2455
        %v2553 = vpop.f32.mrf.mxu0
        %v2554 = vadd.f32 0.0, %v2553
        %v2555 = vpop.f32.mrf.mxu0
        %2556 = vmatprep.mubr.f32.mxu0 0.0
        %2557 = vmatmul.mubr.f32.gmra.mxu0 %v2457
        %v2558 = vpop.f32.mrf.mxu0
        %v2559 = vadd.f32 0.0, %v2558
        %v2560 = vpop.f32.mrf.mxu0
        %2561 = vmatprep.mubr.f32.mxu0 0.0
        %2562 = vmatmul.mubr.f32.gmra.mxu0 %v2459
        %v2563 = vpop.f32.mrf.mxu0
        %v2564 = vadd.f32 0.0, %v2563
        %v2565 = vpop.f32.mrf.mxu0
        %2566 = vmatprep.mubr.f32.mxu0 0.0
        %2567 = vmatmul.mubr.f32.gmra.mxu0 %v2461
        %v2568 = vpop.f32.mrf.mxu0
        %v2569 = vadd.f32 0.0, %v2568
        %v2570 = vpop.f32.mrf.mxu0
        %2571 = vmatprep.mubr.f32.mxu0 0.0
        %2572 = vmatmul.mubr.f32.gmra.mxu0 %v2463
        %v2573 = vpop.f32.mrf.mxu0
        %v2574 = vadd.f32 0.0, %v2573
        %v2575 = vpop.f32.mrf.mxu0
        %2576 = vmatprep.mubr.f32.mxu0 0.0
        %2577 = vmatmul.mubr.f32.gmra.mxu0 %v2465
        %v2578 = vpop.f32.mrf.mxu0
        %v2579 = vadd.f32 0.0, %v2578
        %v2580 = vpop.f32.mrf.mxu0
        %2581 = vmatprep.mubr.f32.mxu0 0.0
        %2582 = vmatmul.mubr.f32.gmra.mxu0 %v2467
        %v2583 = vpop.f32.mrf.mxu0
        %v2584 = vadd.f32 0.0, %v2583
        %v2585 = vpop.f32.mrf.mxu0
        %2586 = vmatprep.mubr.f32.mxu0 0.0
        %2587 = vmatmul.mubr.f32.gmra.mxu0 %v2469
        %v2588 = vpop.f32.mrf.mxu0
        %v2589 = vadd.f32 0.0, %v2588
        %v2590 = vpop.f32.mrf.mxu0
        %2591 = vmatprep.mubr.f32.mxu0 0.0
        %2592 = vmatmul.mubr.f32.gmra.mxu0 %v2471
        %v2593 = vpop.f32.mrf.mxu0
        %v2594 = vadd.f32 0.0, %v2593
        %v2595 = vpop.f32.mrf.mxu0
        %2596 = vmatprep.mubr.f32.mxu0 0.0
        %2597 = vmatmul.mubr.f32.gmra.mxu0 %v2473
        %v2598 = vpop.f32.mrf.mxu0
        %v2599 = vadd.f32 0.0, %v2598
        %v2600 = vpop.f32.mrf.mxu0
        %2601 = vmatprep.mubr.f32.mxu0 0.0
        %2602 = vmatmul.mubr.f32.gmra.mxu0 %v2475
        %v2603 = vpop.f32.mrf.mxu0
        %v2604 = vadd.f32 0.0, %v2603
        %v2605 = vpop.f32.mrf.mxu0
        %2606 = vmatprep.mubr.f32.mxu0 0.0
        %2607 = vmatmul.mubr.f32.gmra.mxu0 %v2477
        %v2608 = vpop.f32.mrf.mxu0
        %v2609 = vadd.f32 0.0, %v2608
        %v2610 = vpop.f32.mrf.mxu0
        %2611 = vmatprep.mubr.f32.mxu0 0.0
        %2612 = vmatmul.mubr.f32.gmra.mxu0 %v2479
        %v2613 = vpop.f32.mrf.mxu0
        %v2614 = vadd.f32 0.0, %v2613
        %v2615 = vpop.f32.mrf.mxu0
        %2616 = vmatprep.mubr.f32.mxu0 0.0
        %2617 = vmatmul.mubr.f32.gmra.mxu0 %v2481
        %v2618 = vpop.f32.mrf.mxu0
        %v2619 = vadd.f32 0.0, %v2618
        %v2620 = vpop.f32.mrf.mxu0
        %2621 = vmatprep.mubr.f32.mxu0 0.0
        %2622 = vmatmul.mubr.f32.gmra.mxu0 %v2483
        %v2623 = vpop.f32.mrf.mxu0
        %v2624 = vadd.f32 0.0, %v2623
        %v2625 = vpop.f32.mrf.mxu0
        %2626 = vmatprep.mubr.f32.mxu0 0.0
        %2627 = vmatmul.mubr.f32.gmra.mxu0 %v2485
        %v2628 = vpop.f32.mrf.mxu0
        %v2629 = vadd.f32 0.0, %v2628
        %v2630 = vpop.f32.mrf.mxu0
        %2631 = vdwg.mxu0
        %v2632 = vadd.f32 %v2393, %v2554
        %v2633 = vadd.f32 %v2394, %v2559
        %v2634 = vadd.f32 %v2395, %v2564
        %v2635 = vadd.f32 %v2396, %v2569
        %v2636 = vadd.f32 %v2397, %v2574
        %v2637 = vadd.f32 %v2398, %v2579
        %v2638 = vadd.f32 %v2399, %v2584
        %v2639 = vadd.f32 %v2400, %v2589
        %v2640 = vadd.f32 %v2401, %v2594
        %v2641 = vadd.f32 %v2402, %v2599
        %v2642 = vadd.f32 %v2403, %v2604
        %v2643 = vadd.f32 %v2404, %v2609
        %v2644 = vadd.f32 %v2405, %v2614
        %v2645 = vadd.f32 %v2406, %v2619
        %v2646 = vadd.f32 %v2407, %v2624
        %v2647 = vadd.f32 %v2408, %v2629
        %vm2648 = vcmask 1042432
        %v2649 = vrot.slane %v1495, 5
        %v2650 = vrot.slane %v1457, 5
        %v2651 = vsel %vm2648, %v2649, %v2650
        %v2652 = vrot.slane %v1503, 5
        %v2653 = vsel %vm2648, %v2650, %v2652
        %v2654 = vrot.slane %v1496, 5
        %v2655 = vrot.slane %v1460, 5
        %v2656 = vsel %vm2648, %v2654, %v2655
        %v2657 = vrot.slane %v1504, 5
        %v2658 = vsel %vm2648, %v2655, %v2657
        %v2659 = vrot.slane %v1497, 5
        %v2660 = vrot.slane %v1463, 5
        %v2661 = vsel %vm2648, %v2659, %v2660
        %v2662 = vrot.slane %v1505, 5
        %v2663 = vsel %vm2648, %v2660, %v2662
        %v2664 = vrot.slane %v1498, 5
        %v2665 = vrot.slane %v1466, 5
        %v2666 = vsel %vm2648, %v2664, %v2665
        %v2667 = vrot.slane %v1506, 5
        %v2668 = vsel %vm2648, %v2665, %v2667
        %v2669 = vrot.slane %v1499, 5
        %v2670 = vrot.slane %v1469, 5
        %v2671 = vsel %vm2648, %v2669, %v2670
        %v2672 = vrot.slane %v1507, 5
        %v2673 = vsel %vm2648, %v2670, %v2672
        %v2674 = vrot.slane %v1500, 5
        %v2675 = vrot.slane %v1472, 5
        %v2676 = vsel %vm2648, %v2674, %v2675
        %v2677 = vrot.slane %v1508, 5
        %v2678 = vsel %vm2648, %v2675, %v2677
        %v2679 = vrot.slane %v1501, 5
        %v2680 = vrot.slane %v1475, 5
        %v2681 = vsel %vm2648, %v2679, %v2680
        %v2682 = vrot.slane %v1509, 5
        %v2683 = vsel %vm2648, %v2680, %v2682
        %v2684 = vrot.slane %v1502, 5
        %v2685 = vrot.slane %v1478, 5
        %v2686 = vsel %vm2648, %v2684, %v2685
        %v2687 = vrot.slane %v1510, 5
        %v2688 = vsel %vm2648, %v2685, %v2687
        %s2689 = scalar_lea.vmem [#allocation7], 160
        %v2690 = vld [vmem:[%s2689] sm:$0xff]
        %v2691 = vld [vmem:[%s2689 + $0x8] sm:$0xff]
        %v2692 = vld [vmem:[%s2689 + $0x10] sm:$0xff]
        %v2693 = vld [vmem:[%s2689 + $0x18] sm:$0xff]
        %v2694 = vsel %vm1577, %v2651, 0
        %v2696 = vsel %vm1577, %v2653, 0
        %v2698 = vsel %vm1577, %v2656, 0
        %v2700 = vsel %vm1577, %v2658, 0
        %v2702 = vsel %vm1577, %v2661, 0
        %v2704 = vsel %vm1577, %v2663, 0
        %v2706 = vsel %vm1577, %v2666, 0
        %v2708 = vsel %vm1577, %v2668, 0
        %v2710 = vsel %vm1577, %v2671, 0
        %v2712 = vsel %vm1577, %v2673, 0
        %v2714 = vsel %vm1577, %v2676, 0
        %v2716 = vsel %vm1577, %v2678, 0
        %v2718 = vsel %vm1577, %v2681, 0
        %v2720 = vsel %vm1577, %v2683, 0
        %v2722 = vsel %vm1577, %v2686, 0
        %v2724 = vsel %vm1577, %v2688, 0
        %2726 = vmatprep.subr.mxu0 0.0
        %2727 = vmatpush1.msra.mxu0 0.0
        %2728 = vmatprep.subr.mxu0 0.0
        %2729 = vmatpush1.msra.mxu0 0.0
        %2730 = vmatprep.subr.mxu0 0.0
        %2731 = vmatpush1.msra.mxu0 0.0
        %2732 = vmatprep.subr.mxu0 0.0
        %2733 = vmatpush1.msra.mxu0 0.0
        %2734 = vmatprep.subr.mxu0 0.0
        %2735 = vmatpush1.msra.mxu0 0.0
        %2736 = vmatprep.subr.mxu0 0.0
        %2737 = vmatpush1.msra.mxu0 0.0
        %2738 = vmatprep.subr.mxu0 0.0
        %2739 = vmatpush1.msra.mxu0 0.0
        %2740 = vmatprep.subr.mxu0 0.0
        %2741 = vmatpush1.msra.mxu0 0.0
        %2742 = vmatprep.subr.mxu0 0.0
        %2743 = vmatpush1.msra.mxu0 0.0
        %2744 = vmatprep.subr.mxu0 0.0
        %2745 = vmatpush1.msra.mxu0 0.0
        %2746 = vmatprep.subr.mxu0 0.0
        %2747 = vmatpush1.msra.mxu0 0.0
        %2748 = vmatprep.subr.mxu0 0.0
        %2749 = vmatpush1.msra.mxu0 0.0
        %2750 = vmatprep.subr.mxu0 0.0
        %2751 = vmatpush1.msra.mxu0 %v2693
        %2752 = vmatprep.subr.mxu0 0.0
        %2753 = vmatpush1.msra.mxu0 %v2692
        %2754 = vmatprep.subr.mxu0 0.0
        %2755 = vmatpush1.msra.mxu0 %v2691
        %2756 = vmatprep.subr.mxu0 0.0
        %2757 = vmatpush1.msra.mxu0 %v2690
        %2758 = vmatprep.subr.mxu0 0.0
        %2759 = vmatpush2.msra.mxu0 0.0
        %2760 = vmatprep.subr.mxu0 0.0
        %2761 = vmatpush2.msra.mxu0 0.0
        %2762 = vmatprep.subr.mxu0 0.0
        %2763 = vmatpush2.msra.mxu0 0.0
        %2764 = vmatprep.subr.mxu0 0.0
        %2765 = vmatpush2.msra.mxu0 0.0
        %2766 = vmatprep.subr.mxu0 0.0
        %2767 = vmatpush2.msra.mxu0 0.0
        %2768 = vmatprep.subr.mxu0 0.0
        %2769 = vmatpush2.msra.mxu0 0.0
        %2770 = vmatprep.subr.mxu0 0.0
        %2771 = vmatpush2.msra.mxu0 0.0
        %2772 = vmatprep.subr.mxu0 0.0
        %2773 = vmatpush2.msra.mxu0 0.0
        %2774 = vmatprep.subr.mxu0 0.0
        %2775 = vmatpush2.msra.mxu0 0.0
        %2776 = vmatprep.subr.mxu0 0.0
        %2777 = vmatpush2.msra.mxu0 0.0
        %2778 = vmatprep.subr.mxu0 0.0
        %2779 = vmatpush2.msra.mxu0 0.0
        %2780 = vmatprep.subr.mxu0 0.0
        %2781 = vmatpush2.msra.mxu0 0.0
        %2782 = vmatprep.subr.mxu0 0.0
        %2783 = vmatpush2.msra.mxu0 0.0
        %2784 = vmatprep.subr.mxu0 0.0
        %2785 = vmatpush2.msra.mxu0 0.0
        %2786 = vmatprep.subr.mxu0 0.0
        %2787 = vmatpush2.msra.mxu0 0.0
        %2788 = vmatprep.subr.mxu0 0.0
        %2789 = vmatpush2.msra.mxu0 0.0
        %2790 = vmatprep.mubr.f32.mxu0 0.0
        %2791 = vmatmul.mubr.f32.gmra.mxu0 %v2694
        %v2792 = vpop.f32.mrf.mxu0
        %v2793 = vadd.f32 0.0, %v2792
        %v2794 = vpop.f32.mrf.mxu0
        %2795 = vmatprep.mubr.f32.mxu0 0.0
        %2796 = vmatmul.mubr.f32.gmra.mxu0 %v2696
        %v2797 = vpop.f32.mrf.mxu0
        %v2798 = vadd.f32 0.0, %v2797
        %v2799 = vpop.f32.mrf.mxu0
        %2800 = vmatprep.mubr.f32.mxu0 0.0
        %2801 = vmatmul.mubr.f32.gmra.mxu0 %v2698
        %v2802 = vpop.f32.mrf.mxu0
        %v2803 = vadd.f32 0.0, %v2802
        %v2804 = vpop.f32.mrf.mxu0
        %2805 = vmatprep.mubr.f32.mxu0 0.0
        %2806 = vmatmul.mubr.f32.gmra.mxu0 %v2700
        %v2807 = vpop.f32.mrf.mxu0
        %v2808 = vadd.f32 0.0, %v2807
        %v2809 = vpop.f32.mrf.mxu0
        %2810 = vmatprep.mubr.f32.mxu0 0.0
        %2811 = vmatmul.mubr.f32.gmra.mxu0 %v2702
        %v2812 = vpop.f32.mrf.mxu0
        %v2813 = vadd.f32 0.0, %v2812
        %v2814 = vpop.f32.mrf.mxu0
        %2815 = vmatprep.mubr.f32.mxu0 0.0
        %2816 = vmatmul.mubr.f32.gmra.mxu0 %v2704
        %v2817 = vpop.f32.mrf.mxu0
        %v2818 = vadd.f32 0.0, %v2817
        %v2819 = vpop.f32.mrf.mxu0
        %2820 = vmatprep.mubr.f32.mxu0 0.0
        %2821 = vmatmul.mubr.f32.gmra.mxu0 %v2706
        %v2822 = vpop.f32.mrf.mxu0
        %v2823 = vadd.f32 0.0, %v2822
        %v2824 = vpop.f32.mrf.mxu0
        %2825 = vmatprep.mubr.f32.mxu0 0.0
        %2826 = vmatmul.mubr.f32.gmra.mxu0 %v2708
        %v2827 = vpop.f32.mrf.mxu0
        %v2828 = vadd.f32 0.0, %v2827
        %v2829 = vpop.f32.mrf.mxu0
        %2830 = vmatprep.mubr.f32.mxu0 0.0
        %2831 = vmatmul.mubr.f32.gmra.mxu0 %v2710
        %v2832 = vpop.f32.mrf.mxu0
        %v2833 = vadd.f32 0.0, %v2832
        %v2834 = vpop.f32.mrf.mxu0
        %2835 = vmatprep.mubr.f32.mxu0 0.0
        %2836 = vmatmul.mubr.f32.gmra.mxu0 %v2712
        %v2837 = vpop.f32.mrf.mxu0
        %v2838 = vadd.f32 0.0, %v2837
        %v2839 = vpop.f32.mrf.mxu0
        %2840 = vmatprep.mubr.f32.mxu0 0.0
        %2841 = vmatmul.mubr.f32.gmra.mxu0 %v2714
        %v2842 = vpop.f32.mrf.mxu0
        %v2843 = vadd.f32 0.0, %v2842
        %v2844 = vpop.f32.mrf.mxu0
        %2845 = vmatprep.mubr.f32.mxu0 0.0
        %2846 = vmatmul.mubr.f32.gmra.mxu0 %v2716
        %v2847 = vpop.f32.mrf.mxu0
        %v2848 = vadd.f32 0.0, %v2847
        %v2849 = vpop.f32.mrf.mxu0
        %2850 = vmatprep.mubr.f32.mxu0 0.0
        %2851 = vmatmul.mubr.f32.gmra.mxu0 %v2718
        %v2852 = vpop.f32.mrf.mxu0
        %v2853 = vadd.f32 0.0, %v2852
        %v2854 = vpop.f32.mrf.mxu0
        %2855 = vmatprep.mubr.f32.mxu0 0.0
        %2856 = vmatmul.mubr.f32.gmra.mxu0 %v2720
        %v2857 = vpop.f32.mrf.mxu0
        %v2858 = vadd.f32 0.0, %v2857
        %v2859 = vpop.f32.mrf.mxu0
        %2860 = vmatprep.mubr.f32.mxu0 0.0
        %2861 = vmatmul.mubr.f32.gmra.mxu0 %v2722
        %v2862 = vpop.f32.mrf.mxu0
        %v2863 = vadd.f32 0.0, %v2862
        %v2864 = vpop.f32.mrf.mxu0
        %2865 = vmatprep.mubr.f32.mxu0 0.0
        %2866 = vmatmul.mubr.f32.gmra.mxu0 %v2724
        %v2867 = vpop.f32.mrf.mxu0
        %v2868 = vadd.f32 0.0, %v2867
        %v2869 = vpop.f32.mrf.mxu0
        %2870 = vdwg.mxu0
        %v2871 = vadd.f32 %v2632, %v2793
        %v2872 = vadd.f32 %v2633, %v2798
        %v2873 = vadd.f32 %v2634, %v2803
        %v2874 = vadd.f32 %v2635, %v2808
        %v2875 = vadd.f32 %v2636, %v2813
        %v2876 = vadd.f32 %v2637, %v2818
        %v2877 = vadd.f32 %v2638, %v2823
        %v2878 = vadd.f32 %v2639, %v2828
        %v2879 = vadd.f32 %v2640, %v2833
        %v2880 = vadd.f32 %v2641, %v2838
        %v2881 = vadd.f32 %v2642, %v2843
        %v2882 = vadd.f32 %v2643, %v2848
        %v2883 = vadd.f32 %v2644, %v2853
        %v2884 = vadd.f32 %v2645, %v2858
        %v2885 = vadd.f32 %v2646, %v2863
        %v2886 = vadd.f32 %v2647, %v2868
        %vm2887 = vcmask 1041408
        %v2888 = vrot.slane %v1495, 6
        %v2889 = vrot.slane %v1457, 6
        %v2890 = vsel %vm2887, %v2888, %v2889
        %v2891 = vrot.slane %v1503, 6
        %v2892 = vsel %vm2887, %v2889, %v2891
        %v2893 = vrot.slane %v1496, 6
        %v2894 = vrot.slane %v1460, 6
        %v2895 = vsel %vm2887, %v2893, %v2894
        %v2896 = vrot.slane %v1504, 6
        %v2897 = vsel %vm2887, %v2894, %v2896
        %v2898 = vrot.slane %v1497, 6
        %v2899 = vrot.slane %v1463, 6
        %v2900 = vsel %vm2887, %v2898, %v2899
        %v2901 = vrot.slane %v1505, 6
        %v2902 = vsel %vm2887, %v2899, %v2901
        %v2903 = vrot.slane %v1498, 6
        %v2904 = vrot.slane %v1466, 6
        %v2905 = vsel %vm2887, %v2903, %v2904
        %v2906 = vrot.slane %v1506, 6
        %v2907 = vsel %vm2887, %v2904, %v2906
        %v2908 = vrot.slane %v1499, 6
        %v2909 = vrot.slane %v1469, 6
        %v2910 = vsel %vm2887, %v2908, %v2909
        %v2911 = vrot.slane %v1507, 6
        %v2912 = vsel %vm2887, %v2909, %v2911
        %v2913 = vrot.slane %v1500, 6
        %v2914 = vrot.slane %v1472, 6
        %v2915 = vsel %vm2887, %v2913, %v2914
        %v2916 = vrot.slane %v1508, 6
        %v2917 = vsel %vm2887, %v2914, %v2916
        %v2918 = vrot.slane %v1501, 6
        %v2919 = vrot.slane %v1475, 6
        %v2920 = vsel %vm2887, %v2918, %v2919
        %v2921 = vrot.slane %v1509, 6
        %v2922 = vsel %vm2887, %v2919, %v2921
        %v2923 = vrot.slane %v1502, 6
        %v2924 = vrot.slane %v1478, 6
        %v2925 = vsel %vm2887, %v2923, %v2924
        %v2926 = vrot.slane %v1510, 6
        %v2927 = vsel %vm2887, %v2924, %v2926
        %s2928 = scalar_lea.vmem [#allocation7], 192
        %v2929 = vld [vmem:[%s2928] sm:$0xff]
        %v2930 = vld [vmem:[%s2928 + $0x8] sm:$0xff]
        %v2931 = vld [vmem:[%s2928 + $0x10] sm:$0xff]
        %v2932 = vld [vmem:[%s2928 + $0x18] sm:$0xff]
        %v2933 = vsel %vm1577, %v2890, 0
        %v2935 = vsel %vm1577, %v2892, 0
        %v2937 = vsel %vm1577, %v2895, 0
        %v2939 = vsel %vm1577, %v2897, 0
        %v2941 = vsel %vm1577, %v2900, 0
        %v2943 = vsel %vm1577, %v2902, 0
        %v2945 = vsel %vm1577, %v2905, 0
        %v2947 = vsel %vm1577, %v2907, 0
        %v2949 = vsel %vm1577, %v2910, 0
        %v2951 = vsel %vm1577, %v2912, 0
        %v2953 = vsel %vm1577, %v2915, 0
        %v2955 = vsel %vm1577, %v2917, 0
        %v2957 = vsel %vm1577, %v2920, 0
        %v2959 = vsel %vm1577, %v2922, 0
        %v2961 = vsel %vm1577, %v2925, 0
        %v2963 = vsel %vm1577, %v2927, 0
        %2965 = vmatprep.subr.mxu0 0.0
        %2966 = vmatpush1.msra.mxu0 0.0
        %2967 = vmatprep.subr.mxu0 0.0
        %2968 = vmatpush1.msra.mxu0 0.0
        %2969 = vmatprep.subr.mxu0 0.0
        %2970 = vmatpush1.msra.mxu0 0.0
        %2971 = vmatprep.subr.mxu0 0.0
        %2972 = vmatpush1.msra.mxu0 0.0
        %2973 = vmatprep.subr.mxu0 0.0
        %2974 = vmatpush1.msra.mxu0 0.0
        %2975 = vmatprep.subr.mxu0 0.0
        %2976 = vmatpush1.msra.mxu0 0.0
        %2977 = vmatprep.subr.mxu0 0.0
        %2978 = vmatpush1.msra.mxu0 0.0
        %2979 = vmatprep.subr.mxu0 0.0
        %2980 = vmatpush1.msra.mxu0 0.0
        %2981 = vmatprep.subr.mxu0 0.0
        %2982 = vmatpush1.msra.mxu0 0.0
        %2983 = vmatprep.subr.mxu0 0.0
        %2984 = vmatpush1.msra.mxu0 0.0
        %2985 = vmatprep.subr.mxu0 0.0
        %2986 = vmatpush1.msra.mxu0 0.0
        %2987 = vmatprep.subr.mxu0 0.0
        %2988 = vmatpush1.msra.mxu0 0.0
        %2989 = vmatprep.subr.mxu0 0.0
        %2990 = vmatpush1.msra.mxu0 %v2932
        %2991 = vmatprep.subr.mxu0 0.0
        %2992 = vmatpush1.msra.mxu0 %v2931
        %2993 = vmatprep.subr.mxu0 0.0
        %2994 = vmatpush1.msra.mxu0 %v2930
        %2995 = vmatprep.subr.mxu0 0.0
        %2996 = vmatpush1.msra.mxu0 %v2929
        %2997 = vmatprep.subr.mxu0 0.0
        %2998 = vmatpush2.msra.mxu0 0.0
        %2999 = vmatprep.subr.mxu0 0.0
        %3000 = vmatpush2.msra.mxu0 0.0
        %3001 = vmatprep.subr.mxu0 0.0
        %3002 = vmatpush2.msra.mxu0 0.0
        %3003 = vmatprep.subr.mxu0 0.0
        %3004 = vmatpush2.msra.mxu0 0.0
        %3005 = vmatprep.subr.mxu0 0.0
        %3006 = vmatpush2.msra.mxu0 0.0
        %3007 = vmatprep.subr.mxu0 0.0
        %3008 = vmatpush2.msra.mxu0 0.0
        %3009 = vmatprep.subr.mxu0 0.0
        %3010 = vmatpush2.msra.mxu0 0.0
        %3011 = vmatprep.subr.mxu0 0.0
        %3012 = vmatpush2.msra.mxu0 0.0
        %3013 = vmatprep.subr.mxu0 0.0
        %3014 = vmatpush2.msra.mxu0 0.0
        %3015 = vmatprep.subr.mxu0 0.0
        %3016 = vmatpush2.msra.mxu0 0.0
        %3017 = vmatprep.subr.mxu0 0.0
        %3018 = vmatpush2.msra.mxu0 0.0
        %3019 = vmatprep.subr.mxu0 0.0
        %3020 = vmatpush2.msra.mxu0 0.0
        %3021 = vmatprep.subr.mxu0 0.0
        %3022 = vmatpush2.msra.mxu0 0.0
        %3023 = vmatprep.subr.mxu0 0.0
        %3024 = vmatpush2.msra.mxu0 0.0
        %3025 = vmatprep.subr.mxu0 0.0
        %3026 = vmatpush2.msra.mxu0 0.0
        %3027 = vmatprep.subr.mxu0 0.0
        %3028 = vmatpush2.msra.mxu0 0.0
        %3029 = vmatprep.mubr.f32.mxu0 0.0
        %3030 = vmatmul.mubr.f32.gmra.mxu0 %v2933
        %v3031 = vpop.f32.mrf.mxu0
        %v3032 = vadd.f32 0.0, %v3031
        %v3033 = vpop.f32.mrf.mxu0
        %3034 = vmatprep.mubr.f32.mxu0 0.0
        %3035 = vmatmul.mubr.f32.gmra.mxu0 %v2935
        %v3036 = vpop.f32.mrf.mxu0
        %v3037 = vadd.f32 0.0, %v3036
        %v3038 = vpop.f32.mrf.mxu0
        %3039 = vmatprep.mubr.f32.mxu0 0.0
        %3040 = vmatmul.mubr.f32.gmra.mxu0 %v2937
        %v3041 = vpop.f32.mrf.mxu0
        %v3042 = vadd.f32 0.0, %v3041
        %v3043 = vpop.f32.mrf.mxu0
        %3044 = vmatprep.mubr.f32.mxu0 0.0
        %3045 = vmatmul.mubr.f32.gmra.mxu0 %v2939
        %v3046 = vpop.f32.mrf.mxu0
        %v3047 = vadd.f32 0.0, %v3046
        %v3048 = vpop.f32.mrf.mxu0
        %3049 = vmatprep.mubr.f32.mxu0 0.0
        %3050 = vmatmul.mubr.f32.gmra.mxu0 %v2941
        %v3051 = vpop.f32.mrf.mxu0
        %v3052 = vadd.f32 0.0, %v3051
        %v3053 = vpop.f32.mrf.mxu0
        %3054 = vmatprep.mubr.f32.mxu0 0.0
        %3055 = vmatmul.mubr.f32.gmra.mxu0 %v2943
        %v3056 = vpop.f32.mrf.mxu0
        %v3057 = vadd.f32 0.0, %v3056
        %v3058 = vpop.f32.mrf.mxu0
        %3059 = vmatprep.mubr.f32.mxu0 0.0
        %3060 = vmatmul.mubr.f32.gmra.mxu0 %v2945
        %v3061 = vpop.f32.mrf.mxu0
        %v3062 = vadd.f32 0.0, %v3061
        %v3063 = vpop.f32.mrf.mxu0
        %3064 = vmatprep.mubr.f32.mxu0 0.0
        %3065 = vmatmul.mubr.f32.gmra.mxu0 %v2947
        %v3066 = vpop.f32.mrf.mxu0
        %v3067 = vadd.f32 0.0, %v3066
        %v3068 = vpop.f32.mrf.mxu0
        %3069 = vmatprep.mubr.f32.mxu0 0.0
        %3070 = vmatmul.mubr.f32.gmra.mxu0 %v2949
        %v3071 = vpop.f32.mrf.mxu0
        %v3072 = vadd.f32 0.0, %v3071
        %v3073 = vpop.f32.mrf.mxu0
        %3074 = vmatprep.mubr.f32.mxu0 0.0
        %3075 = vmatmul.mubr.f32.gmra.mxu0 %v2951
        %v3076 = vpop.f32.mrf.mxu0
        %v3077 = vadd.f32 0.0, %v3076
        %v3078 = vpop.f32.mrf.mxu0
        %3079 = vmatprep.mubr.f32.mxu0 0.0
        %3080 = vmatmul.mubr.f32.gmra.mxu0 %v2953
        %v3081 = vpop.f32.mrf.mxu0
        %v3082 = vadd.f32 0.0, %v3081
        %v3083 = vpop.f32.mrf.mxu0
        %3084 = vmatprep.mubr.f32.mxu0 0.0
        %3085 = vmatmul.mubr.f32.gmra.mxu0 %v2955
        %v3086 = vpop.f32.mrf.mxu0
        %v3087 = vadd.f32 0.0, %v3086
        %v3088 = vpop.f32.mrf.mxu0
        %3089 = vmatprep.mubr.f32.mxu0 0.0
        %3090 = vmatmul.mubr.f32.gmra.mxu0 %v2957
        %v3091 = vpop.f32.mrf.mxu0
        %v3092 = vadd.f32 0.0, %v3091
        %v3093 = vpop.f32.mrf.mxu0
        %3094 = vmatprep.mubr.f32.mxu0 0.0
        %3095 = vmatmul.mubr.f32.gmra.mxu0 %v2959
        %v3096 = vpop.f32.mrf.mxu0
        %v3097 = vadd.f32 0.0, %v3096
        %v3098 = vpop.f32.mrf.mxu0
        %3099 = vmatprep.mubr.f32.mxu0 0.0
        %3100 = vmatmul.mubr.f32.gmra.mxu0 %v2961
        %v3101 = vpop.f32.mrf.mxu0
        %v3102 = vadd.f32 0.0, %v3101
        %v3103 = vpop.f32.mrf.mxu0
        %3104 = vmatprep.mubr.f32.mxu0 0.0
        %3105 = vmatmul.mubr.f32.gmra.mxu0 %v2963
        %v3106 = vpop.f32.mrf.mxu0
        %v3107 = vadd.f32 0.0, %v3106
        %v3108 = vpop.f32.mrf.mxu0
        %3109 = vdwg.mxu0
        %v3110 = vadd.f32 %v2871, %v3032
        %v3111 = vadd.f32 %v2872, %v3037
        %v3112 = vadd.f32 %v2873, %v3042
        %v3113 = vadd.f32 %v2874, %v3047
        %v3114 = vadd.f32 %v2875, %v3052
        %v3115 = vadd.f32 %v2876, %v3057
        %v3116 = vadd.f32 %v2877, %v3062
        %v3117 = vadd.f32 %v2878, %v3067
        %v3118 = vadd.f32 %v2879, %v3072
        %v3119 = vadd.f32 %v2880, %v3077
        %v3120 = vadd.f32 %v2881, %v3082
        %v3121 = vadd.f32 %v2882, %v3087
        %v3122 = vadd.f32 %v2883, %v3092
        %v3123 = vadd.f32 %v2884, %v3097
        %v3124 = vadd.f32 %v2885, %v3102
        %v3125 = vadd.f32 %v2886, %v3107
        %vm3126 = vcmask 1040384
        %v3127 = vrot.slane %v1495, 7
        %v3128 = vrot.slane %v1457, 7
        %v3129 = vsel %vm3126, %v3127, %v3128
        %v3130 = vrot.slane %v1503, 7
        %v3131 = vsel %vm3126, %v3128, %v3130
        %v3132 = vrot.slane %v1496, 7
        %v3133 = vrot.slane %v1460, 7
        %v3134 = vsel %vm3126, %v3132, %v3133
        %v3135 = vrot.slane %v1504, 7
        %v3136 = vsel %vm3126, %v3133, %v3135
        %v3137 = vrot.slane %v1497, 7
        %v3138 = vrot.slane %v1463, 7
        %v3139 = vsel %vm3126, %v3137, %v3138
        %v3140 = vrot.slane %v1505, 7
        %v3141 = vsel %vm3126, %v3138, %v3140
        %v3142 = vrot.slane %v1498, 7
        %v3143 = vrot.slane %v1466, 7
        %v3144 = vsel %vm3126, %v3142, %v3143
        %v3145 = vrot.slane %v1506, 7
        %v3146 = vsel %vm3126, %v3143, %v3145
        %v3147 = vrot.slane %v1499, 7
        %v3148 = vrot.slane %v1469, 7
        %v3149 = vsel %vm3126, %v3147, %v3148
        %v3150 = vrot.slane %v1507, 7
        %v3151 = vsel %vm3126, %v3148, %v3150
        %v3152 = vrot.slane %v1500, 7
        %v3153 = vrot.slane %v1472, 7
        %v3154 = vsel %vm3126, %v3152, %v3153
        %v3155 = vrot.slane %v1508, 7
        %v3156 = vsel %vm3126, %v3153, %v3155
        %v3157 = vrot.slane %v1501, 7
        %v3158 = vrot.slane %v1475, 7
        %v3159 = vsel %vm3126, %v3157, %v3158
        %v3160 = vrot.slane %v1509, 7
        %v3161 = vsel %vm3126, %v3158, %v3160
        %v3162 = vrot.slane %v1502, 7
        %v3163 = vrot.slane %v1478, 7
        %v3164 = vsel %vm3126, %v3162, %v3163
        %v3165 = vrot.slane %v1510, 7
        %v3166 = vsel %vm3126, %v3163, %v3165
        %s3167 = scalar_lea.vmem [#allocation7], 224
        %v3168 = vld [vmem:[%s3167] sm:$0xff]
        %v3169 = vld [vmem:[%s3167 + $0x8] sm:$0xff]
        %v3170 = vld [vmem:[%s3167 + $0x10] sm:$0xff]
        %v3171 = vld [vmem:[%s3167 + $0x18] sm:$0xff]
        %v3172 = vsel %vm1577, %v3129, 0
        %v3174 = vsel %vm1577, %v3131, 0
        %v3176 = vsel %vm1577, %v3134, 0
        %v3178 = vsel %vm1577, %v3136, 0
        %v3180 = vsel %vm1577, %v3139, 0
        %v3182 = vsel %vm1577, %v3141, 0
        %v3184 = vsel %vm1577, %v3144, 0
        %v3186 = vsel %vm1577, %v3146, 0
        %v3188 = vsel %vm1577, %v3149, 0
        %v3190 = vsel %vm1577, %v3151, 0
        %v3192 = vsel %vm1577, %v3154, 0
        %v3194 = vsel %vm1577, %v3156, 0
        %v3196 = vsel %vm1577, %v3159, 0
        %v3198 = vsel %vm1577, %v3161, 0
        %v3200 = vsel %vm1577, %v3164, 0
        %v3202 = vsel %vm1577, %v3166, 0
        %3204 = vmatprep.subr.mxu0 0.0
        %3205 = vmatpush1.msra.mxu0 0.0
        %3206 = vmatprep.subr.mxu0 0.0
        %3207 = vmatpush1.msra.mxu0 0.0
        %3208 = vmatprep.subr.mxu0 0.0
        %3209 = vmatpush1.msra.mxu0 0.0
        %3210 = vmatprep.subr.mxu0 0.0
        %3211 = vmatpush1.msra.mxu0 0.0
        %3212 = vmatprep.subr.mxu0 0.0
        %3213 = vmatpush1.msra.mxu0 0.0
        %3214 = vmatprep.subr.mxu0 0.0
        %3215 = vmatpush1.msra.mxu0 0.0
        %3216 = vmatprep.subr.mxu0 0.0
        %3217 = vmatpush1.msra.mxu0 0.0
        %3218 = vmatprep.subr.mxu0 0.0
        %3219 = vmatpush1.msra.mxu0 0.0
        %3220 = vmatprep.subr.mxu0 0.0
        %3221 = vmatpush1.msra.mxu0 0.0
        %3222 = vmatprep.subr.mxu0 0.0
        %3223 = vmatpush1.msra.mxu0 0.0
        %3224 = vmatprep.subr.mxu0 0.0
        %3225 = vmatpush1.msra.mxu0 0.0
        %3226 = vmatprep.subr.mxu0 0.0
        %3227 = vmatpush1.msra.mxu0 0.0
        %3228 = vmatprep.subr.mxu0 0.0
        %3229 = vmatpush1.msra.mxu0 %v3171
        %3230 = vmatprep.subr.mxu0 0.0
        %3231 = vmatpush1.msra.mxu0 %v3170
        %3232 = vmatprep.subr.mxu0 0.0
        %3233 = vmatpush1.msra.mxu0 %v3169
        %3234 = vmatprep.subr.mxu0 0.0
        %3235 = vmatpush1.msra.mxu0 %v3168
        %3236 = vmatprep.subr.mxu0 0.0
        %3237 = vmatpush2.msra.mxu0 0.0
        %3238 = vmatprep.subr.mxu0 0.0
        %3239 = vmatpush2.msra.mxu0 0.0
        %3240 = vmatprep.subr.mxu0 0.0
        %3241 = vmatpush2.msra.mxu0 0.0
        %3242 = vmatprep.subr.mxu0 0.0
        %3243 = vmatpush2.msra.mxu0 0.0
        %3244 = vmatprep.subr.mxu0 0.0
        %3245 = vmatpush2.msra.mxu0 0.0
        %3246 = vmatprep.subr.mxu0 0.0
        %3247 = vmatpush2.msra.mxu0 0.0
        %3248 = vmatprep.subr.mxu0 0.0
        %3249 = vmatpush2.msra.mxu0 0.0
        %3250 = vmatprep.subr.mxu0 0.0
        %3251 = vmatpush2.msra.mxu0 0.0
        %3252 = vmatprep.subr.mxu0 0.0
        %3253 = vmatpush2.msra.mxu0 0.0
        %3254 = vmatprep.subr.mxu0 0.0
        %3255 = vmatpush2.msra.mxu0 0.0
        %3256 = vmatprep.subr.mxu0 0.0
        %3257 = vmatpush2.msra.mxu0 0.0
        %3258 = vmatprep.subr.mxu0 0.0
        %3259 = vmatpush2.msra.mxu0 0.0
        %3260 = vmatprep.subr.mxu0 0.0
        %3261 = vmatpush2.msra.mxu0 0.0
        %3262 = vmatprep.subr.mxu0 0.0
        %3263 = vmatpush2.msra.mxu0 0.0
        %3264 = vmatprep.subr.mxu0 0.0
        %3265 = vmatpush2.msra.mxu0 0.0
        %3266 = vmatprep.subr.mxu0 0.0
        %3267 = vmatpush2.msra.mxu0 0.0
        %3268 = vmatprep.mubr.f32.mxu0 0.0
        %3269 = vmatmul.mubr.f32.gmra.mxu0 %v3172
        %v3270 = vpop.f32.mrf.mxu0
        %v3271 = vadd.f32 0.0, %v3270
        %v3272 = vpop.f32.mrf.mxu0
        %3273 = vmatprep.mubr.f32.mxu0 0.0
        %3274 = vmatmul.mubr.f32.gmra.mxu0 %v3174
        %v3275 = vpop.f32.mrf.mxu0
        %v3276 = vadd.f32 0.0, %v3275
        %v3277 = vpop.f32.mrf.mxu0
        %3278 = vmatprep.mubr.f32.mxu0 0.0
        %3279 = vmatmul.mubr.f32.gmra.mxu0 %v3176
        %v3280 = vpop.f32.mrf.mxu0
        %v3281 = vadd.f32 0.0, %v3280
        %v3282 = vpop.f32.mrf.mxu0
        %3283 = vmatprep.mubr.f32.mxu0 0.0
        %3284 = vmatmul.mubr.f32.gmra.mxu0 %v3178
        %v3285 = vpop.f32.mrf.mxu0
        %v3286 = vadd.f32 0.0, %v3285
        %v3287 = vpop.f32.mrf.mxu0
        %3288 = vmatprep.mubr.f32.mxu0 0.0
        %3289 = vmatmul.mubr.f32.gmra.mxu0 %v3180
        %v3290 = vpop.f32.mrf.mxu0
        %v3291 = vadd.f32 0.0, %v3290
        %v3292 = vpop.f32.mrf.mxu0
        %3293 = vmatprep.mubr.f32.mxu0 0.0
        %3294 = vmatmul.mubr.f32.gmra.mxu0 %v3182
        %v3295 = vpop.f32.mrf.mxu0
        %v3296 = vadd.f32 0.0, %v3295
        %v3297 = vpop.f32.mrf.mxu0
        %3298 = vmatprep.mubr.f32.mxu0 0.0
        %3299 = vmatmul.mubr.f32.gmra.mxu0 %v3184
        %v3300 = vpop.f32.mrf.mxu0
        %v3301 = vadd.f32 0.0, %v3300
        %v3302 = vpop.f32.mrf.mxu0
        %3303 = vmatprep.mubr.f32.mxu0 0.0
        %3304 = vmatmul.mubr.f32.gmra.mxu0 %v3186
        %v3305 = vpop.f32.mrf.mxu0
        %v3306 = vadd.f32 0.0, %v3305
        %v3307 = vpop.f32.mrf.mxu0
        %3308 = vmatprep.mubr.f32.mxu0 0.0
        %3309 = vmatmul.mubr.f32.gmra.mxu0 %v3188
        %v3310 = vpop.f32.mrf.mxu0
        %v3311 = vadd.f32 0.0, %v3310
        %v3312 = vpop.f32.mrf.mxu0
        %3313 = vmatprep.mubr.f32.mxu0 0.0
        %3314 = vmatmul.mubr.f32.gmra.mxu0 %v3190
        %v3315 = vpop.f32.mrf.mxu0
        %v3316 = vadd.f32 0.0, %v3315
        %v3317 = vpop.f32.mrf.mxu0
        %3318 = vmatprep.mubr.f32.mxu0 0.0
        %3319 = vmatmul.mubr.f32.gmra.mxu0 %v3192
        %v3320 = vpop.f32.mrf.mxu0
        %v3321 = vadd.f32 0.0, %v3320
        %v3322 = vpop.f32.mrf.mxu0
        %3323 = vmatprep.mubr.f32.mxu0 0.0
        %3324 = vmatmul.mubr.f32.gmra.mxu0 %v3194
        %v3325 = vpop.f32.mrf.mxu0
        %v3326 = vadd.f32 0.0, %v3325
        %v3327 = vpop.f32.mrf.mxu0
        %3328 = vmatprep.mubr.f32.mxu0 0.0
        %3329 = vmatmul.mubr.f32.gmra.mxu0 %v3196
        %v3330 = vpop.f32.mrf.mxu0
        %v3331 = vadd.f32 0.0, %v3330
        %v3332 = vpop.f32.mrf.mxu0
        %3333 = vmatprep.mubr.f32.mxu0 0.0
        %3334 = vmatmul.mubr.f32.gmra.mxu0 %v3198
        %v3335 = vpop.f32.mrf.mxu0
        %v3336 = vadd.f32 0.0, %v3335
        %v3337 = vpop.f32.mrf.mxu0
        %3338 = vmatprep.mubr.f32.mxu0 0.0
        %3339 = vmatmul.mubr.f32.gmra.mxu0 %v3200
        %v3340 = vpop.f32.mrf.mxu0
        %v3341 = vadd.f32 0.0, %v3340
        %v3342 = vpop.f32.mrf.mxu0
        %3343 = vmatprep.mubr.f32.mxu0 0.0
        %3344 = vmatmul.mubr.f32.gmra.mxu0 %v3202
        %v3345 = vpop.f32.mrf.mxu0
        %v3346 = vadd.f32 0.0, %v3345
        %v3347 = vpop.f32.mrf.mxu0
        %3348 = vdwg.mxu0
        %v3349 = vadd.f32 %v3110, %v3271
        %v3350 = vadd.f32 %v3111, %v3276
        %v3351 = vadd.f32 %v3112, %v3281
        %v3352 = vadd.f32 %v3113, %v3286
        %v3353 = vadd.f32 %v3114, %v3291
        %v3354 = vadd.f32 %v3115, %v3296
        %v3355 = vadd.f32 %v3116, %v3301
        %v3356 = vadd.f32 %v3117, %v3306
        %v3357 = vadd.f32 %v3118, %v3311
        %v3358 = vadd.f32 %v3119, %v3316
        %v3359 = vadd.f32 %v3120, %v3321
        %v3360 = vadd.f32 %v3121, %v3326
        %v3361 = vadd.f32 %v3122, %v3331
        %v3362 = vadd.f32 %v3123, %v3336
        %v3363 = vadd.f32 %v3124, %v3341
        %v3364 = vadd.f32 %v3125, %v3346
        %s3365 = scalar_lea.vmem [#allocation7], 256
        %v3366 = vld [vmem:[%s3365] sm:$0xff]
        %v3367 = vld [vmem:[%s3365 + $0x8] sm:$0xff]
        %v3368 = vld [vmem:[%s3365 + $0x10] sm:$0xff]
        %v3369 = vld [vmem:[%s3365 + $0x18] sm:$0xff]
        %v3370 = vsel %vm1577, %v1503, 0
        %v3372 = vsel %vm1577, %v1504, 0
        %v3374 = vsel %vm1577, %v1505, 0
        %v3376 = vsel %vm1577, %v1506, 0
        %v3378 = vsel %vm1577, %v1507, 0
        %v3380 = vsel %vm1577, %v1508, 0
        %v3382 = vsel %vm1577, %v1509, 0
        %v3384 = vsel %vm1577, %v1510, 0
        %3386 = vmatprep.subr.mxu0 0.0
        %3387 = vmatpush1.msra.mxu0 0.0
        %3388 = vmatprep.subr.mxu0 0.0
        %3389 = vmatpush1.msra.mxu0 0.0
        %3390 = vmatprep.subr.mxu0 0.0
        %3391 = vmatpush1.msra.mxu0 0.0
        %3392 = vmatprep.subr.mxu0 0.0
        %3393 = vmatpush1.msra.mxu0 0.0
        %3394 = vmatprep.subr.mxu0 0.0
        %3395 = vmatpush1.msra.mxu0 0.0
        %3396 = vmatprep.subr.mxu0 0.0
        %3397 = vmatpush1.msra.mxu0 0.0
        %3398 = vmatprep.subr.mxu0 0.0
        %3399 = vmatpush1.msra.mxu0 0.0
        %3400 = vmatprep.subr.mxu0 0.0
        %3401 = vmatpush1.msra.mxu0 0.0
        %3402 = vmatprep.subr.mxu0 0.0
        %3403 = vmatpush1.msra.mxu0 0.0
        %3404 = vmatprep.subr.mxu0 0.0
        %3405 = vmatpush1.msra.mxu0 0.0
        %3406 = vmatprep.subr.mxu0 0.0
        %3407 = vmatpush1.msra.mxu0 0.0
        %3408 = vmatprep.subr.mxu0 0.0
        %3409 = vmatpush1.msra.mxu0 0.0
        %3410 = vmatprep.subr.mxu0 0.0
        %3411 = vmatpush1.msra.mxu0 %v3369
        %3412 = vmatprep.subr.mxu0 0.0
        %3413 = vmatpush1.msra.mxu0 %v3368
        %3414 = vmatprep.subr.mxu0 0.0
        %3415 = vmatpush1.msra.mxu0 %v3367
        %3416 = vmatprep.subr.mxu0 0.0
        %3417 = vmatpush1.msra.mxu0 %v3366
        %3418 = vmatprep.subr.mxu0 0.0
        %3419 = vmatpush2.msra.mxu0 0.0
        %3420 = vmatprep.subr.mxu0 0.0
        %3421 = vmatpush2.msra.mxu0 0.0
        %3422 = vmatprep.subr.mxu0 0.0
        %3423 = vmatpush2.msra.mxu0 0.0
        %3424 = vmatprep.subr.mxu0 0.0
        %3425 = vmatpush2.msra.mxu0 0.0
        %3426 = vmatprep.subr.mxu0 0.0
        %3427 = vmatpush2.msra.mxu0 0.0
        %3428 = vmatprep.subr.mxu0 0.0
        %3429 = vmatpush2.msra.mxu0 0.0
        %3430 = vmatprep.subr.mxu0 0.0
        %3431 = vmatpush2.msra.mxu0 0.0
        %3432 = vmatprep.subr.mxu0 0.0
        %3433 = vmatpush2.msra.mxu0 0.0
        %3434 = vmatprep.subr.mxu0 0.0
        %3435 = vmatpush2.msra.mxu0 0.0
        %3436 = vmatprep.subr.mxu0 0.0
        %3437 = vmatpush2.msra.mxu0 0.0
        %3438 = vmatprep.subr.mxu0 0.0
        %3439 = vmatpush2.msra.mxu0 0.0
        %3440 = vmatprep.subr.mxu0 0.0
        %3441 = vmatpush2.msra.mxu0 0.0
        %3442 = vmatprep.subr.mxu0 0.0
        %3443 = vmatpush2.msra.mxu0 0.0
        %3444 = vmatprep.subr.mxu0 0.0
        %3445 = vmatpush2.msra.mxu0 0.0
        %3446 = vmatprep.subr.mxu0 0.0
        %3447 = vmatpush2.msra.mxu0 0.0
        %3448 = vmatprep.subr.mxu0 0.0
        %3449 = vmatpush2.msra.mxu0 0.0
        %3450 = vmatprep.mubr.f32.mxu0 0.0
        %3451 = vmatmul.mubr.f32.gmra.mxu0 %v1757
        %v3452 = vpop.f32.mrf.mxu0
        %v3453 = vadd.f32 0.0, %v3452
        %v3454 = vpop.f32.mrf.mxu0
        %3455 = vmatprep.mubr.f32.mxu0 0.0
        %3456 = vmatmul.mubr.f32.gmra.mxu0 %v3370
        %v3457 = vpop.f32.mrf.mxu0
        %v3458 = vadd.f32 0.0, %v3457
        %v3459 = vpop.f32.mrf.mxu0
        %3460 = vmatprep.mubr.f32.mxu0 0.0
        %3461 = vmatmul.mubr.f32.gmra.mxu0 %v1761
        %v3462 = vpop.f32.mrf.mxu0
        %v3463 = vadd.f32 0.0, %v3462
        %v3464 = vpop.f32.mrf.mxu0
        %3465 = vmatprep.mubr.f32.mxu0 0.0
        %3466 = vmatmul.mubr.f32.gmra.mxu0 %v3372
        %v3467 = vpop.f32.mrf.mxu0
        %v3468 = vadd.f32 0.0, %v3467
        %v3469 = vpop.f32.mrf.mxu0
        %3470 = vmatprep.mubr.f32.mxu0 0.0
        %3471 = vmatmul.mubr.f32.gmra.mxu0 %v1765
        %v3472 = vpop.f32.mrf.mxu0
        %v3473 = vadd.f32 0.0, %v3472
        %v3474 = vpop.f32.mrf.mxu0
        %3475 = vmatprep.mubr.f32.mxu0 0.0
        %3476 = vmatmul.mubr.f32.gmra.mxu0 %v3374
        %v3477 = vpop.f32.mrf.mxu0
        %v3478 = vadd.f32 0.0, %v3477
        %v3479 = vpop.f32.mrf.mxu0
        %3480 = vmatprep.mubr.f32.mxu0 0.0
        %3481 = vmatmul.mubr.f32.gmra.mxu0 %v1769
        %v3482 = vpop.f32.mrf.mxu0
        %v3483 = vadd.f32 0.0, %v3482
        %v3484 = vpop.f32.mrf.mxu0
        %3485 = vmatprep.mubr.f32.mxu0 0.0
        %3486 = vmatmul.mubr.f32.gmra.mxu0 %v3376
        %v3487 = vpop.f32.mrf.mxu0
        %v3488 = vadd.f32 0.0, %v3487
        %v3489 = vpop.f32.mrf.mxu0
        %3490 = vmatprep.mubr.f32.mxu0 0.0
        %3491 = vmatmul.mubr.f32.gmra.mxu0 %v1773
        %v3492 = vpop.f32.mrf.mxu0
        %v3493 = vadd.f32 0.0, %v3492
        %v3494 = vpop.f32.mrf.mxu0
        %3495 = vmatprep.mubr.f32.mxu0 0.0
        %3496 = vmatmul.mubr.f32.gmra.mxu0 %v3378
        %v3497 = vpop.f32.mrf.mxu0
        %v3498 = vadd.f32 0.0, %v3497
        %v3499 = vpop.f32.mrf.mxu0
        %3500 = vmatprep.mubr.f32.mxu0 0.0
        %3501 = vmatmul.mubr.f32.gmra.mxu0 %v1777
        %v3502 = vpop.f32.mrf.mxu0
        %v3503 = vadd.f32 0.0, %v3502
        %v3504 = vpop.f32.mrf.mxu0
        %3505 = vmatprep.mubr.f32.mxu0 0.0
        %3506 = vmatmul.mubr.f32.gmra.mxu0 %v3380
        %v3507 = vpop.f32.mrf.mxu0
        %v3508 = vadd.f32 0.0, %v3507
        %v3509 = vpop.f32.mrf.mxu0
        %3510 = vmatprep.mubr.f32.mxu0 0.0
        %3511 = vmatmul.mubr.f32.gmra.mxu0 %v1781
        %v3512 = vpop.f32.mrf.mxu0
        %v3513 = vadd.f32 0.0, %v3512
        %v3514 = vpop.f32.mrf.mxu0
        %3515 = vmatprep.mubr.f32.mxu0 0.0
        %3516 = vmatmul.mubr.f32.gmra.mxu0 %v3382
        %v3517 = vpop.f32.mrf.mxu0
        %v3518 = vadd.f32 0.0, %v3517
        %v3519 = vpop.f32.mrf.mxu0
        %3520 = vmatprep.mubr.f32.mxu0 0.0
        %3521 = vmatmul.mubr.f32.gmra.mxu0 %v1785
        %v3522 = vpop.f32.mrf.mxu0
        %v3523 = vadd.f32 0.0, %v3522
        %v3524 = vpop.f32.mrf.mxu0
        %3525 = vmatprep.mubr.f32.mxu0 0.0
        %3526 = vmatmul.mubr.f32.gmra.mxu0 %v3384
        %v3527 = vpop.f32.mrf.mxu0
        %v3528 = vadd.f32 0.0, %v3527
        %v3529 = vpop.f32.mrf.mxu0
        %3530 = vdwg.mxu0
        %v3531 = vadd.f32 %v3349, %v3453
        %v3532 = vadd.f32 %v3350, %v3458
        %v3533 = vadd.f32 %v3351, %v3463
        %v3534 = vadd.f32 %v3352, %v3468
        %v3535 = vadd.f32 %v3353, %v3473
        %v3536 = vadd.f32 %v3354, %v3478
        %v3537 = vadd.f32 %v3355, %v3483
        %v3538 = vadd.f32 %v3356, %v3488
        %v3539 = vadd.f32 %v3357, %v3493
        %v3540 = vadd.f32 %v3358, %v3498
        %v3541 = vadd.f32 %v3359, %v3503
        %v3542 = vadd.f32 %v3360, %v3508
        %v3543 = vadd.f32 %v3361, %v3513
        %v3544 = vadd.f32 %v3362, %v3518
        %v3545 = vadd.f32 %v3363, %v3523
        %v3546 = vadd.f32 %v3364, %v3528
        %v3548 = vrot.slane 0.0, 1
        %v3549 = vsel %vm1531, %v1535, %v3548
        %v3550 = vsel %vm1531, %v1540, %v3548
        %v3551 = vsel %vm1531, %v1545, %v3548
        %v3552 = vsel %vm1531, %v1550, %v3548
        %v3553 = vsel %vm1531, %v1555, %v3548
        %v3554 = vsel %vm1531, %v1560, %v3548
        %v3555 = vsel %vm1531, %v1565, %v3548
        %v3556 = vsel %vm1531, %v1570, %v3548
        %s3557 = scalar_lea.vmem [#allocation7], 288
        %v3558 = vld [vmem:[%s3557] sm:$0xff]
        %v3559 = vld [vmem:[%s3557 + $0x8] sm:$0xff]
        %v3560 = vld [vmem:[%s3557 + $0x10] sm:$0xff]
        %v3561 = vld [vmem:[%s3557 + $0x18] sm:$0xff]
        %v3562 = vsel %vm1577, %v3549, 0
        %v3564 = vsel %vm1577, %v3550, 0
        %v3566 = vsel %vm1577, %v3551, 0
        %v3568 = vsel %vm1577, %v3552, 0
        %v3570 = vsel %vm1577, %v3553, 0
        %v3572 = vsel %vm1577, %v3554, 0
        %v3574 = vsel %vm1577, %v3555, 0
        %v3576 = vsel %vm1577, %v3556, 0
        %3578 = vmatprep.subr.mxu0 0.0
        %3579 = vmatpush1.msra.mxu0 0.0
        %3580 = vmatprep.subr.mxu0 0.0
        %3581 = vmatpush1.msra.mxu0 0.0
        %3582 = vmatprep.subr.mxu0 0.0
        %3583 = vmatpush1.msra.mxu0 0.0
        %3584 = vmatprep.subr.mxu0 0.0
        %3585 = vmatpush1.msra.mxu0 0.0
        %3586 = vmatprep.subr.mxu0 0.0
        %3587 = vmatpush1.msra.mxu0 0.0
        %3588 = vmatprep.subr.mxu0 0.0
        %3589 = vmatpush1.msra.mxu0 0.0
        %3590 = vmatprep.subr.mxu0 0.0
        %3591 = vmatpush1.msra.mxu0 0.0
        %3592 = vmatprep.subr.mxu0 0.0
        %3593 = vmatpush1.msra.mxu0 0.0
        %3594 = vmatprep.subr.mxu0 0.0
        %3595 = vmatpush1.msra.mxu0 0.0
        %3596 = vmatprep.subr.mxu0 0.0
        %3597 = vmatpush1.msra.mxu0 0.0
        %3598 = vmatprep.subr.mxu0 0.0
        %3599 = vmatpush1.msra.mxu0 0.0
        %3600 = vmatprep.subr.mxu0 0.0
        %3601 = vmatpush1.msra.mxu0 0.0
        %3602 = vmatprep.subr.mxu0 0.0
        %3603 = vmatpush1.msra.mxu0 %v3561
        %3604 = vmatprep.subr.mxu0 0.0
        %3605 = vmatpush1.msra.mxu0 %v3560
        %3606 = vmatprep.subr.mxu0 0.0
        %3607 = vmatpush1.msra.mxu0 %v3559
        %3608 = vmatprep.subr.mxu0 0.0
        %3609 = vmatpush1.msra.mxu0 %v3558
        %3610 = vmatprep.subr.mxu0 0.0
        %3611 = vmatpush2.msra.mxu0 0.0
        %3612 = vmatprep.subr.mxu0 0.0
        %3613 = vmatpush2.msra.mxu0 0.0
        %3614 = vmatprep.subr.mxu0 0.0
        %3615 = vmatpush2.msra.mxu0 0.0
        %3616 = vmatprep.subr.mxu0 0.0
        %3617 = vmatpush2.msra.mxu0 0.0
        %3618 = vmatprep.subr.mxu0 0.0
        %3619 = vmatpush2.msra.mxu0 0.0
        %3620 = vmatprep.subr.mxu0 0.0
        %3621 = vmatpush2.msra.mxu0 0.0
        %3622 = vmatprep.subr.mxu0 0.0
        %3623 = vmatpush2.msra.mxu0 0.0
        %3624 = vmatprep.subr.mxu0 0.0
        %3625 = vmatpush2.msra.mxu0 0.0
        %3626 = vmatprep.subr.mxu0 0.0
        %3627 = vmatpush2.msra.mxu0 0.0
        %3628 = vmatprep.subr.mxu0 0.0
        %3629 = vmatpush2.msra.mxu0 0.0
        %3630 = vmatprep.subr.mxu0 0.0
        %3631 = vmatpush2.msra.mxu0 0.0
        %3632 = vmatprep.subr.mxu0 0.0
        %3633 = vmatpush2.msra.mxu0 0.0
        %3634 = vmatprep.subr.mxu0 0.0
        %3635 = vmatpush2.msra.mxu0 0.0
        %3636 = vmatprep.subr.mxu0 0.0
        %3637 = vmatpush2.msra.mxu0 0.0
        %3638 = vmatprep.subr.mxu0 0.0
        %3639 = vmatpush2.msra.mxu0 0.0
        %3640 = vmatprep.subr.mxu0 0.0
        %3641 = vmatpush2.msra.mxu0 0.0
        %3642 = vmatprep.mubr.f32.mxu0 0.0
        %3643 = vmatmul.mubr.f32.gmra.mxu0 %v1580
        %v3644 = vpop.f32.mrf.mxu0
        %v3645 = vadd.f32 0.0, %v3644
        %v3646 = vpop.f32.mrf.mxu0
        %3647 = vmatprep.mubr.f32.mxu0 0.0
        %3648 = vmatmul.mubr.f32.gmra.mxu0 %v3562
        %v3649 = vpop.f32.mrf.mxu0
        %v3650 = vadd.f32 0.0, %v3649
        %v3651 = vpop.f32.mrf.mxu0
        %3652 = vmatprep.mubr.f32.mxu0 0.0
        %3653 = vmatmul.mubr.f32.gmra.mxu0 %v1584
        %v3654 = vpop.f32.mrf.mxu0
        %v3655 = vadd.f32 0.0, %v3654
        %v3656 = vpop.f32.mrf.mxu0
        %3657 = vmatprep.mubr.f32.mxu0 0.0
        %3658 = vmatmul.mubr.f32.gmra.mxu0 %v3564
        %v3659 = vpop.f32.mrf.mxu0
        %v3660 = vadd.f32 0.0, %v3659
        %v3661 = vpop.f32.mrf.mxu0
        %3662 = vmatprep.mubr.f32.mxu0 0.0
        %3663 = vmatmul.mubr.f32.gmra.mxu0 %v1588
        %v3664 = vpop.f32.mrf.mxu0
        %v3665 = vadd.f32 0.0, %v3664
        %v3666 = vpop.f32.mrf.mxu0
        %3667 = vmatprep.mubr.f32.mxu0 0.0
        %3668 = vmatmul.mubr.f32.gmra.mxu0 %v3566
        %v3669 = vpop.f32.mrf.mxu0
        %v3670 = vadd.f32 0.0, %v3669
        %v3671 = vpop.f32.mrf.mxu0
        %3672 = vmatprep.mubr.f32.mxu0 0.0
        %3673 = vmatmul.mubr.f32.gmra.mxu0 %v1592
        %v3674 = vpop.f32.mrf.mxu0
        %v3675 = vadd.f32 0.0, %v3674
        %v3676 = vpop.f32.mrf.mxu0
        %3677 = vmatprep.mubr.f32.mxu0 0.0
        %3678 = vmatmul.mubr.f32.gmra.mxu0 %v3568
        %v3679 = vpop.f32.mrf.mxu0
        %v3680 = vadd.f32 0.0, %v3679
        %v3681 = vpop.f32.mrf.mxu0
        %3682 = vmatprep.mubr.f32.mxu0 0.0
        %3683 = vmatmul.mubr.f32.gmra.mxu0 %v1596
        %v3684 = vpop.f32.mrf.mxu0
        %v3685 = vadd.f32 0.0, %v3684
        %v3686 = vpop.f32.mrf.mxu0
        %3687 = vmatprep.mubr.f32.mxu0 0.0
        %3688 = vmatmul.mubr.f32.gmra.mxu0 %v3570
        %v3689 = vpop.f32.mrf.mxu0
        %v3690 = vadd.f32 0.0, %v3689
        %v3691 = vpop.f32.mrf.mxu0
        %3692 = vmatprep.mubr.f32.mxu0 0.0
        %3693 = vmatmul.mubr.f32.gmra.mxu0 %v1600
        %v3694 = vpop.f32.mrf.mxu0
        %v3695 = vadd.f32 0.0, %v3694
        %v3696 = vpop.f32.mrf.mxu0
        %3697 = vmatprep.mubr.f32.mxu0 0.0
        %3698 = vmatmul.mubr.f32.gmra.mxu0 %v3572
        %v3699 = vpop.f32.mrf.mxu0
        %v3700 = vadd.f32 0.0, %v3699
        %v3701 = vpop.f32.mrf.mxu0
        %3702 = vmatprep.mubr.f32.mxu0 0.0
        %3703 = vmatmul.mubr.f32.gmra.mxu0 %v1604
        %v3704 = vpop.f32.mrf.mxu0
        %v3705 = vadd.f32 0.0, %v3704
        %v3706 = vpop.f32.mrf.mxu0
        %3707 = vmatprep.mubr.f32.mxu0 0.0
        %3708 = vmatmul.mubr.f32.gmra.mxu0 %v3574
        %v3709 = vpop.f32.mrf.mxu0
        %v3710 = vadd.f32 0.0, %v3709
        %v3711 = vpop.f32.mrf.mxu0
        %3712 = vmatprep.mubr.f32.mxu0 0.0
        %3713 = vmatmul.mubr.f32.gmra.mxu0 %v1608
        %v3714 = vpop.f32.mrf.mxu0
        %v3715 = vadd.f32 0.0, %v3714
        %v3716 = vpop.f32.mrf.mxu0
        %3717 = vmatprep.mubr.f32.mxu0 0.0
        %3718 = vmatmul.mubr.f32.gmra.mxu0 %v3576
        %v3719 = vpop.f32.mrf.mxu0
        %v3720 = vadd.f32 0.0, %v3719
        %v3721 = vpop.f32.mrf.mxu0
        %3722 = vdwg.mxu0
        %v3723 = vadd.f32 %v3531, %v3645
        %v3724 = vadd.f32 %v3532, %v3650
        %v3725 = vadd.f32 %v3533, %v3655
        %v3726 = vadd.f32 %v3534, %v3660
        %v3727 = vadd.f32 %v3535, %v3665
        %v3728 = vadd.f32 %v3536, %v3670
        %v3729 = vadd.f32 %v3537, %v3675
        %v3730 = vadd.f32 %v3538, %v3680
        %v3731 = vadd.f32 %v3539, %v3685
        %v3732 = vadd.f32 %v3540, %v3690
        %v3733 = vadd.f32 %v3541, %v3695
        %v3734 = vadd.f32 %v3542, %v3700
        %v3735 = vadd.f32 %v3543, %v3705
        %v3736 = vadd.f32 %v3544, %v3710
        %v3737 = vadd.f32 %v3545, %v3715
        %v3738 = vadd.f32 %v3546, %v3720
        %v3739 = vrot.slane 0.0, 2
        %v3740 = vsel %vm1932, %v1936, %v3739
        %v3741 = vsel %vm1932, %v1941, %v3739
        %v3742 = vsel %vm1932, %v1946, %v3739
        %v3743 = vsel %vm1932, %v1951, %v3739
        %v3744 = vsel %vm1932, %v1956, %v3739
        %v3745 = vsel %vm1932, %v1961, %v3739
        %v3746 = vsel %vm1932, %v1966, %v3739
        %v3747 = vsel %vm1932, %v1971, %v3739
        %s3748 = scalar_lea.vmem [#allocation7], 320
        %v3749 = vld [vmem:[%s3748] sm:$0xff]
        %v3750 = vld [vmem:[%s3748 + $0x8] sm:$0xff]
        %v3751 = vld [vmem:[%s3748 + $0x10] sm:$0xff]
        %v3752 = vld [vmem:[%s3748 + $0x18] sm:$0xff]
        %v3753 = vsel %vm1577, %v3740, 0
        %v3755 = vsel %vm1577, %v3741, 0
        %v3757 = vsel %vm1577, %v3742, 0
        %v3759 = vsel %vm1577, %v3743, 0
        %v3761 = vsel %vm1577, %v3744, 0
        %v3763 = vsel %vm1577, %v3745, 0
        %v3765 = vsel %vm1577, %v3746, 0
        %v3767 = vsel %vm1577, %v3747, 0
        %3769 = vmatprep.subr.mxu0 0.0
        %3770 = vmatpush1.msra.mxu0 0.0
        %3771 = vmatprep.subr.mxu0 0.0
        %3772 = vmatpush1.msra.mxu0 0.0
        %3773 = vmatprep.subr.mxu0 0.0
        %3774 = vmatpush1.msra.mxu0 0.0
        %3775 = vmatprep.subr.mxu0 0.0
        %3776 = vmatpush1.msra.mxu0 0.0
        %3777 = vmatprep.subr.mxu0 0.0
        %3778 = vmatpush1.msra.mxu0 0.0
        %3779 = vmatprep.subr.mxu0 0.0
        %3780 = vmatpush1.msra.mxu0 0.0
        %3781 = vmatprep.subr.mxu0 0.0
        %3782 = vmatpush1.msra.mxu0 0.0
        %3783 = vmatprep.subr.mxu0 0.0
        %3784 = vmatpush1.msra.mxu0 0.0
        %3785 = vmatprep.subr.mxu0 0.0
        %3786 = vmatpush1.msra.mxu0 0.0
        %3787 = vmatprep.subr.mxu0 0.0
        %3788 = vmatpush1.msra.mxu0 0.0
        %3789 = vmatprep.subr.mxu0 0.0
        %3790 = vmatpush1.msra.mxu0 0.0
        %3791 = vmatprep.subr.mxu0 0.0
        %3792 = vmatpush1.msra.mxu0 0.0
        %3793 = vmatprep.subr.mxu0 0.0
        %3794 = vmatpush1.msra.mxu0 %v3752
        %3795 = vmatprep.subr.mxu0 0.0
        %3796 = vmatpush1.msra.mxu0 %v3751
        %3797 = vmatprep.subr.mxu0 0.0
        %3798 = vmatpush1.msra.mxu0 %v3750
        %3799 = vmatprep.subr.mxu0 0.0
        %3800 = vmatpush1.msra.mxu0 %v3749
        %3801 = vmatprep.subr.mxu0 0.0
        %3802 = vmatpush2.msra.mxu0 0.0
        %3803 = vmatprep.subr.mxu0 0.0
        %3804 = vmatpush2.msra.mxu0 0.0
        %3805 = vmatprep.subr.mxu0 0.0
        %3806 = vmatpush2.msra.mxu0 0.0
        %3807 = vmatprep.subr.mxu0 0.0
        %3808 = vmatpush2.msra.mxu0 0.0
        %3809 = vmatprep.subr.mxu0 0.0
        %3810 = vmatpush2.msra.mxu0 0.0
        %3811 = vmatprep.subr.mxu0 0.0
        %3812 = vmatpush2.msra.mxu0 0.0
        %3813 = vmatprep.subr.mxu0 0.0
        %3814 = vmatpush2.msra.mxu0 0.0
        %3815 = vmatprep.subr.mxu0 0.0
        %3816 = vmatpush2.msra.mxu0 0.0
        %3817 = vmatprep.subr.mxu0 0.0
        %3818 = vmatpush2.msra.mxu0 0.0
        %3819 = vmatprep.subr.mxu0 0.0
        %3820 = vmatpush2.msra.mxu0 0.0
        %3821 = vmatprep.subr.mxu0 0.0
        %3822 = vmatpush2.msra.mxu0 0.0
        %3823 = vmatprep.subr.mxu0 0.0
        %3824 = vmatpush2.msra.mxu0 0.0
        %3825 = vmatprep.subr.mxu0 0.0
        %3826 = vmatpush2.msra.mxu0 0.0
        %3827 = vmatprep.subr.mxu0 0.0
        %3828 = vmatpush2.msra.mxu0 0.0
        %3829 = vmatprep.subr.mxu0 0.0
        %3830 = vmatpush2.msra.mxu0 0.0
        %3831 = vmatprep.subr.mxu0 0.0
        %3832 = vmatpush2.msra.mxu0 0.0
        %3833 = vmatprep.mubr.f32.mxu0 0.0
        %3834 = vmatmul.mubr.f32.gmra.mxu0 %v1980
        %v3835 = vpop.f32.mrf.mxu0
        %v3836 = vadd.f32 0.0, %v3835
        %v3837 = vpop.f32.mrf.mxu0
        %3838 = vmatprep.mubr.f32.mxu0 0.0
        %3839 = vmatmul.mubr.f32.gmra.mxu0 %v3753
        %v3840 = vpop.f32.mrf.mxu0
        %v3841 = vadd.f32 0.0, %v3840
        %v3842 = vpop.f32.mrf.mxu0
        %3843 = vmatprep.mubr.f32.mxu0 0.0
        %3844 = vmatmul.mubr.f32.gmra.mxu0 %v1984
        %v3845 = vpop.f32.mrf.mxu0
        %v3846 = vadd.f32 0.0, %v3845
        %v3847 = vpop.f32.mrf.mxu0
        %3848 = vmatprep.mubr.f32.mxu0 0.0
        %3849 = vmatmul.mubr.f32.gmra.mxu0 %v3755
        %v3850 = vpop.f32.mrf.mxu0
        %v3851 = vadd.f32 0.0, %v3850
        %v3852 = vpop.f32.mrf.mxu0
        %3853 = vmatprep.mubr.f32.mxu0 0.0
        %3854 = vmatmul.mubr.f32.gmra.mxu0 %v1988
        %v3855 = vpop.f32.mrf.mxu0
        %v3856 = vadd.f32 0.0, %v3855
        %v3857 = vpop.f32.mrf.mxu0
        %3858 = vmatprep.mubr.f32.mxu0 0.0
        %3859 = vmatmul.mubr.f32.gmra.mxu0 %v3757
        %v3860 = vpop.f32.mrf.mxu0
        %v3861 = vadd.f32 0.0, %v3860
        %v3862 = vpop.f32.mrf.mxu0
        %3863 = vmatprep.mubr.f32.mxu0 0.0
        %3864 = vmatmul.mubr.f32.gmra.mxu0 %v1992
        %v3865 = vpop.f32.mrf.mxu0
        %v3866 = vadd.f32 0.0, %v3865
        %v3867 = vpop.f32.mrf.mxu0
        %3868 = vmatprep.mubr.f32.mxu0 0.0
        %3869 = vmatmul.mubr.f32.gmra.mxu0 %v3759
        %v3870 = vpop.f32.mrf.mxu0
        %v3871 = vadd.f32 0.0, %v3870
        %v3872 = vpop.f32.mrf.mxu0
        %3873 = vmatprep.mubr.f32.mxu0 0.0
        %3874 = vmatmul.mubr.f32.gmra.mxu0 %v1996
        %v3875 = vpop.f32.mrf.mxu0
        %v3876 = vadd.f32 0.0, %v3875
        %v3877 = vpop.f32.mrf.mxu0
        %3878 = vmatprep.mubr.f32.mxu0 0.0
        %3879 = vmatmul.mubr.f32.gmra.mxu0 %v3761
        %v3880 = vpop.f32.mrf.mxu0
        %v3881 = vadd.f32 0.0, %v3880
        %v3882 = vpop.f32.mrf.mxu0
        %3883 = vmatprep.mubr.f32.mxu0 0.0
        %3884 = vmatmul.mubr.f32.gmra.mxu0 %v2000
        %v3885 = vpop.f32.mrf.mxu0
        %v3886 = vadd.f32 0.0, %v3885
        %v3887 = vpop.f32.mrf.mxu0
        %3888 = vmatprep.mubr.f32.mxu0 0.0
        %3889 = vmatmul.mubr.f32.gmra.mxu0 %v3763
        %v3890 = vpop.f32.mrf.mxu0
        %v3891 = vadd.f32 0.0, %v3890
        %v3892 = vpop.f32.mrf.mxu0
        %3893 = vmatprep.mubr.f32.mxu0 0.0
        %3894 = vmatmul.mubr.f32.gmra.mxu0 %v2004
        %v3895 = vpop.f32.mrf.mxu0
        %v3896 = vadd.f32 0.0, %v3895
        %v3897 = vpop.f32.mrf.mxu0
        %3898 = vmatprep.mubr.f32.mxu0 0.0
        %3899 = vmatmul.mubr.f32.gmra.mxu0 %v3765
        %v3900 = vpop.f32.mrf.mxu0
        %v3901 = vadd.f32 0.0, %v3900
        %v3902 = vpop.f32.mrf.mxu0
        %3903 = vmatprep.mubr.f32.mxu0 0.0
        %3904 = vmatmul.mubr.f32.gmra.mxu0 %v2008
        %v3905 = vpop.f32.mrf.mxu0
        %v3906 = vadd.f32 0.0, %v3905
        %v3907 = vpop.f32.mrf.mxu0
        %3908 = vmatprep.mubr.f32.mxu0 0.0
        %3909 = vmatmul.mubr.f32.gmra.mxu0 %v3767
        %v3910 = vpop.f32.mrf.mxu0
        %v3911 = vadd.f32 0.0, %v3910
        %v3912 = vpop.f32.mrf.mxu0
        %3913 = vdwg.mxu0
        %v3914 = vadd.f32 %v3723, %v3836
        %v3915 = vadd.f32 %v3724, %v3841
        %v3916 = vadd.f32 %v3725, %v3846
        %v3917 = vadd.f32 %v3726, %v3851
        %v3918 = vadd.f32 %v3727, %v3856
        %v3919 = vadd.f32 %v3728, %v3861
        %v3920 = vadd.f32 %v3729, %v3866
        %v3921 = vadd.f32 %v3730, %v3871
        %v3922 = vadd.f32 %v3731, %v3876
        %v3923 = vadd.f32 %v3732, %v3881
        %v3924 = vadd.f32 %v3733, %v3886
        %v3925 = vadd.f32 %v3734, %v3891
        %v3926 = vadd.f32 %v3735, %v3896
        %v3927 = vadd.f32 %v3736, %v3901
        %v3928 = vadd.f32 %v3737, %v3906
        %v3929 = vadd.f32 %v3738, %v3911
        %v3930 = vld [vmem:[%s4] sm:$0x1]
        %v3932 = vlaneseq
        %v3933 = vshrl.u32 %v3932, 7
        %v3934 = vsub.s32 0, %v3933
        %v3935 = vrot.slane %v3930, %v3934
        %v3937 = vadd.f32 %v3914, %v3935
        %v3938 = vadd.f32 %v3915, %v3935
        %v3939 = vadd.f32 %v3916, %v3935
        %v3940 = vadd.f32 %v3917, %v3935
        %v3941 = vadd.f32 %v3918, %v3935
        %v3942 = vadd.f32 %v3919, %v3935
        %v3943 = vadd.f32 %v3920, %v3935
        %v3944 = vadd.f32 %v3921, %v3935
        %v3945 = vadd.f32 %v3922, %v3935
        %v3946 = vadd.f32 %v3923, %v3935
        %v3947 = vadd.f32 %v3924, %v3935
        %v3948 = vadd.f32 %v3925, %v3935
        %v3949 = vadd.f32 %v3926, %v3935
        %v3950 = vadd.f32 %v3927, %v3935
        %v3951 = vadd.f32 %v3928, %v3935
        %v3952 = vadd.f32 %v3929, %v3935
        %v3953 = vmax.f32 %v3937, 0.0
        %v3954 = vmax.f32 %v3938, 0.0
        %v3955 = vmax.f32 %v3939, 0.0
        %v3956 = vmax.f32 %v3940, 0.0
        %v3957 = vmax.f32 %v3941, 0.0
        %v3958 = vmax.f32 %v3942, 0.0
        %v3959 = vmax.f32 %v3943, 0.0
        %v3960 = vmax.f32 %v3944, 0.0
        %v3961 = vmax.f32 %v3945, 0.0
        %v3962 = vmax.f32 %v3946, 0.0
        %v3963 = vmax.f32 %v3947, 0.0
        %v3964 = vmax.f32 %v3948, 0.0
        %v3965 = vmax.f32 %v3949, 0.0
        %v3966 = vmax.f32 %v3950, 0.0
        %v3967 = vmax.f32 %v3951, 0.0
        %v3968 = vmax.f32 %v3952, 0.0
        %v3969 = vsel %vm1577, %v3953, 0.0
        %v3970 = vsel %vm1577, %v3954, 0.0
        %v3971 = vadd.f32 %v3969, %v3970
        %v3972 = vrot.slane %v3971, 4
        %v3973 = vadd.f32 %v3971, %v3972
        %v3974 = vrot.slane %v3973, 2
        %v3975 = vadd.f32 %v3973, %v3974
        %v3976 = vrot.slane %v3975, 1
        %v3977 = vadd.f32 %v3975, %v3976
        %v3978 = vsel %vm1577, %v3955, 0.0
        %v3979 = vsel %vm1577, %v3956, 0.0
        %v3980 = vadd.f32 %v3978, %v3979
        %v3981 = vrot.slane %v3980, 4
        %v3982 = vadd.f32 %v3980, %v3981
        %v3983 = vrot.slane %v3982, 2
        %v3984 = vadd.f32 %v3982, %v3983
        %v3985 = vrot.slane %v3984, 1
        %v3986 = vadd.f32 %v3984, %v3985
        %v3987 = vsel %vm1577, %v3957, 0.0
        %v3988 = vsel %vm1577, %v3958, 0.0
        %v3989 = vadd.f32 %v3987, %v3988
        %v3990 = vrot.slane %v3989, 4
        %v3991 = vadd.f32 %v3989, %v3990
        %v3992 = vrot.slane %v3991, 2
        %v3993 = vadd.f32 %v3991, %v3992
        %v3994 = vrot.slane %v3993, 1
        %v3995 = vadd.f32 %v3993, %v3994
        %v3996 = vsel %vm1577, %v3959, 0.0
        %v3997 = vsel %vm1577, %v3960, 0.0
        %v3998 = vadd.f32 %v3996, %v3997
        %v3999 = vrot.slane %v3998, 4
        %v4000 = vadd.f32 %v3998, %v3999
        %v4001 = vrot.slane %v4000, 2
        %v4002 = vadd.f32 %v4000, %v4001
        %v4003 = vrot.slane %v4002, 1
        %v4004 = vadd.f32 %v4002, %v4003
        %v4005 = vsel %vm1577, %v3961, 0.0
        %v4006 = vsel %vm1577, %v3962, 0.0
        %v4007 = vadd.f32 %v4005, %v4006
        %v4008 = vrot.slane %v4007, 4
        %v4009 = vadd.f32 %v4007, %v4008
        %v4010 = vrot.slane %v4009, 2
        %v4011 = vadd.f32 %v4009, %v4010
        %v4012 = vrot.slane %v4011, 1
        %v4013 = vadd.f32 %v4011, %v4012
        %v4014 = vsel %vm1577, %v3963, 0.0
        %v4015 = vsel %vm1577, %v3964, 0.0
        %v4016 = vadd.f32 %v4014, %v4015
        %v4017 = vrot.slane %v4016, 4
        %v4018 = vadd.f32 %v4016, %v4017
        %v4019 = vrot.slane %v4018, 2
        %v4020 = vadd.f32 %v4018, %v4019
        %v4021 = vrot.slane %v4020, 1
        %v4022 = vadd.f32 %v4020, %v4021
        %v4023 = vsel %vm1577, %v3965, 0.0
        %v4024 = vsel %vm1577, %v3966, 0.0
        %v4025 = vadd.f32 %v4023, %v4024
        %v4026 = vrot.slane %v4025, 4
        %v4027 = vadd.f32 %v4025, %v4026
        %v4028 = vrot.slane %v4027, 2
        %v4029 = vadd.f32 %v4027, %v4028
        %v4030 = vrot.slane %v4029, 1
        %v4031 = vadd.f32 %v4029, %v4030
        %v4032 = vsel %vm1577, %v3967, 0.0
        %v4033 = vsel %vm1577, %v3968, 0.0
        %v4034 = vadd.f32 %v4032, %v4033
        %v4035 = vrot.slane %v4034, 4
        %v4036 = vadd.f32 %v4034, %v4035
        %v4037 = vrot.slane %v4036, 2
        %v4038 = vadd.f32 %v4036, %v4037
        %v4039 = vrot.slane %v4038, 1
        %v4040 = vadd.f32 %v4038, %v4039
        %v4041 = vrcp.pop 16.0
        %v4042 = vmul.f32 %v3977, %v4041
        %v4043 = vmul.f32 %v3986, %v4041
        %v4044 = vmul.f32 %v3995, %v4041
        %v4045 = vmul.f32 %v4004, %v4041
        %v4046 = vmul.f32 %v4013, %v4041
        %v4047 = vmul.f32 %v4022, %v4041
        %v4048 = vmul.f32 %v4031, %v4041
        %v4049 = vmul.f32 %v4040, %v4041
        %v4050 = vld [vmem:[#allocation8] sm:$0xff]
        %v4051 = vld [vmem:[#allocation8 + $0x8] sm:$0xff]
        %v4052 = vld [vmem:[#allocation8 + $0x10] sm:$0xff]
        %v4053 = vld [vmem:[#allocation8 + $0x18] sm:$0xff]
        %v4054 = vld [vmem:[%s6] sm:$0x1]
        %v4056 = vlaneseq
        %v4057 = vshrl.u32 %v4056, 7
        %v4058 = vsub.s32 0, %v4057
        %v4059 = vrot.slane %v4054, %v4058
        %vm4069 = vcmask 1041409
        %v4070 = vsel %vm4069, %v4043, %v4042
        %vm4071 = vcmask 1042434
        %v4072 = vsel %vm4071, %v4044, %v4070
        %vm4073 = vcmask 1043459
        %v4074 = vsel %vm4073, %v4045, %v4072
        %vm4075 = vcmask 1044484
        %v4076 = vsel %vm4075, %v4046, %v4074
        %vm4077 = vcmask 1045509
        %v4078 = vsel %vm4077, %v4047, %v4076
        %vm4079 = vcmask 1046534
        %v4080 = vsel %vm4079, %v4048, %v4078
        %vm4081 = vcmask 1047559
        %v4082 = vsel %vm4081, %v4049, %v4080
        %v4083 = vsel %vm1577, %v4082, 0
        %4085 = vmatprep.subr.mxu0 0.0
        %4086 = vmatpush1.msra.mxu0 0.0
        %4087 = vmatprep.subr.mxu0 0.0
        %4088 = vmatpush1.msra.mxu0 0.0
        %4089 = vmatprep.subr.mxu0 0.0
        %4090 = vmatpush1.msra.mxu0 0.0
        %4091 = vmatprep.subr.mxu0 0.0
        %4092 = vmatpush1.msra.mxu0 0.0
        %4093 = vmatprep.subr.mxu0 0.0
        %4094 = vmatpush1.msra.mxu0 0.0
        %4095 = vmatprep.subr.mxu0 0.0
        %4096 = vmatpush1.msra.mxu0 0.0
        %4097 = vmatprep.subr.mxu0 0.0
        %4098 = vmatpush1.msra.mxu0 0.0
        %4099 = vmatprep.subr.mxu0 0.0
        %4100 = vmatpush1.msra.mxu0 0.0
        %4101 = vmatprep.subr.mxu0 0.0
        %4102 = vmatpush1.msra.mxu0 0.0
        %4103 = vmatprep.subr.mxu0 0.0
        %4104 = vmatpush1.msra.mxu0 0.0
        %4105 = vmatprep.subr.mxu0 0.0
        %4106 = vmatpush1.msra.mxu0 0.0
        %4107 = vmatprep.subr.mxu0 0.0
        %4108 = vmatpush1.msra.mxu0 0.0
        %4109 = vmatprep.subr.mxu0 0.0
        %4110 = vmatpush1.msra.mxu0 %v4053
        %4111 = vmatprep.subr.mxu0 0.0
        %4112 = vmatpush1.msra.mxu0 %v4052
        %4113 = vmatprep.subr.mxu0 0.0
        %4114 = vmatpush1.msra.mxu0 %v4051
        %4115 = vmatprep.subr.mxu0 0.0
        %4116 = vmatpush1.msra.mxu0 %v4050
        %4117 = vmatprep.subr.mxu0 0.0
        %4118 = vmatpush2.msra.mxu0 0.0
        %4119 = vmatprep.subr.mxu0 0.0
        %4120 = vmatpush2.msra.mxu0 0.0
        %4121 = vmatprep.subr.mxu0 0.0
        %4122 = vmatpush2.msra.mxu0 0.0
        %4123 = vmatprep.subr.mxu0 0.0
        %4124 = vmatpush2.msra.mxu0 0.0
        %4125 = vmatprep.subr.mxu0 0.0
        %4126 = vmatpush2.msra.mxu0 0.0
        %4127 = vmatprep.subr.mxu0 0.0
        %4128 = vmatpush2.msra.mxu0 0.0
        %4129 = vmatprep.subr.mxu0 0.0
        %4130 = vmatpush2.msra.mxu0 0.0
        %4131 = vmatprep.subr.mxu0 0.0
        %4132 = vmatpush2.msra.mxu0 0.0
        %4133 = vmatprep.subr.mxu0 0.0
        %4134 = vmatpush2.msra.mxu0 0.0
        %4135 = vmatprep.subr.mxu0 0.0
        %4136 = vmatpush2.msra.mxu0 0.0
        %4137 = vmatprep.subr.mxu0 0.0
        %4138 = vmatpush2.msra.mxu0 0.0
        %4139 = vmatprep.subr.mxu0 0.0
        %4140 = vmatpush2.msra.mxu0 0.0
        %4141 = vmatprep.subr.mxu0 0.0
        %4142 = vmatpush2.msra.mxu0 0.0
        %4143 = vmatprep.subr.mxu0 0.0
        %4144 = vmatpush2.msra.mxu0 0.0
        %4145 = vmatprep.subr.mxu0 0.0
        %4146 = vmatpush2.msra.mxu0 0.0
        %4147 = vmatprep.subr.mxu0 0.0
        %4148 = vmatpush2.msra.mxu0 0.0
        %4149 = vmatprep.mubr.f32.mxu0 0.0
        %4150 = vmatmul.mubr.f32.gmra.mxu0 %v4083
        %v4151 = vpop.f32.mrf.mxu0
        %v4152 = vadd.f32 %v4059, %v4151
        %v4153 = vpop.f32.mrf.mxu0
        %4154 = vdwg.mxu0
        %v4155 = vsel %vm1577, %v4152, 0.0
        %4156 = vadd.xlane.f32.xlu0 %v4155
        %v4157 = vpop.xlane.xlu0 %4156
        %v4158 = vrcp.pop 32.0
        %v4159 = vmul.f32 %v4157, %v4158
        %v4160 = vsub.f32 %v4152, %v4159
        %v4161 = vmul.f32 %v4160, %v4160
        %v4162 = vsel %vm1577, %v4161, 0.0
        %4163 = vadd.xlane.f32.xlu0 %v4162
        %v4164 = vpop.xlane.xlu0 %4163
        %v4165 = vmul.f32 %v4164, %v4158
        %v4166 = vadd.f32 %v4165, 1e-05
        %v4167 = vrsqrt.pop %v4166
        %v4168 = vmul.f32 %v4160, %v4167
        %v4169 = vld [vmem:[%s7] sm:$0x1]
        %v4171 = vlaneseq
        %v4172 = vshrl.u32 %v4171, 7
        %v4173 = vsub.s32 0, %v4172
        %v4174 = vrot.slane %v4169, %v4173
        %v4176 = vmul.f32 %v4168, %v4174
        %v4177 = vld [vmem:[%s8] sm:$0x1]
        %v4179 = vlaneseq
        %v4180 = vshrl.u32 %v4179, 7
        %v4181 = vsub.s32 0, %v4180
        %v4182 = vrot.slane %v4177, %v4181
        %v4184 = vadd.f32 %v4176, %v4182
        %4185 = vst.msk [vmem:[%s391] sm:$0xff] %vm1577, %v4184
        %s4186 = sand.u32 %s230, 1
        %s4187 = scalar_lea.sflag [#allocation4], %s4186
        %s4188 = sand.u32 %s230, 1
        %s4189 = smul.addr %s4188, 8
        %s4190 = scalar_lea.vmem [#allocation10], %s4189
        // Predicated region
        $region73: #{tpu_custom_call.1} parent=55 // pred_check
          %p4191 = pneg %p240
        $region74: #{tpu_custom_call.1} parent=55 // pred_check_branch
          %4193 = sbr.rel (%p4191) target = $region76
        $region75: #{tpu_custom_call.1} parent=55 // pred_region
          %s4195 = ssub.s32 128, 128
          %4196 = vsyncadd %s4187, %s4195
          %s4197 = smul.addr %s28, 128
          %s4198 = scalar_lea.hbm %s9, %s4197
          %s4200 = sshll.u32 %s4190, 4
          %s4201 = int_to_ptr.vmem [resolvable:$true] %s4200
          %4203 = dma.vmem_to_hbm [thread:$0]  %s4201, 128, %s4198, %s4187
        $region76: #{tpu_custom_call.1} parent=55 // pred_fallthru
          _
      $region56: #{tpu_custom_call.1} parent=5 // pred_fallthru
        _
      %p4204 = scmp.le.s32.totalorder 2, %s23
      // Predicated region
      $region77: #{tpu_custom_call.1} parent=5 // pred_check
        %p4205 = pneg %p4204
      $region78: #{tpu_custom_call.1} parent=5 // pred_check_branch
        %4207 = sbr.rel (%p4205) target = $region80
      $region79: #{tpu_custom_call.1} parent=5 // pred_region
        %s4208 = ssub.s32 %s23, 2
        // Predicated region
        $region81: #{tpu_custom_call.1} parent=79 // pred_check
          %p4209 = pneg %p246
        $region82: #{tpu_custom_call.1} parent=79 // pred_check_branch
          %4211 = sbr.rel (%p4209) target = $region84
        $region83: #{tpu_custom_call.1} parent=79 // pred_region
          %s4212 = sand.u32 %s231, 1
          %s4213 = scalar_lea.sflag [#allocation4], %s4212
          %s4214 = sand.u32 %s231, 1
          %s4215 = smul.addr %s4214, 8
          %s4216 = scalar_lea.vmem [#allocation10], %s4215
          %4217 = dma.done %s4213, 128
        $region84: #{tpu_custom_call.1} parent=79 // pred_fallthru
          _
      $region80: #{tpu_custom_call.1} parent=5 // pred_fallthru
        _
    $region6: #{tpu_custom_call.1} parent=1 // loop_footer
      %s27 = sadd.s32 1, %s23
    $region7: #{tpu_custom_call.1} parent=1 // loop_footer_branch
      %22 = sbr.rel target = $region3
    $region8: #{tpu_custom_call.1} parent=1 // loop_exit
      _
    %4218 = vsyncpa [#allocation3], 1
    %s4219 = scalar_lea.sflag [#allocation3], 1
    %4220 = vsyncpa %s4219, 1
    %4221 = vsyncpa [#allocation6], 1
    %4222 = vsyncpa [#allocation9], 1
    %4223 = vsyncpa [#allocation4], 1
    %s4224 = scalar_lea.sflag [#allocation4], 1
    %4225 = vsyncpa %s4224, 1

</llo_original>
